<compile_context>
chip_gen: v6e
topology: v6e:2x2x1
jax: 0.10.0
libtpu: 0.0.40
codegen_flags: <defaults>
</compile_context>

<pallas_src>
import functools

import jax
import jax.numpy as jnp
from jax import lax
from jax.experimental import pallas as pl
from jax.experimental.pallas import tpu as pltpu


# ----------------------------------------------------------------------------
# In-kernel building blocks
# ----------------------------------------------------------------------------
def _elu(x):
    # nn.ELU(alpha=1.0)
    return jnp.where(x > 0, x, jnp.exp(x) - 1.0)


def _sym_conv_instnorm(x, m_ref, w_ref, b_ref, g_ref, be_ref, shifts):
    """3x3 conv (taps pre-symmetrized) + bias + ReLU + InstanceNorm2d(eps=1e-6).

    x      : (Cin, HW) f32     activations, spatial flattened on lanes
    m_ref  : (9, 1, HW) f32    per-tap "inside the image" masks (zero padding)
    w_ref  : (9*Cin, Cout, 1)  one weight column per (tap, input channel)
    b_ref, g_ref, be_ref : (Cout, 1)
    shifts : tuple of 9 static lane-roll amounts (one per tap)
    """
    cin = x.shape[0]
    acc = None
    for t in range(9):
        # Shift via XLU lane roll + mask; no strided slices of a padded copy.
        rolled = x if shifts[t] == 0 else pltpu.roll(x, shift=shifts[t], axis=1)
        col = rolled * m_ref[t]                              # (Cin, HW)
        for ci in range(cin):
            # (Cout,1) * (1,HW) -> (Cout,HW): pure VPU FMA, lane-dense.
            term = w_ref[t * cin + ci] * col[ci:ci + 1, :]
            acc = term if acc is None else acc + term        # first tap seeds acc

    y = jnp.maximum(acc + b_ref[...], 0.0)                   # conv bias + ReLU

    # InstanceNorm2d: per (sample, channel) stats over the lane-dense spatial axis.
    mean = jnp.mean(y, axis=1, keepdims=True)
    var = jnp.mean(jnp.square(y - mean), axis=1, keepdims=True)
    y = (y - mean) * lax.rsqrt(var + 1e-6)
    return y * g_ref[...] + be_ref[...]


def _block_kernel(x_ref, m_ref, w1_ref, b1_ref, g1_ref, be1_ref,
                  w2_ref, b2_ref, g2_ref, be2_ref, o_ref, *, shifts):
    x = x_ref[0].astype(jnp.float32)                         # (Cin, HW)
    # Stage 1: Sym_CNN2d -> InstanceNorm2d -> ELU   (stays in VMEM / vregs)
    y = _elu(_sym_conv_instnorm(x, m_ref, w1_ref, b1_ref, g1_ref, be1_ref, shifts))
    # Stage 2: Sym_CNN2d -> InstanceNorm2d, residual add with block input, ELU
    y = _sym_conv_instnorm(y, m_ref, w2_ref, b2_ref, g2_ref, be2_ref, shifts)
    o_ref[0] = _elu(x + y).astype(o_ref.dtype)


# ----------------------------------------------------------------------------
# Wrapper (layout plumbing + weight symmetrization; no activation passes in XLA)
# ----------------------------------------------------------------------------
def _sym_weight_cols(w):
    """(Cout, Cin, 3, 3) OIHW -> symmetrized (9*Cin, Cout, 1).

    Row (ky*3+kx)*Cin + ci holds the (Cout,) weight column for that tap/channel,
    matching the tap order used inside the kernel.
    """
    w_sym = 0.5 * (w + jnp.transpose(w, (0, 1, 3, 2)))
    cout, cin = w.shape[0], w.shape[1]
    return jnp.transpose(w_sym, (2, 3, 1, 0)).reshape(9 * cin, cout)[:, :, None]


def _padded_vmem_bytes(shape, itemsize=4):
    """VMEM footprint of a block, rounded to (8, 128) tiles."""
    lead = 1
    for d in shape[:-2]:
        lead *= int(d)
    sub = -(-int(shape[-2]) // 8) * 8
    lane = -(-int(shape[-1]) // 128) * 128
    return lead * sub * lane * itemsize


@jax.jit
def sym_cnn2d_block_forward(x_nchw, params):
    w1, b1, g1, be1, w2, b2, g2, be2 = params
    N, Cin, H, W = x_nchw.shape
    Ch = w1.shape[0]
    HW = H * W
    if Cin != Ch:
        raise ValueError("residual x + out requires hidden_channels == in_channels")

    # NCHW with spatial flattened onto the lane axis: a free reshape, no XLA
    # transpose or pad passes over the activation tensor.
    x = x_nchw.reshape(N, Cin, HW).astype(jnp.float32)

    # Tap geometry: static lane-roll amounts + boundary masks (zero padding).
    shifts, mask_rows = [], []
    hh = jnp.arange(H)
    ww = jnp.arange(W)
    for t in range(9):
        dy, dx = t // 3 - 1, t % 3 - 1
        shifts.append((-(dy * W + dx)) % HW)                 # out[i] = x[i + dy*W + dx]
        mh = ((hh + dy >= 0) & (hh + dy < H)).astype(jnp.float32)
        mw = ((ww + dx >= 0) & (ww + dx < W)).astype(jnp.float32)
        mask_rows.append((mh[:, None] * mw[None, :]).reshape(1, HW))
    tap_masks = jnp.stack(mask_rows, axis=0)                 # (9, 1, HW)

    w1c, w2c = _sym_weight_cols(w1), _sym_weight_cols(w2)    # (9Cin,Ch,1) / (9Ch,Ch,1)
    b1c, g1c, be1c = b1.reshape(Ch, 1), g1.reshape(Ch, 1), be1.reshape(Ch, 1)
    b2c, g2c, be2c = b2.reshape(Ch, 1), g2.reshape(Ch, 1), be2.reshape(Ch, 1)

    # Explicit VMEM budget from the per-block footprint (double-buffered
    # per-sample in/out blocks + resident weights/masks), with headroom for
    # in-kernel temporaries, clamped to 32 MiB (safe on v7x's 64 MiB VMEM).
    footprint = (2 * _padded_vmem_bytes((1, Cin, HW))
                 + 2 * _padded_vmem_bytes((1, Ch, HW))
                 + sum(_padded_vmem_bytes(a.shape)
                       for a in (tap_masks, w1c, b1c, g1c, be1c,
                                 w2c, b2c, g2c, be2c)))
    vmem_limit = int(min(max(8 * footprint, 8 << 20), 32 << 20))

    def _full(shape):
        r = len(shape)
        return pl.BlockSpec(shape, lambda n, r=r: (0,) * r)

    out = pl.pallas_call(
        functools.partial(_block_kernel, shifts=tuple(shifts)),
        out_shape=jax.ShapeDtypeStruct((N, Ch, HW), jnp.float32),
        grid_spec=pltpu.PrefetchScalarGridSpec(
            num_scalar_prefetch=0,
            grid=(N,),                                       # one sample per grid step
            in_specs=[pl.BlockSpec((1, Cin, HW), lambda n: (n, 0, 0)),
                      _full(tap_masks.shape),
                      _full(w1c.shape), _full(b1c.shape),
                      _full(g1c.shape), _full(be1c.shape),
                      _full(w2c.shape), _full(b2c.shape),
                      _full(g2c.shape), _full(be2c.shape)],
            out_specs=pl.BlockSpec((1, Ch, HW), lambda n: (n, 0, 0))),
        compiler_params=pltpu.CompilerParams(
            dimension_semantics=("parallel",),               # megacore / v7x 2 TCs
            vmem_limit_bytes=vmem_limit),
    )(x, tap_masks, w1c, b1c, g1c, be1c, w2c, b2c, g2c, be2c)

    return out.reshape(N, Ch, H, W)


# ----------------------------------------------------------------------------
# Deterministic parameter init (mirrors the PyTorch module __init__)
# ----------------------------------------------------------------------------
def init_params(key, in_channels, hidden_channels, kernel_size=3):
    k1, k2 = jax.random.split(key)

    def kaiming_fan_out(k, cout, cin):
        fan_out = cout * kernel_size * kernel_size
        std = (2.0 / fan_out) ** 0.5                         # gain for relu = sqrt(2)
        return std * jax.random.normal(k, (cout, cin, kernel_size, kernel_size),
                                       jnp.float32)

    w1 = kaiming_fan_out(k1, hidden_channels, in_channels)
    w2 = kaiming_fan_out(k2, hidden_channels, hidden_channels)
    b1 = jnp.full((hidden_channels,), 0.01, jnp.float32)     # ini_bias = 0.01
    b2 = jnp.full((hidden_channels,), 0.01, jnp.float32)
    g1 = jnp.ones((hidden_channels,), jnp.float32)           # InstanceNorm affine
    be1 = jnp.zeros((hidden_channels,), jnp.float32)
    g2 = jnp.ones((hidden_channels,), jnp.float32)
    be2 = jnp.zeros((hidden_channels,), jnp.float32)
    return (w1, b1, g1, be1, w2, b2, g2, be2)


# ----------------------------------------------------------------------------
# Pure-JAX reference (mirrors the PyTorch forward) for a sanity check
# ----------------------------------------------------------------------------
def reference_forward(x, params):
    w1, b1, g1, be1, w2, b2, g2, be2 = params

    def sym_conv_relu(x, w, b):
        w_sym = 0.5 * (w + jnp.transpose(w, (0, 1, 3, 2)))
        y = jax.lax.conv_general_dilated(
            x, w_sym, window_strides=(1, 1), padding=((1, 1), (1, 1)),
            dimension_numbers=('NCHW', 'OIHW', 'NCHW'))
        return jnp.maximum(y + b.reshape(1, -1, 1, 1), 0.0)

    def inorm(x, g, b):
        mean = jnp.mean(x, axis=(2, 3), keepdims=True)
        var = jnp.mean((x - mean) ** 2, axis=(2, 3), keepdims=True)
        return ((x - mean) * jax.lax.rsqrt(var + 1e-6)
                * g.reshape(1, -1, 1, 1) + b.reshape(1, -1, 1, 1))

    def elu(v):
        return jnp.where(v > 0, v, jnp.exp(v) - 1.0)

    y = elu(inorm(sym_conv_relu(x, w1, b1), g1, be1))
    y = inorm(sym_conv_relu(y, w2, b2), g2, be2)
    return elu(x + y)


if __name__ == "__main__":
    key = jax.random.PRNGKey(0)
    kx, kp = jax.random.split(key)

    # residual `x + out` requires hidden_channels == in_channels
    N, C, H, W = 2, 4, 16, 16
    hidden = 4

    x = jax.random.normal(kx, (N, C, H, W), jnp.float32)
    params = init_params(kp, C, hidden)

    out = jax.block_until_ready(sym_cnn2d_block_forward(x, params))

    ref = reference_forward(x, params)
    assert out.shape == (N, hidden, H, W)
    assert jnp.allclose(out, ref, atol=1e-4, rtol=1e-4), \
        float(jnp.max(jnp.abs(out - ref)))

    print("KERNEL_OK")
</pallas_src>

<mosaic_0001>
module attributes {stable_mosaic.version = 11 : i64} {
  func.func @_block_kernel(%arg0: i32, %arg1: memref<1x4x256xf32, #tpu.memory_space<vmem>>, %arg2: memref<9x1x256xf32, #tpu.memory_space<vmem>>, %arg3: memref<36x4x1xf32, #tpu.memory_space<vmem>>, %arg4: memref<4x1xf32, #tpu.memory_space<vmem>>, %arg5: memref<4x1xf32, #tpu.memory_space<vmem>>, %arg6: memref<4x1xf32, #tpu.memory_space<vmem>>, %arg7: memref<36x4x1xf32, #tpu.memory_space<vmem>>, %arg8: memref<4x1xf32, #tpu.memory_space<vmem>>, %arg9: memref<4x1xf32, #tpu.memory_space<vmem>>, %arg10: memref<4x1xf32, #tpu.memory_space<vmem>>, %arg11: memref<1x4x256xf32, #tpu.memory_space<vmem>>) attributes {dimension_semantics = [#tpu.dimension_semantics<parallel>], iteration_bounds = array<i64: 2>, scalar_prefetch = 0 : i64, scratch_operands = 0 : i64, tpu.core_type = #tpu.core_type<tc>, window_params = [{transform_indices = @transform_0, window_bounds = array<i64: 1, 4, 256>}, {pipeline_mode = #tpu.pipeline_mode<synchronous>, transform_indices = @transform_1, window_bounds = array<i64: 9, 1, 256>}, {pipeline_mode = #tpu.pipeline_mode<synchronous>, transform_indices = @transform_2, window_bounds = array<i64: 36, 4, 1>}, {pipeline_mode = #tpu.pipeline_mode<synchronous>, transform_indices = @transform_3, window_bounds = array<i64: 4, 1>}, {pipeline_mode = #tpu.pipeline_mode<synchronous>, transform_indices = @transform_4, window_bounds = array<i64: 4, 1>}, {pipeline_mode = #tpu.pipeline_mode<synchronous>, transform_indices = @transform_5, window_bounds = array<i64: 4, 1>}, {pipeline_mode = #tpu.pipeline_mode<synchronous>, transform_indices = @transform_6, window_bounds = array<i64: 36, 4, 1>}, {pipeline_mode = #tpu.pipeline_mode<synchronous>, transform_indices = @transform_7, window_bounds = array<i64: 4, 1>}, {pipeline_mode = #tpu.pipeline_mode<synchronous>, transform_indices = @transform_8, window_bounds = array<i64: 4, 1>}, {pipeline_mode = #tpu.pipeline_mode<synchronous>, transform_indices = @transform_9, window_bounds = array<i64: 4, 1>}, {transform_indices = @transform_10, window_bounds = array<i64: 1, 4, 256>}]} {
    %c0 = arith.constant 0 : index
    %c0_0 = arith.constant 0 : index
    %c0_1 = arith.constant 0 : index
    %0 = vector.load %arg1[%c0, %c0_0, %c0_1] : memref<1x4x256xf32, #tpu.memory_space<vmem>>, vector<1x4x256xf32>
    %1 = vector.shape_cast %0 : vector<1x4x256xf32> to vector<4x256xf32>
    %c17_i32 = arith.constant 17 : i32
    %2 = tpu.dynamic_rotate %1 by %c17_i32 dim 1 : vector<4x256xf32>, i32 -> vector<4x256xf32>
    %c0_2 = arith.constant 0 : index
    %c0_3 = arith.constant 0 : index
    %c0_4 = arith.constant 0 : index
    %3 = vector.load %arg2[%c0_2, %c0_3, %c0_4] : memref<9x1x256xf32, #tpu.memory_space<vmem>>, vector<1x1x256xf32>
    %4 = vector.shape_cast %3 : vector<1x1x256xf32> to vector<1x256xf32>
    %5 = vector.broadcast %4 : vector<1x256xf32> to vector<4x256xf32>
    %6 = arith.mulf %2, %5 : vector<4x256xf32>
    %c0_5 = arith.constant 0 : index
    %c0_6 = arith.constant 0 : index
    %c0_7 = arith.constant 0 : index
    %7 = vector.load %arg3[%c0_5, %c0_6, %c0_7] : memref<36x4x1xf32, #tpu.memory_space<vmem>>, vector<1x4x1xf32>
    %8 = vector.shape_cast %7 : vector<1x4x1xf32> to vector<4x1xf32>
    %9 = vector.extract_strided_slice %6 {offsets = [0, 0], sizes = [1, 256], strides = [1, 1]} : vector<4x256xf32> to vector<1x256xf32>
    %10 = vector.broadcast %8 : vector<4x1xf32> to vector<4x256xf32>
    %11 = vector.broadcast %9 : vector<1x256xf32> to vector<4x256xf32>
    %12 = arith.mulf %10, %11 : vector<4x256xf32>
    %c1 = arith.constant 1 : index
    %c0_8 = arith.constant 0 : index
    %c0_9 = arith.constant 0 : index
    %13 = vector.load %arg3[%c1, %c0_8, %c0_9] : memref<36x4x1xf32, #tpu.memory_space<vmem>>, vector<1x4x1xf32>
    %14 = vector.shape_cast %13 : vector<1x4x1xf32> to vector<4x1xf32>
    %15 = vector.extract_strided_slice %6 {offsets = [1, 0], sizes = [1, 256], strides = [1, 1]} : vector<4x256xf32> to vector<1x256xf32>
    %16 = vector.broadcast %14 : vector<4x1xf32> to vector<4x256xf32>
    %17 = vector.broadcast %15 : vector<1x256xf32> to vector<4x256xf32>
    %18 = arith.mulf %16, %17 : vector<4x256xf32>
    %19 = arith.addf %12, %18 : vector<4x256xf32>
    %c2 = arith.constant 2 : index
    %c0_10 = arith.constant 0 : index
    %c0_11 = arith.constant 0 : index
    %20 = vector.load %arg3[%c2, %c0_10, %c0_11] : memref<36x4x1xf32, #tpu.memory_space<vmem>>, vector<1x4x1xf32>
    %21 = vector.shape_cast %20 : vector<1x4x1xf32> to vector<4x1xf32>
    %22 = vector.extract_strided_slice %6 {offsets = [2, 0], sizes = [1, 256], strides = [1, 1]} : vector<4x256xf32> to vector<1x256xf32>
    %23 = vector.broadcast %21 : vector<4x1xf32> to vector<4x256xf32>
    %24 = vector.broadcast %22 : vector<1x256xf32> to vector<4x256xf32>
    %25 = arith.mulf %23, %24 : vector<4x256xf32>
    %26 = arith.addf %19, %25 : vector<4x256xf32>
    %c3 = arith.constant 3 : index
    %c0_12 = arith.constant 0 : index
    %c0_13 = arith.constant 0 : index
    %27 = vector.load %arg3[%c3, %c0_12, %c0_13] : memref<36x4x1xf32, #tpu.memory_space<vmem>>, vector<1x4x1xf32>
    %28 = vector.shape_cast %27 : vector<1x4x1xf32> to vector<4x1xf32>
    %29 = vector.extract_strided_slice %6 {offsets = [3, 0], sizes = [1, 256], strides = [1, 1]} : vector<4x256xf32> to vector<1x256xf32>
    %30 = vector.broadcast %28 : vector<4x1xf32> to vector<4x256xf32>
    %31 = vector.broadcast %29 : vector<1x256xf32> to vector<4x256xf32>
    %32 = arith.mulf %30, %31 : vector<4x256xf32>
    %33 = arith.addf %26, %32 : vector<4x256xf32>
    %c16_i32 = arith.constant 16 : i32
    %34 = tpu.dynamic_rotate %1 by %c16_i32 dim 1 : vector<4x256xf32>, i32 -> vector<4x256xf32>
    %c1_14 = arith.constant 1 : index
    %c0_15 = arith.constant 0 : index
    %c0_16 = arith.constant 0 : index
    %35 = vector.load %arg2[%c1_14, %c0_15, %c0_16] : memref<9x1x256xf32, #tpu.memory_space<vmem>>, vector<1x1x256xf32>
    %36 = vector.shape_cast %35 : vector<1x1x256xf32> to vector<1x256xf32>
    %37 = vector.broadcast %36 : vector<1x256xf32> to vector<4x256xf32>
    %38 = arith.mulf %34, %37 : vector<4x256xf32>
    %c4 = arith.constant 4 : index
    %c0_17 = arith.constant 0 : index
    %c0_18 = arith.constant 0 : index
    %39 = vector.load %arg3[%c4, %c0_17, %c0_18] : memref<36x4x1xf32, #tpu.memory_space<vmem>>, vector<1x4x1xf32>
    %40 = vector.shape_cast %39 : vector<1x4x1xf32> to vector<4x1xf32>
    %41 = vector.extract_strided_slice %38 {offsets = [0, 0], sizes = [1, 256], strides = [1, 1]} : vector<4x256xf32> to vector<1x256xf32>
    %42 = vector.broadcast %40 : vector<4x1xf32> to vector<4x256xf32>
    %43 = vector.broadcast %41 : vector<1x256xf32> to vector<4x256xf32>
    %44 = arith.mulf %42, %43 : vector<4x256xf32>
    %45 = arith.addf %33, %44 : vector<4x256xf32>
    %c5 = arith.constant 5 : index
    %c0_19 = arith.constant 0 : index
    %c0_20 = arith.constant 0 : index
    %46 = vector.load %arg3[%c5, %c0_19, %c0_20] : memref<36x4x1xf32, #tpu.memory_space<vmem>>, vector<1x4x1xf32>
    %47 = vector.shape_cast %46 : vector<1x4x1xf32> to vector<4x1xf32>
    %48 = vector.extract_strided_slice %38 {offsets = [1, 0], sizes = [1, 256], strides = [1, 1]} : vector<4x256xf32> to vector<1x256xf32>
    %49 = vector.broadcast %47 : vector<4x1xf32> to vector<4x256xf32>
    %50 = vector.broadcast %48 : vector<1x256xf32> to vector<4x256xf32>
    %51 = arith.mulf %49, %50 : vector<4x256xf32>
    %52 = arith.addf %45, %51 : vector<4x256xf32>
    %c6 = arith.constant 6 : index
    %c0_21 = arith.constant 0 : index
    %c0_22 = arith.constant 0 : index
    %53 = vector.load %arg3[%c6, %c0_21, %c0_22] : memref<36x4x1xf32, #tpu.memory_space<vmem>>, vector<1x4x1xf32>
    %54 = vector.shape_cast %53 : vector<1x4x1xf32> to vector<4x1xf32>
    %55 = vector.extract_strided_slice %38 {offsets = [2, 0], sizes = [1, 256], strides = [1, 1]} : vector<4x256xf32> to vector<1x256xf32>
    %56 = vector.broadcast %54 : vector<4x1xf32> to vector<4x256xf32>
    %57 = vector.broadcast %55 : vector<1x256xf32> to vector<4x256xf32>
    %58 = arith.mulf %56, %57 : vector<4x256xf32>
    %59 = arith.addf %52, %58 : vector<4x256xf32>
    %c7 = arith.constant 7 : index
    %c0_23 = arith.constant 0 : index
    %c0_24 = arith.constant 0 : index
    %60 = vector.load %arg3[%c7, %c0_23, %c0_24] : memref<36x4x1xf32, #tpu.memory_space<vmem>>, vector<1x4x1xf32>
    %61 = vector.shape_cast %60 : vector<1x4x1xf32> to vector<4x1xf32>
    %62 = vector.extract_strided_slice %38 {offsets = [3, 0], sizes = [1, 256], strides = [1, 1]} : vector<4x256xf32> to vector<1x256xf32>
    %63 = vector.broadcast %61 : vector<4x1xf32> to vector<4x256xf32>
    %64 = vector.broadcast %62 : vector<1x256xf32> to vector<4x256xf32>
    %65 = arith.mulf %63, %64 : vector<4x256xf32>
    %66 = arith.addf %59, %65 : vector<4x256xf32>
    %c15_i32 = arith.constant 15 : i32
    %67 = tpu.dynamic_rotate %1 by %c15_i32 dim 1 : vector<4x256xf32>, i32 -> vector<4x256xf32>
    %c2_25 = arith.constant 2 : index
    %c0_26 = arith.constant 0 : index
    %c0_27 = arith.constant 0 : index
    %68 = vector.load %arg2[%c2_25, %c0_26, %c0_27] : memref<9x1x256xf32, #tpu.memory_space<vmem>>, vector<1x1x256xf32>
    %69 = vector.shape_cast %68 : vector<1x1x256xf32> to vector<1x256xf32>
    %70 = vector.broadcast %69 : vector<1x256xf32> to vector<4x256xf32>
    %71 = arith.mulf %67, %70 : vector<4x256xf32>
    %c8 = arith.constant 8 : index
    %c0_28 = arith.constant 0 : index
    %c0_29 = arith.constant 0 : index
    %72 = vector.load %arg3[%c8, %c0_28, %c0_29] : memref<36x4x1xf32, #tpu.memory_space<vmem>>, vector<1x4x1xf32>
    %73 = vector.shape_cast %72 : vector<1x4x1xf32> to vector<4x1xf32>
    %74 = vector.extract_strided_slice %71 {offsets = [0, 0], sizes = [1, 256], strides = [1, 1]} : vector<4x256xf32> to vector<1x256xf32>
    %75 = vector.broadcast %73 : vector<4x1xf32> to vector<4x256xf32>
    %76 = vector.broadcast %74 : vector<1x256xf32> to vector<4x256xf32>
    %77 = arith.mulf %75, %76 : vector<4x256xf32>
    %78 = arith.addf %66, %77 : vector<4x256xf32>
    %c9 = arith.constant 9 : index
    %c0_30 = arith.constant 0 : index
    %c0_31 = arith.constant 0 : index
    %79 = vector.load %arg3[%c9, %c0_30, %c0_31] : memref<36x4x1xf32, #tpu.memory_space<vmem>>, vector<1x4x1xf32>
    %80 = vector.shape_cast %79 : vector<1x4x1xf32> to vector<4x1xf32>
    %81 = vector.extract_strided_slice %71 {offsets = [1, 0], sizes = [1, 256], strides = [1, 1]} : vector<4x256xf32> to vector<1x256xf32>
    %82 = vector.broadcast %80 : vector<4x1xf32> to vector<4x256xf32>
    %83 = vector.broadcast %81 : vector<1x256xf32> to vector<4x256xf32>
    %84 = arith.mulf %82, %83 : vector<4x256xf32>
    %85 = arith.addf %78, %84 : vector<4x256xf32>
    %c10 = arith.constant 10 : index
    %c0_32 = arith.constant 0 : index
    %c0_33 = arith.constant 0 : index
    %86 = vector.load %arg3[%c10, %c0_32, %c0_33] : memref<36x4x1xf32, #tpu.memory_space<vmem>>, vector<1x4x1xf32>
    %87 = vector.shape_cast %86 : vector<1x4x1xf32> to vector<4x1xf32>
    %88 = vector.extract_strided_slice %71 {offsets = [2, 0], sizes = [1, 256], strides = [1, 1]} : vector<4x256xf32> to vector<1x256xf32>
    %89 = vector.broadcast %87 : vector<4x1xf32> to vector<4x256xf32>
    %90 = vector.broadcast %88 : vector<1x256xf32> to vector<4x256xf32>
    %91 = arith.mulf %89, %90 : vector<4x256xf32>
    %92 = arith.addf %85, %91 : vector<4x256xf32>
    %c11 = arith.constant 11 : index
    %c0_34 = arith.constant 0 : index
    %c0_35 = arith.constant 0 : index
    %93 = vector.load %arg3[%c11, %c0_34, %c0_35] : memref<36x4x1xf32, #tpu.memory_space<vmem>>, vector<1x4x1xf32>
    %94 = vector.shape_cast %93 : vector<1x4x1xf32> to vector<4x1xf32>
    %95 = vector.extract_strided_slice %71 {offsets = [3, 0], sizes = [1, 256], strides = [1, 1]} : vector<4x256xf32> to vector<1x256xf32>
    %96 = vector.broadcast %94 : vector<4x1xf32> to vector<4x256xf32>
    %97 = vector.broadcast %95 : vector<1x256xf32> to vector<4x256xf32>
    %98 = arith.mulf %96, %97 : vector<4x256xf32>
    %99 = arith.addf %92, %98 : vector<4x256xf32>
    %c1_i32 = arith.constant 1 : i32
    %100 = tpu.dynamic_rotate %1 by %c1_i32 dim 1 : vector<4x256xf32>, i32 -> vector<4x256xf32>
    %c3_36 = arith.constant 3 : index
    %c0_37 = arith.constant 0 : index
    %c0_38 = arith.constant 0 : index
    %101 = vector.load %arg2[%c3_36, %c0_37, %c0_38] : memref<9x1x256xf32, #tpu.memory_space<vmem>>, vector<1x1x256xf32>
    %102 = vector.shape_cast %101 : vector<1x1x256xf32> to vector<1x256xf32>
    %103 = vector.broadcast %102 : vector<1x256xf32> to vector<4x256xf32>
    %104 = arith.mulf %100, %103 : vector<4x256xf32>
    %c12 = arith.constant 12 : index
    %c0_39 = arith.constant 0 : index
    %c0_40 = arith.constant 0 : index
    %105 = vector.load %arg3[%c12, %c0_39, %c0_40] : memref<36x4x1xf32, #tpu.memory_space<vmem>>, vector<1x4x1xf32>
    %106 = vector.shape_cast %105 : vector<1x4x1xf32> to vector<4x1xf32>
    %107 = vector.extract_strided_slice %104 {offsets = [0, 0], sizes = [1, 256], strides = [1, 1]} : vector<4x256xf32> to vector<1x256xf32>
    %108 = vector.broadcast %106 : vector<4x1xf32> to vector<4x256xf32>
    %109 = vector.broadcast %107 : vector<1x256xf32> to vector<4x256xf32>
    %110 = arith.mulf %108, %109 : vector<4x256xf32>
    %111 = arith.addf %99, %110 : vector<4x256xf32>
    %c13 = arith.constant 13 : index
    %c0_41 = arith.constant 0 : index
    %c0_42 = arith.constant 0 : index
    %112 = vector.load %arg3[%c13, %c0_41, %c0_42] : memref<36x4x1xf32, #tpu.memory_space<vmem>>, vector<1x4x1xf32>
    %113 = vector.shape_cast %112 : vector<1x4x1xf32> to vector<4x1xf32>
    %114 = vector.extract_strided_slice %104 {offsets = [1, 0], sizes = [1, 256], strides = [1, 1]} : vector<4x256xf32> to vector<1x256xf32>
    %115 = vector.broadcast %113 : vector<4x1xf32> to vector<4x256xf32>
    %116 = vector.broadcast %114 : vector<1x256xf32> to vector<4x256xf32>
    %117 = arith.mulf %115, %116 : vector<4x256xf32>
    %118 = arith.addf %111, %117 : vector<4x256xf32>
    %c14 = arith.constant 14 : index
    %c0_43 = arith.constant 0 : index
    %c0_44 = arith.constant 0 : index
    %119 = vector.load %arg3[%c14, %c0_43, %c0_44] : memref<36x4x1xf32, #tpu.memory_space<vmem>>, vector<1x4x1xf32>
    %120 = vector.shape_cast %119 : vector<1x4x1xf32> to vector<4x1xf32>
    %121 = vector.extract_strided_slice %104 {offsets = [2, 0], sizes = [1, 256], strides = [1, 1]} : vector<4x256xf32> to vector<1x256xf32>
    %122 = vector.broadcast %120 : vector<4x1xf32> to vector<4x256xf32>
    %123 = vector.broadcast %121 : vector<1x256xf32> to vector<4x256xf32>
    %124 = arith.mulf %122, %123 : vector<4x256xf32>
    %125 = arith.addf %118, %124 : vector<4x256xf32>
    %c15 = arith.constant 15 : index
    %c0_45 = arith.constant 0 : index
    %c0_46 = arith.constant 0 : index
    %126 = vector.load %arg3[%c15, %c0_45, %c0_46] : memref<36x4x1xf32, #tpu.memory_space<vmem>>, vector<1x4x1xf32>
    %127 = vector.shape_cast %126 : vector<1x4x1xf32> to vector<4x1xf32>
    %128 = vector.extract_strided_slice %104 {offsets = [3, 0], sizes = [1, 256], strides = [1, 1]} : vector<4x256xf32> to vector<1x256xf32>
    %129 = vector.broadcast %127 : vector<4x1xf32> to vector<4x256xf32>
    %130 = vector.broadcast %128 : vector<1x256xf32> to vector<4x256xf32>
    %131 = arith.mulf %129, %130 : vector<4x256xf32>
    %132 = arith.addf %125, %131 : vector<4x256xf32>
    %c4_47 = arith.constant 4 : index
    %c0_48 = arith.constant 0 : index
    %c0_49 = arith.constant 0 : index
    %133 = vector.load %arg2[%c4_47, %c0_48, %c0_49] : memref<9x1x256xf32, #tpu.memory_space<vmem>>, vector<1x1x256xf32>
    %134 = vector.shape_cast %133 : vector<1x1x256xf32> to vector<1x256xf32>
    %135 = vector.broadcast %134 : vector<1x256xf32> to vector<4x256xf32>
    %136 = arith.mulf %1, %135 : vector<4x256xf32>
    %c16 = arith.constant 16 : index
    %c0_50 = arith.constant 0 : index
    %c0_51 = arith.constant 0 : index
    %137 = vector.load %arg3[%c16, %c0_50, %c0_51] : memref<36x4x1xf32, #tpu.memory_space<vmem>>, vector<1x4x1xf32>
    %138 = vector.shape_cast %137 : vector<1x4x1xf32> to vector<4x1xf32>
    %139 = vector.extract_strided_slice %136 {offsets = [0, 0], sizes = [1, 256], strides = [1, 1]} : vector<4x256xf32> to vector<1x256xf32>
    %140 = vector.broadcast %138 : vector<4x1xf32> to vector<4x256xf32>
    %141 = vector.broadcast %139 : vector<1x256xf32> to vector<4x256xf32>
    %142 = arith.mulf %140, %141 : vector<4x256xf32>
    %143 = arith.addf %132, %142 : vector<4x256xf32>
    %c17 = arith.constant 17 : index
    %c0_52 = arith.constant 0 : index
    %c0_53 = arith.constant 0 : index
    %144 = vector.load %arg3[%c17, %c0_52, %c0_53] : memref<36x4x1xf32, #tpu.memory_space<vmem>>, vector<1x4x1xf32>
    %145 = vector.shape_cast %144 : vector<1x4x1xf32> to vector<4x1xf32>
    %146 = vector.extract_strided_slice %136 {offsets = [1, 0], sizes = [1, 256], strides = [1, 1]} : vector<4x256xf32> to vector<1x256xf32>
    %147 = vector.broadcast %145 : vector<4x1xf32> to vector<4x256xf32>
    %148 = vector.broadcast %146 : vector<1x256xf32> to vector<4x256xf32>
    %149 = arith.mulf %147, %148 : vector<4x256xf32>
    %150 = arith.addf %143, %149 : vector<4x256xf32>
    %c18 = arith.constant 18 : index
    %c0_54 = arith.constant 0 : index
    %c0_55 = arith.constant 0 : index
    %151 = vector.load %arg3[%c18, %c0_54, %c0_55] : memref<36x4x1xf32, #tpu.memory_space<vmem>>, vector<1x4x1xf32>
    %152 = vector.shape_cast %151 : vector<1x4x1xf32> to vector<4x1xf32>
    %153 = vector.extract_strided_slice %136 {offsets = [2, 0], sizes = [1, 256], strides = [1, 1]} : vector<4x256xf32> to vector<1x256xf32>
    %154 = vector.broadcast %152 : vector<4x1xf32> to vector<4x256xf32>
    %155 = vector.broadcast %153 : vector<1x256xf32> to vector<4x256xf32>
    %156 = arith.mulf %154, %155 : vector<4x256xf32>
    %157 = arith.addf %150, %156 : vector<4x256xf32>
    %c19 = arith.constant 19 : index
    %c0_56 = arith.constant 0 : index
    %c0_57 = arith.constant 0 : index
    %158 = vector.load %arg3[%c19, %c0_56, %c0_57] : memref<36x4x1xf32, #tpu.memory_space<vmem>>, vector<1x4x1xf32>
    %159 = vector.shape_cast %158 : vector<1x4x1xf32> to vector<4x1xf32>
    %160 = vector.extract_strided_slice %136 {offsets = [3, 0], sizes = [1, 256], strides = [1, 1]} : vector<4x256xf32> to vector<1x256xf32>
    %161 = vector.broadcast %159 : vector<4x1xf32> to vector<4x256xf32>
    %162 = vector.broadcast %160 : vector<1x256xf32> to vector<4x256xf32>
    %163 = arith.mulf %161, %162 : vector<4x256xf32>
    %164 = arith.addf %157, %163 : vector<4x256xf32>
    %c255_i32 = arith.constant 255 : i32
    %165 = tpu.dynamic_rotate %1 by %c255_i32 dim 1 : vector<4x256xf32>, i32 -> vector<4x256xf32>
    %c5_58 = arith.constant 5 : index
    %c0_59 = arith.constant 0 : index
    %c0_60 = arith.constant 0 : index
    %166 = vector.load %arg2[%c5_58, %c0_59, %c0_60] : memref<9x1x256xf32, #tpu.memory_space<vmem>>, vector<1x1x256xf32>
    %167 = vector.shape_cast %166 : vector<1x1x256xf32> to vector<1x256xf32>
    %168 = vector.broadcast %167 : vector<1x256xf32> to vector<4x256xf32>
    %169 = arith.mulf %165, %168 : vector<4x256xf32>
    %c20 = arith.constant 20 : index
    %c0_61 = arith.constant 0 : index
    %c0_62 = arith.constant 0 : index
    %170 = vector.load %arg3[%c20, %c0_61, %c0_62] : memref<36x4x1xf32, #tpu.memory_space<vmem>>, vector<1x4x1xf32>
    %171 = vector.shape_cast %170 : vector<1x4x1xf32> to vector<4x1xf32>
    %172 = vector.extract_strided_slice %169 {offsets = [0, 0], sizes = [1, 256], strides = [1, 1]} : vector<4x256xf32> to vector<1x256xf32>
    %173 = vector.broadcast %171 : vector<4x1xf32> to vector<4x256xf32>
    %174 = vector.broadcast %172 : vector<1x256xf32> to vector<4x256xf32>
    %175 = arith.mulf %173, %174 : vector<4x256xf32>
    %176 = arith.addf %164, %175 : vector<4x256xf32>
    %c21 = arith.constant 21 : index
    %c0_63 = arith.constant 0 : index
    %c0_64 = arith.constant 0 : index
    %177 = vector.load %arg3[%c21, %c0_63, %c0_64] : memref<36x4x1xf32, #tpu.memory_space<vmem>>, vector<1x4x1xf32>
    %178 = vector.shape_cast %177 : vector<1x4x1xf32> to vector<4x1xf32>
    %179 = vector.extract_strided_slice %169 {offsets = [1, 0], sizes = [1, 256], strides = [1, 1]} : vector<4x256xf32> to vector<1x256xf32>
    %180 = vector.broadcast %178 : vector<4x1xf32> to vector<4x256xf32>
    %181 = vector.broadcast %179 : vector<1x256xf32> to vector<4x256xf32>
    %182 = arith.mulf %180, %181 : vector<4x256xf32>
    %183 = arith.addf %176, %182 : vector<4x256xf32>
    %c22 = arith.constant 22 : index
    %c0_65 = arith.constant 0 : index
    %c0_66 = arith.constant 0 : index
    %184 = vector.load %arg3[%c22, %c0_65, %c0_66] : memref<36x4x1xf32, #tpu.memory_space<vmem>>, vector<1x4x1xf32>
    %185 = vector.shape_cast %184 : vector<1x4x1xf32> to vector<4x1xf32>
    %186 = vector.extract_strided_slice %169 {offsets = [2, 0], sizes = [1, 256], strides = [1, 1]} : vector<4x256xf32> to vector<1x256xf32>
    %187 = vector.broadcast %185 : vector<4x1xf32> to vector<4x256xf32>
    %188 = vector.broadcast %186 : vector<1x256xf32> to vector<4x256xf32>
    %189 = arith.mulf %187, %188 : vector<4x256xf32>
    %190 = arith.addf %183, %189 : vector<4x256xf32>
    %c23 = arith.constant 23 : index
    %c0_67 = arith.constant 0 : index
    %c0_68 = arith.constant 0 : index
    %191 = vector.load %arg3[%c23, %c0_67, %c0_68] : memref<36x4x1xf32, #tpu.memory_space<vmem>>, vector<1x4x1xf32>
    %192 = vector.shape_cast %191 : vector<1x4x1xf32> to vector<4x1xf32>
    %193 = vector.extract_strided_slice %169 {offsets = [3, 0], sizes = [1, 256], strides = [1, 1]} : vector<4x256xf32> to vector<1x256xf32>
    %194 = vector.broadcast %192 : vector<4x1xf32> to vector<4x256xf32>
    %195 = vector.broadcast %193 : vector<1x256xf32> to vector<4x256xf32>
    %196 = arith.mulf %194, %195 : vector<4x256xf32>
    %197 = arith.addf %190, %196 : vector<4x256xf32>
    %c241_i32 = arith.constant 241 : i32
    %198 = tpu.dynamic_rotate %1 by %c241_i32 dim 1 : vector<4x256xf32>, i32 -> vector<4x256xf32>
    %c6_69 = arith.constant 6 : index
    %c0_70 = arith.constant 0 : index
    %c0_71 = arith.constant 0 : index
    %199 = vector.load %arg2[%c6_69, %c0_70, %c0_71] : memref<9x1x256xf32, #tpu.memory_space<vmem>>, vector<1x1x256xf32>
    %200 = vector.shape_cast %199 : vector<1x1x256xf32> to vector<1x256xf32>
    %201 = vector.broadcast %200 : vector<1x256xf32> to vector<4x256xf32>
    %202 = arith.mulf %198, %201 : vector<4x256xf32>
    %c24 = arith.constant 24 : index
    %c0_72 = arith.constant 0 : index
    %c0_73 = arith.constant 0 : index
    %203 = vector.load %arg3[%c24, %c0_72, %c0_73] : memref<36x4x1xf32, #tpu.memory_space<vmem>>, vector<1x4x1xf32>
    %204 = vector.shape_cast %203 : vector<1x4x1xf32> to vector<4x1xf32>
    %205 = vector.extract_strided_slice %202 {offsets = [0, 0], sizes = [1, 256], strides = [1, 1]} : vector<4x256xf32> to vector<1x256xf32>
    %206 = vector.broadcast %204 : vector<4x1xf32> to vector<4x256xf32>
    %207 = vector.broadcast %205 : vector<1x256xf32> to vector<4x256xf32>
    %208 = arith.mulf %206, %207 : vector<4x256xf32>
    %209 = arith.addf %197, %208 : vector<4x256xf32>
    %c25 = arith.constant 25 : index
    %c0_74 = arith.constant 0 : index
    %c0_75 = arith.constant 0 : index
    %210 = vector.load %arg3[%c25, %c0_74, %c0_75] : memref<36x4x1xf32, #tpu.memory_space<vmem>>, vector<1x4x1xf32>
    %211 = vector.shape_cast %210 : vector<1x4x1xf32> to vector<4x1xf32>
    %212 = vector.extract_strided_slice %202 {offsets = [1, 0], sizes = [1, 256], strides = [1, 1]} : vector<4x256xf32> to vector<1x256xf32>
    %213 = vector.broadcast %211 : vector<4x1xf32> to vector<4x256xf32>
    %214 = vector.broadcast %212 : vector<1x256xf32> to vector<4x256xf32>
    %215 = arith.mulf %213, %214 : vector<4x256xf32>
    %216 = arith.addf %209, %215 : vector<4x256xf32>
    %c26 = arith.constant 26 : index
    %c0_76 = arith.constant 0 : index
    %c0_77 = arith.constant 0 : index
    %217 = vector.load %arg3[%c26, %c0_76, %c0_77] : memref<36x4x1xf32, #tpu.memory_space<vmem>>, vector<1x4x1xf32>
    %218 = vector.shape_cast %217 : vector<1x4x1xf32> to vector<4x1xf32>
    %219 = vector.extract_strided_slice %202 {offsets = [2, 0], sizes = [1, 256], strides = [1, 1]} : vector<4x256xf32> to vector<1x256xf32>
    %220 = vector.broadcast %218 : vector<4x1xf32> to vector<4x256xf32>
    %221 = vector.broadcast %219 : vector<1x256xf32> to vector<4x256xf32>
    %222 = arith.mulf %220, %221 : vector<4x256xf32>
    %223 = arith.addf %216, %222 : vector<4x256xf32>
    %c27 = arith.constant 27 : index
    %c0_78 = arith.constant 0 : index
    %c0_79 = arith.constant 0 : index
    %224 = vector.load %arg3[%c27, %c0_78, %c0_79] : memref<36x4x1xf32, #tpu.memory_space<vmem>>, vector<1x4x1xf32>
    %225 = vector.shape_cast %224 : vector<1x4x1xf32> to vector<4x1xf32>
    %226 = vector.extract_strided_slice %202 {offsets = [3, 0], sizes = [1, 256], strides = [1, 1]} : vector<4x256xf32> to vector<1x256xf32>
    %227 = vector.broadcast %225 : vector<4x1xf32> to vector<4x256xf32>
    %228 = vector.broadcast %226 : vector<1x256xf32> to vector<4x256xf32>
    %229 = arith.mulf %227, %228 : vector<4x256xf32>
    %230 = arith.addf %223, %229 : vector<4x256xf32>
    %c240_i32 = arith.constant 240 : i32
    %231 = tpu.dynamic_rotate %1 by %c240_i32 dim 1 : vector<4x256xf32>, i32 -> vector<4x256xf32>
    %c7_80 = arith.constant 7 : index
    %c0_81 = arith.constant 0 : index
    %c0_82 = arith.constant 0 : index
    %232 = vector.load %arg2[%c7_80, %c0_81, %c0_82] : memref<9x1x256xf32, #tpu.memory_space<vmem>>, vector<1x1x256xf32>
    %233 = vector.shape_cast %232 : vector<1x1x256xf32> to vector<1x256xf32>
    %234 = vector.broadcast %233 : vector<1x256xf32> to vector<4x256xf32>
    %235 = arith.mulf %231, %234 : vector<4x256xf32>
    %c28 = arith.constant 28 : index
    %c0_83 = arith.constant 0 : index
    %c0_84 = arith.constant 0 : index
    %236 = vector.load %arg3[%c28, %c0_83, %c0_84] : memref<36x4x1xf32, #tpu.memory_space<vmem>>, vector<1x4x1xf32>
    %237 = vector.shape_cast %236 : vector<1x4x1xf32> to vector<4x1xf32>
    %238 = vector.extract_strided_slice %235 {offsets = [0, 0], sizes = [1, 256], strides = [1, 1]} : vector<4x256xf32> to vector<1x256xf32>
    %239 = vector.broadcast %237 : vector<4x1xf32> to vector<4x256xf32>
    %240 = vector.broadcast %238 : vector<1x256xf32> to vector<4x256xf32>
    %241 = arith.mulf %239, %240 : vector<4x256xf32>
    %242 = arith.addf %230, %241 : vector<4x256xf32>
    %c29 = arith.constant 29 : index
    %c0_85 = arith.constant 0 : index
    %c0_86 = arith.constant 0 : index
    %243 = vector.load %arg3[%c29, %c0_85, %c0_86] : memref<36x4x1xf32, #tpu.memory_space<vmem>>, vector<1x4x1xf32>
    %244 = vector.shape_cast %243 : vector<1x4x1xf32> to vector<4x1xf32>
    %245 = vector.extract_strided_slice %235 {offsets = [1, 0], sizes = [1, 256], strides = [1, 1]} : vector<4x256xf32> to vector<1x256xf32>
    %246 = vector.broadcast %244 : vector<4x1xf32> to vector<4x256xf32>
    %247 = vector.broadcast %245 : vector<1x256xf32> to vector<4x256xf32>
    %248 = arith.mulf %246, %247 : vector<4x256xf32>
    %249 = arith.addf %242, %248 : vector<4x256xf32>
    %c30 = arith.constant 30 : index
    %c0_87 = arith.constant 0 : index
    %c0_88 = arith.constant 0 : index
    %250 = vector.load %arg3[%c30, %c0_87, %c0_88] : memref<36x4x1xf32, #tpu.memory_space<vmem>>, vector<1x4x1xf32>
    %251 = vector.shape_cast %250 : vector<1x4x1xf32> to vector<4x1xf32>
    %252 = vector.extract_strided_slice %235 {offsets = [2, 0], sizes = [1, 256], strides = [1, 1]} : vector<4x256xf32> to vector<1x256xf32>
    %253 = vector.broadcast %251 : vector<4x1xf32> to vector<4x256xf32>
    %254 = vector.broadcast %252 : vector<1x256xf32> to vector<4x256xf32>
    %255 = arith.mulf %253, %254 : vector<4x256xf32>
    %256 = arith.addf %249, %255 : vector<4x256xf32>
    %c31 = arith.constant 31 : index
    %c0_89 = arith.constant 0 : index
    %c0_90 = arith.constant 0 : index
    %257 = vector.load %arg3[%c31, %c0_89, %c0_90] : memref<36x4x1xf32, #tpu.memory_space<vmem>>, vector<1x4x1xf32>
    %258 = vector.shape_cast %257 : vector<1x4x1xf32> to vector<4x1xf32>
    %259 = vector.extract_strided_slice %235 {offsets = [3, 0], sizes = [1, 256], strides = [1, 1]} : vector<4x256xf32> to vector<1x256xf32>
    %260 = vector.broadcast %258 : vector<4x1xf32> to vector<4x256xf32>
    %261 = vector.broadcast %259 : vector<1x256xf32> to vector<4x256xf32>
    %262 = arith.mulf %260, %261 : vector<4x256xf32>
    %263 = arith.addf %256, %262 : vector<4x256xf32>
    %c239_i32 = arith.constant 239 : i32
    %264 = tpu.dynamic_rotate %1 by %c239_i32 dim 1 : vector<4x256xf32>, i32 -> vector<4x256xf32>
    %c8_91 = arith.constant 8 : index
    %c0_92 = arith.constant 0 : index
    %c0_93 = arith.constant 0 : index
    %265 = vector.load %arg2[%c8_91, %c0_92, %c0_93] : memref<9x1x256xf32, #tpu.memory_space<vmem>>, vector<1x1x256xf32>
    %266 = vector.shape_cast %265 : vector<1x1x256xf32> to vector<1x256xf32>
    %267 = vector.broadcast %266 : vector<1x256xf32> to vector<4x256xf32>
    %268 = arith.mulf %264, %267 : vector<4x256xf32>
    %c32 = arith.constant 32 : index
    %c0_94 = arith.constant 0 : index
    %c0_95 = arith.constant 0 : index
    %269 = vector.load %arg3[%c32, %c0_94, %c0_95] : memref<36x4x1xf32, #tpu.memory_space<vmem>>, vector<1x4x1xf32>
    %270 = vector.shape_cast %269 : vector<1x4x1xf32> to vector<4x1xf32>
    %271 = vector.extract_strided_slice %268 {offsets = [0, 0], sizes = [1, 256], strides = [1, 1]} : vector<4x256xf32> to vector<1x256xf32>
    %272 = vector.broadcast %270 : vector<4x1xf32> to vector<4x256xf32>
    %273 = vector.broadcast %271 : vector<1x256xf32> to vector<4x256xf32>
    %274 = arith.mulf %272, %273 : vector<4x256xf32>
    %275 = arith.addf %263, %274 : vector<4x256xf32>
    %c33 = arith.constant 33 : index
    %c0_96 = arith.constant 0 : index
    %c0_97 = arith.constant 0 : index
    %276 = vector.load %arg3[%c33, %c0_96, %c0_97] : memref<36x4x1xf32, #tpu.memory_space<vmem>>, vector<1x4x1xf32>
    %277 = vector.shape_cast %276 : vector<1x4x1xf32> to vector<4x1xf32>
    %278 = vector.extract_strided_slice %268 {offsets = [1, 0], sizes = [1, 256], strides = [1, 1]} : vector<4x256xf32> to vector<1x256xf32>
    %279 = vector.broadcast %277 : vector<4x1xf32> to vector<4x256xf32>
    %280 = vector.broadcast %278 : vector<1x256xf32> to vector<4x256xf32>
    %281 = arith.mulf %279, %280 : vector<4x256xf32>
    %282 = arith.addf %275, %281 : vector<4x256xf32>
    %c34 = arith.constant 34 : index
    %c0_98 = arith.constant 0 : index
    %c0_99 = arith.constant 0 : index
    %283 = vector.load %arg3[%c34, %c0_98, %c0_99] : memref<36x4x1xf32, #tpu.memory_space<vmem>>, vector<1x4x1xf32>
    %284 = vector.shape_cast %283 : vector<1x4x1xf32> to vector<4x1xf32>
    %285 = vector.extract_strided_slice %268 {offsets = [2, 0], sizes = [1, 256], strides = [1, 1]} : vector<4x256xf32> to vector<1x256xf32>
    %286 = vector.broadcast %284 : vector<4x1xf32> to vector<4x256xf32>
    %287 = vector.broadcast %285 : vector<1x256xf32> to vector<4x256xf32>
    %288 = arith.mulf %286, %287 : vector<4x256xf32>
    %289 = arith.addf %282, %288 : vector<4x256xf32>
    %c35 = arith.constant 35 : index
    %c0_100 = arith.constant 0 : index
    %c0_101 = arith.constant 0 : index
    %290 = vector.load %arg3[%c35, %c0_100, %c0_101] : memref<36x4x1xf32, #tpu.memory_space<vmem>>, vector<1x4x1xf32>
    %291 = vector.shape_cast %290 : vector<1x4x1xf32> to vector<4x1xf32>
    %292 = vector.extract_strided_slice %268 {offsets = [3, 0], sizes = [1, 256], strides = [1, 1]} : vector<4x256xf32> to vector<1x256xf32>
    %293 = vector.broadcast %291 : vector<4x1xf32> to vector<4x256xf32>
    %294 = vector.broadcast %292 : vector<1x256xf32> to vector<4x256xf32>
    %295 = arith.mulf %293, %294 : vector<4x256xf32>
    %296 = arith.addf %289, %295 : vector<4x256xf32>
    %c0_102 = arith.constant 0 : index
    %c0_103 = arith.constant 0 : index
    %297 = vector.load %arg4[%c0_102, %c0_103] : memref<4x1xf32, #tpu.memory_space<vmem>>, vector<4x1xf32>
    %298 = vector.broadcast %297 : vector<4x1xf32> to vector<4x256xf32>
    %299 = arith.addf %296, %298 : vector<4x256xf32>
    %cst = arith.constant 0.000000e+00 : f32
    %300 = vector.broadcast %cst : f32 to vector<4x256xf32>
    %301 = arith.maximumf %299, %300 : vector<4x256xf32>
    %cst_104 = arith.constant dense<0.000000e+00> : vector<4xf32>
    %302 = vector.multi_reduction <add>, %301, %cst_104 [1] : vector<4x256xf32> to vector<4xf32>
    %303 = vector.shape_cast %302 : vector<4xf32> to vector<4x1xf32>
    %cst_105 = arith.constant 2.560000e+02 : f32
    %304 = vector.broadcast %cst_105 : f32 to vector<4x1xf32>
    %305 = arith.divf %303, %304 : vector<4x1xf32>
    %306 = vector.broadcast %305 : vector<4x1xf32> to vector<4x256xf32>
    %307 = arith.subf %301, %306 : vector<4x256xf32>
    %308 = arith.mulf %307, %307 : vector<4x256xf32>
    %cst_106 = arith.constant dense<0.000000e+00> : vector<4xf32>
    %309 = vector.multi_reduction <add>, %308, %cst_106 [1] : vector<4x256xf32> to vector<4xf32>
    %310 = vector.shape_cast %309 : vector<4xf32> to vector<4x1xf32>
    %cst_107 = arith.constant 2.560000e+02 : f32
    %311 = vector.broadcast %cst_107 : f32 to vector<4x1xf32>
    %312 = arith.divf %310, %311 : vector<4x1xf32>
    %313 = vector.broadcast %305 : vector<4x1xf32> to vector<4x256xf32>
    %314 = arith.subf %301, %313 : vector<4x256xf32>
    %cst_108 = arith.constant 9.99999997E-7 : f32
    %315 = vector.broadcast %cst_108 : f32 to vector<4x1xf32>
    %316 = arith.addf %312, %315 : vector<4x1xf32>
    %317 = math.rsqrt %316 : vector<4x1xf32>
    %318 = vector.broadcast %317 : vector<4x1xf32> to vector<4x256xf32>
    %319 = arith.mulf %314, %318 : vector<4x256xf32>
    %c0_109 = arith.constant 0 : index
    %c0_110 = arith.constant 0 : index
    %320 = vector.load %arg5[%c0_109, %c0_110] : memref<4x1xf32, #tpu.memory_space<vmem>>, vector<4x1xf32>
    %321 = vector.broadcast %320 : vector<4x1xf32> to vector<4x256xf32>
    %322 = arith.mulf %319, %321 : vector<4x256xf32>
    %c0_111 = arith.constant 0 : index
    %c0_112 = arith.constant 0 : index
    %323 = vector.load %arg6[%c0_111, %c0_112] : memref<4x1xf32, #tpu.memory_space<vmem>>, vector<4x1xf32>
    %324 = vector.broadcast %323 : vector<4x1xf32> to vector<4x256xf32>
    %325 = arith.addf %322, %324 : vector<4x256xf32>
    %cst_113 = arith.constant 0.000000e+00 : f32
    %326 = vector.broadcast %cst_113 : f32 to vector<4x256xf32>
    %327 = arith.cmpf ogt, %325, %326 : vector<4x256xf32>
    %328 = math.exp %325 : vector<4x256xf32>
    %cst_114 = arith.constant 1.000000e+00 : f32
    %329 = vector.broadcast %cst_114 : f32 to vector<4x256xf32>
    %330 = arith.subf %328, %329 : vector<4x256xf32>
    %331 = arith.select %327, %325, %330 : vector<4x256xi1>, vector<4x256xf32>
    %c17_i32_115 = arith.constant 17 : i32
    %332 = tpu.dynamic_rotate %331 by %c17_i32_115 dim 1 : vector<4x256xf32>, i32 -> vector<4x256xf32>
    %c0_116 = arith.constant 0 : index
    %c0_117 = arith.constant 0 : index
    %c0_118 = arith.constant 0 : index
    %333 = vector.load %arg2[%c0_116, %c0_117, %c0_118] : memref<9x1x256xf32, #tpu.memory_space<vmem>>, vector<1x1x256xf32>
    %334 = vector.shape_cast %333 : vector<1x1x256xf32> to vector<1x256xf32>
    %335 = vector.broadcast %334 : vector<1x256xf32> to vector<4x256xf32>
    %336 = arith.mulf %332, %335 : vector<4x256xf32>
    %c0_119 = arith.constant 0 : index
    %c0_120 = arith.constant 0 : index
    %c0_121 = arith.constant 0 : index
    %337 = vector.load %arg7[%c0_119, %c0_120, %c0_121] : memref<36x4x1xf32, #tpu.memory_space<vmem>>, vector<1x4x1xf32>
    %338 = vector.shape_cast %337 : vector<1x4x1xf32> to vector<4x1xf32>
    %339 = vector.extract_strided_slice %336 {offsets = [0, 0], sizes = [1, 256], strides = [1, 1]} : vector<4x256xf32> to vector<1x256xf32>
    %340 = vector.broadcast %338 : vector<4x1xf32> to vector<4x256xf32>
    %341 = vector.broadcast %339 : vector<1x256xf32> to vector<4x256xf32>
    %342 = arith.mulf %340, %341 : vector<4x256xf32>
    %c1_122 = arith.constant 1 : index
    %c0_123 = arith.constant 0 : index
    %c0_124 = arith.constant 0 : index
    %343 = vector.load %arg7[%c1_122, %c0_123, %c0_124] : memref<36x4x1xf32, #tpu.memory_space<vmem>>, vector<1x4x1xf32>
    %344 = vector.shape_cast %343 : vector<1x4x1xf32> to vector<4x1xf32>
    %345 = vector.extract_strided_slice %336 {offsets = [1, 0], sizes = [1, 256], strides = [1, 1]} : vector<4x256xf32> to vector<1x256xf32>
    %346 = vector.broadcast %344 : vector<4x1xf32> to vector<4x256xf32>
    %347 = vector.broadcast %345 : vector<1x256xf32> to vector<4x256xf32>
    %348 = arith.mulf %346, %347 : vector<4x256xf32>
    %349 = arith.addf %342, %348 : vector<4x256xf32>
    %c2_125 = arith.constant 2 : index
    %c0_126 = arith.constant 0 : index
    %c0_127 = arith.constant 0 : index
    %350 = vector.load %arg7[%c2_125, %c0_126, %c0_127] : memref<36x4x1xf32, #tpu.memory_space<vmem>>, vector<1x4x1xf32>
    %351 = vector.shape_cast %350 : vector<1x4x1xf32> to vector<4x1xf32>
    %352 = vector.extract_strided_slice %336 {offsets = [2, 0], sizes = [1, 256], strides = [1, 1]} : vector<4x256xf32> to vector<1x256xf32>
    %353 = vector.broadcast %351 : vector<4x1xf32> to vector<4x256xf32>
    %354 = vector.broadcast %352 : vector<1x256xf32> to vector<4x256xf32>
    %355 = arith.mulf %353, %354 : vector<4x256xf32>
    %356 = arith.addf %349, %355 : vector<4x256xf32>
    %c3_128 = arith.constant 3 : index
    %c0_129 = arith.constant 0 : index
    %c0_130 = arith.constant 0 : index
    %357 = vector.load %arg7[%c3_128, %c0_129, %c0_130] : memref<36x4x1xf32, #tpu.memory_space<vmem>>, vector<1x4x1xf32>
    %358 = vector.shape_cast %357 : vector<1x4x1xf32> to vector<4x1xf32>
    %359 = vector.extract_strided_slice %336 {offsets = [3, 0], sizes = [1, 256], strides = [1, 1]} : vector<4x256xf32> to vector<1x256xf32>
    %360 = vector.broadcast %358 : vector<4x1xf32> to vector<4x256xf32>
    %361 = vector.broadcast %359 : vector<1x256xf32> to vector<4x256xf32>
    %362 = arith.mulf %360, %361 : vector<4x256xf32>
    %363 = arith.addf %356, %362 : vector<4x256xf32>
    %c16_i32_131 = arith.constant 16 : i32
    %364 = tpu.dynamic_rotate %331 by %c16_i32_131 dim 1 : vector<4x256xf32>, i32 -> vector<4x256xf32>
    %c1_132 = arith.constant 1 : index
    %c0_133 = arith.constant 0 : index
    %c0_134 = arith.constant 0 : index
    %365 = vector.load %arg2[%c1_132, %c0_133, %c0_134] : memref<9x1x256xf32, #tpu.memory_space<vmem>>, vector<1x1x256xf32>
    %366 = vector.shape_cast %365 : vector<1x1x256xf32> to vector<1x256xf32>
    %367 = vector.broadcast %366 : vector<1x256xf32> to vector<4x256xf32>
    %368 = arith.mulf %364, %367 : vector<4x256xf32>
    %c4_135 = arith.constant 4 : index
    %c0_136 = arith.constant 0 : index
    %c0_137 = arith.constant 0 : index
    %369 = vector.load %arg7[%c4_135, %c0_136, %c0_137] : memref<36x4x1xf32, #tpu.memory_space<vmem>>, vector<1x4x1xf32>
    %370 = vector.shape_cast %369 : vector<1x4x1xf32> to vector<4x1xf32>
    %371 = vector.extract_strided_slice %368 {offsets = [0, 0], sizes = [1, 256], strides = [1, 1]} : vector<4x256xf32> to vector<1x256xf32>
    %372 = vector.broadcast %370 : vector<4x1xf32> to vector<4x256xf32>
    %373 = vector.broadcast %371 : vector<1x256xf32> to vector<4x256xf32>
    %374 = arith.mulf %372, %373 : vector<4x256xf32>
    %375 = arith.addf %363, %374 : vector<4x256xf32>
    %c5_138 = arith.constant 5 : index
    %c0_139 = arith.constant 0 : index
    %c0_140 = arith.constant 0 : index
    %376 = vector.load %arg7[%c5_138, %c0_139, %c0_140] : memref<36x4x1xf32, #tpu.memory_space<vmem>>, vector<1x4x1xf32>
    %377 = vector.shape_cast %376 : vector<1x4x1xf32> to vector<4x1xf32>
    %378 = vector.extract_strided_slice %368 {offsets = [1, 0], sizes = [1, 256], strides = [1, 1]} : vector<4x256xf32> to vector<1x256xf32>
    %379 = vector.broadcast %377 : vector<4x1xf32> to vector<4x256xf32>
    %380 = vector.broadcast %378 : vector<1x256xf32> to vector<4x256xf32>
    %381 = arith.mulf %379, %380 : vector<4x256xf32>
    %382 = arith.addf %375, %381 : vector<4x256xf32>
    %c6_141 = arith.constant 6 : index
    %c0_142 = arith.constant 0 : index
    %c0_143 = arith.constant 0 : index
    %383 = vector.load %arg7[%c6_141, %c0_142, %c0_143] : memref<36x4x1xf32, #tpu.memory_space<vmem>>, vector<1x4x1xf32>
    %384 = vector.shape_cast %383 : vector<1x4x1xf32> to vector<4x1xf32>
    %385 = vector.extract_strided_slice %368 {offsets = [2, 0], sizes = [1, 256], strides = [1, 1]} : vector<4x256xf32> to vector<1x256xf32>
    %386 = vector.broadcast %384 : vector<4x1xf32> to vector<4x256xf32>
    %387 = vector.broadcast %385 : vector<1x256xf32> to vector<4x256xf32>
    %388 = arith.mulf %386, %387 : vector<4x256xf32>
    %389 = arith.addf %382, %388 : vector<4x256xf32>
    %c7_144 = arith.constant 7 : index
    %c0_145 = arith.constant 0 : index
    %c0_146 = arith.constant 0 : index
    %390 = vector.load %arg7[%c7_144, %c0_145, %c0_146] : memref<36x4x1xf32, #tpu.memory_space<vmem>>, vector<1x4x1xf32>
    %391 = vector.shape_cast %390 : vector<1x4x1xf32> to vector<4x1xf32>
    %392 = vector.extract_strided_slice %368 {offsets = [3, 0], sizes = [1, 256], strides = [1, 1]} : vector<4x256xf32> to vector<1x256xf32>
    %393 = vector.broadcast %391 : vector<4x1xf32> to vector<4x256xf32>
    %394 = vector.broadcast %392 : vector<1x256xf32> to vector<4x256xf32>
    %395 = arith.mulf %393, %394 : vector<4x256xf32>
    %396 = arith.addf %389, %395 : vector<4x256xf32>
    %c15_i32_147 = arith.constant 15 : i32
    %397 = tpu.dynamic_rotate %331 by %c15_i32_147 dim 1 : vector<4x256xf32>, i32 -> vector<4x256xf32>
    %c2_148 = arith.constant 2 : index
    %c0_149 = arith.constant 0 : index
    %c0_150 = arith.constant 0 : index
    %398 = vector.load %arg2[%c2_148, %c0_149, %c0_150] : memref<9x1x256xf32, #tpu.memory_space<vmem>>, vector<1x1x256xf32>
    %399 = vector.shape_cast %398 : vector<1x1x256xf32> to vector<1x256xf32>
    %400 = vector.broadcast %399 : vector<1x256xf32> to vector<4x256xf32>
    %401 = arith.mulf %397, %400 : vector<4x256xf32>
    %c8_151 = arith.constant 8 : index
    %c0_152 = arith.constant 0 : index
    %c0_153 = arith.constant 0 : index
    %402 = vector.load %arg7[%c8_151, %c0_152, %c0_153] : memref<36x4x1xf32, #tpu.memory_space<vmem>>, vector<1x4x1xf32>
    %403 = vector.shape_cast %402 : vector<1x4x1xf32> to vector<4x1xf32>
    %404 = vector.extract_strided_slice %401 {offsets = [0, 0], sizes = [1, 256], strides = [1, 1]} : vector<4x256xf32> to vector<1x256xf32>
    %405 = vector.broadcast %403 : vector<4x1xf32> to vector<4x256xf32>
    %406 = vector.broadcast %404 : vector<1x256xf32> to vector<4x256xf32>
    %407 = arith.mulf %405, %406 : vector<4x256xf32>
    %408 = arith.addf %396, %407 : vector<4x256xf32>
    %c9_154 = arith.constant 9 : index
    %c0_155 = arith.constant 0 : index
    %c0_156 = arith.constant 0 : index
    %409 = vector.load %arg7[%c9_154, %c0_155, %c0_156] : memref<36x4x1xf32, #tpu.memory_space<vmem>>, vector<1x4x1xf32>
    %410 = vector.shape_cast %409 : vector<1x4x1xf32> to vector<4x1xf32>
    %411 = vector.extract_strided_slice %401 {offsets = [1, 0], sizes = [1, 256], strides = [1, 1]} : vector<4x256xf32> to vector<1x256xf32>
    %412 = vector.broadcast %410 : vector<4x1xf32> to vector<4x256xf32>
    %413 = vector.broadcast %411 : vector<1x256xf32> to vector<4x256xf32>
    %414 = arith.mulf %412, %413 : vector<4x256xf32>
    %415 = arith.addf %408, %414 : vector<4x256xf32>
    %c10_157 = arith.constant 10 : index
    %c0_158 = arith.constant 0 : index
    %c0_159 = arith.constant 0 : index
    %416 = vector.load %arg7[%c10_157, %c0_158, %c0_159] : memref<36x4x1xf32, #tpu.memory_space<vmem>>, vector<1x4x1xf32>
    %417 = vector.shape_cast %416 : vector<1x4x1xf32> to vector<4x1xf32>
    %418 = vector.extract_strided_slice %401 {offsets = [2, 0], sizes = [1, 256], strides = [1, 1]} : vector<4x256xf32> to vector<1x256xf32>
    %419 = vector.broadcast %417 : vector<4x1xf32> to vector<4x256xf32>
    %420 = vector.broadcast %418 : vector<1x256xf32> to vector<4x256xf32>
    %421 = arith.mulf %419, %420 : vector<4x256xf32>
    %422 = arith.addf %415, %421 : vector<4x256xf32>
    %c11_160 = arith.constant 11 : index
    %c0_161 = arith.constant 0 : index
    %c0_162 = arith.constant 0 : index
    %423 = vector.load %arg7[%c11_160, %c0_161, %c0_162] : memref<36x4x1xf32, #tpu.memory_space<vmem>>, vector<1x4x1xf32>
    %424 = vector.shape_cast %423 : vector<1x4x1xf32> to vector<4x1xf32>
    %425 = vector.extract_strided_slice %401 {offsets = [3, 0], sizes = [1, 256], strides = [1, 1]} : vector<4x256xf32> to vector<1x256xf32>
    %426 = vector.broadcast %424 : vector<4x1xf32> to vector<4x256xf32>
    %427 = vector.broadcast %425 : vector<1x256xf32> to vector<4x256xf32>
    %428 = arith.mulf %426, %427 : vector<4x256xf32>
    %429 = arith.addf %422, %428 : vector<4x256xf32>
    %c1_i32_163 = arith.constant 1 : i32
    %430 = tpu.dynamic_rotate %331 by %c1_i32_163 dim 1 : vector<4x256xf32>, i32 -> vector<4x256xf32>
    %c3_164 = arith.constant 3 : index
    %c0_165 = arith.constant 0 : index
    %c0_166 = arith.constant 0 : index
    %431 = vector.load %arg2[%c3_164, %c0_165, %c0_166] : memref<9x1x256xf32, #tpu.memory_space<vmem>>, vector<1x1x256xf32>
    %432 = vector.shape_cast %431 : vector<1x1x256xf32> to vector<1x256xf32>
    %433 = vector.broadcast %432 : vector<1x256xf32> to vector<4x256xf32>
    %434 = arith.mulf %430, %433 : vector<4x256xf32>
    %c12_167 = arith.constant 12 : index
    %c0_168 = arith.constant 0 : index
    %c0_169 = arith.constant 0 : index
    %435 = vector.load %arg7[%c12_167, %c0_168, %c0_169] : memref<36x4x1xf32, #tpu.memory_space<vmem>>, vector<1x4x1xf32>
    %436 = vector.shape_cast %435 : vector<1x4x1xf32> to vector<4x1xf32>
    %437 = vector.extract_strided_slice %434 {offsets = [0, 0], sizes = [1, 256], strides = [1, 1]} : vector<4x256xf32> to vector<1x256xf32>
    %438 = vector.broadcast %436 : vector<4x1xf32> to vector<4x256xf32>
    %439 = vector.broadcast %437 : vector<1x256xf32> to vector<4x256xf32>
    %440 = arith.mulf %438, %439 : vector<4x256xf32>
    %441 = arith.addf %429, %440 : vector<4x256xf32>
    %c13_170 = arith.constant 13 : index
    %c0_171 = arith.constant 0 : index
    %c0_172 = arith.constant 0 : index
    %442 = vector.load %arg7[%c13_170, %c0_171, %c0_172] : memref<36x4x1xf32, #tpu.memory_space<vmem>>, vector<1x4x1xf32>
    %443 = vector.shape_cast %442 : vector<1x4x1xf32> to vector<4x1xf32>
    %444 = vector.extract_strided_slice %434 {offsets = [1, 0], sizes = [1, 256], strides = [1, 1]} : vector<4x256xf32> to vector<1x256xf32>
    %445 = vector.broadcast %443 : vector<4x1xf32> to vector<4x256xf32>
    %446 = vector.broadcast %444 : vector<1x256xf32> to vector<4x256xf32>
    %447 = arith.mulf %445, %446 : vector<4x256xf32>
    %448 = arith.addf %441, %447 : vector<4x256xf32>
    %c14_173 = arith.constant 14 : index
    %c0_174 = arith.constant 0 : index
    %c0_175 = arith.constant 0 : index
    %449 = vector.load %arg7[%c14_173, %c0_174, %c0_175] : memref<36x4x1xf32, #tpu.memory_space<vmem>>, vector<1x4x1xf32>
    %450 = vector.shape_cast %449 : vector<1x4x1xf32> to vector<4x1xf32>
    %451 = vector.extract_strided_slice %434 {offsets = [2, 0], sizes = [1, 256], strides = [1, 1]} : vector<4x256xf32> to vector<1x256xf32>
    %452 = vector.broadcast %450 : vector<4x1xf32> to vector<4x256xf32>
    %453 = vector.broadcast %451 : vector<1x256xf32> to vector<4x256xf32>
    %454 = arith.mulf %452, %453 : vector<4x256xf32>
    %455 = arith.addf %448, %454 : vector<4x256xf32>
    %c15_176 = arith.constant 15 : index
    %c0_177 = arith.constant 0 : index
    %c0_178 = arith.constant 0 : index
    %456 = vector.load %arg7[%c15_176, %c0_177, %c0_178] : memref<36x4x1xf32, #tpu.memory_space<vmem>>, vector<1x4x1xf32>
    %457 = vector.shape_cast %456 : vector<1x4x1xf32> to vector<4x1xf32>
    %458 = vector.extract_strided_slice %434 {offsets = [3, 0], sizes = [1, 256], strides = [1, 1]} : vector<4x256xf32> to vector<1x256xf32>
    %459 = vector.broadcast %457 : vector<4x1xf32> to vector<4x256xf32>
    %460 = vector.broadcast %458 : vector<1x256xf32> to vector<4x256xf32>
    %461 = arith.mulf %459, %460 : vector<4x256xf32>
    %462 = arith.addf %455, %461 : vector<4x256xf32>
    %c4_179 = arith.constant 4 : index
    %c0_180 = arith.constant 0 : index
    %c0_181 = arith.constant 0 : index
    %463 = vector.load %arg2[%c4_179, %c0_180, %c0_181] : memref<9x1x256xf32, #tpu.memory_space<vmem>>, vector<1x1x256xf32>
    %464 = vector.shape_cast %463 : vector<1x1x256xf32> to vector<1x256xf32>
    %465 = vector.broadcast %464 : vector<1x256xf32> to vector<4x256xf32>
    %466 = arith.mulf %331, %465 : vector<4x256xf32>
    %c16_182 = arith.constant 16 : index
    %c0_183 = arith.constant 0 : index
    %c0_184 = arith.constant 0 : index
    %467 = vector.load %arg7[%c16_182, %c0_183, %c0_184] : memref<36x4x1xf32, #tpu.memory_space<vmem>>, vector<1x4x1xf32>
    %468 = vector.shape_cast %467 : vector<1x4x1xf32> to vector<4x1xf32>
    %469 = vector.extract_strided_slice %466 {offsets = [0, 0], sizes = [1, 256], strides = [1, 1]} : vector<4x256xf32> to vector<1x256xf32>
    %470 = vector.broadcast %468 : vector<4x1xf32> to vector<4x256xf32>
    %471 = vector.broadcast %469 : vector<1x256xf32> to vector<4x256xf32>
    %472 = arith.mulf %470, %471 : vector<4x256xf32>
    %473 = arith.addf %462, %472 : vector<4x256xf32>
    %c17_185 = arith.constant 17 : index
    %c0_186 = arith.constant 0 : index
    %c0_187 = arith.constant 0 : index
    %474 = vector.load %arg7[%c17_185, %c0_186, %c0_187] : memref<36x4x1xf32, #tpu.memory_space<vmem>>, vector<1x4x1xf32>
    %475 = vector.shape_cast %474 : vector<1x4x1xf32> to vector<4x1xf32>
    %476 = vector.extract_strided_slice %466 {offsets = [1, 0], sizes = [1, 256], strides = [1, 1]} : vector<4x256xf32> to vector<1x256xf32>
    %477 = vector.broadcast %475 : vector<4x1xf32> to vector<4x256xf32>
    %478 = vector.broadcast %476 : vector<1x256xf32> to vector<4x256xf32>
    %479 = arith.mulf %477, %478 : vector<4x256xf32>
    %480 = arith.addf %473, %479 : vector<4x256xf32>
    %c18_188 = arith.constant 18 : index
    %c0_189 = arith.constant 0 : index
    %c0_190 = arith.constant 0 : index
    %481 = vector.load %arg7[%c18_188, %c0_189, %c0_190] : memref<36x4x1xf32, #tpu.memory_space<vmem>>, vector<1x4x1xf32>
    %482 = vector.shape_cast %481 : vector<1x4x1xf32> to vector<4x1xf32>
    %483 = vector.extract_strided_slice %466 {offsets = [2, 0], sizes = [1, 256], strides = [1, 1]} : vector<4x256xf32> to vector<1x256xf32>
    %484 = vector.broadcast %482 : vector<4x1xf32> to vector<4x256xf32>
    %485 = vector.broadcast %483 : vector<1x256xf32> to vector<4x256xf32>
    %486 = arith.mulf %484, %485 : vector<4x256xf32>
    %487 = arith.addf %480, %486 : vector<4x256xf32>
    %c19_191 = arith.constant 19 : index
    %c0_192 = arith.constant 0 : index
    %c0_193 = arith.constant 0 : index
    %488 = vector.load %arg7[%c19_191, %c0_192, %c0_193] : memref<36x4x1xf32, #tpu.memory_space<vmem>>, vector<1x4x1xf32>
    %489 = vector.shape_cast %488 : vector<1x4x1xf32> to vector<4x1xf32>
    %490 = vector.extract_strided_slice %466 {offsets = [3, 0], sizes = [1, 256], strides = [1, 1]} : vector<4x256xf32> to vector<1x256xf32>
    %491 = vector.broadcast %489 : vector<4x1xf32> to vector<4x256xf32>
    %492 = vector.broadcast %490 : vector<1x256xf32> to vector<4x256xf32>
    %493 = arith.mulf %491, %492 : vector<4x256xf32>
    %494 = arith.addf %487, %493 : vector<4x256xf32>
    %c255_i32_194 = arith.constant 255 : i32
    %495 = tpu.dynamic_rotate %331 by %c255_i32_194 dim 1 : vector<4x256xf32>, i32 -> vector<4x256xf32>
    %c5_195 = arith.constant 5 : index
    %c0_196 = arith.constant 0 : index
    %c0_197 = arith.constant 0 : index
    %496 = vector.load %arg2[%c5_195, %c0_196, %c0_197] : memref<9x1x256xf32, #tpu.memory_space<vmem>>, vector<1x1x256xf32>
    %497 = vector.shape_cast %496 : vector<1x1x256xf32> to vector<1x256xf32>
    %498 = vector.broadcast %497 : vector<1x256xf32> to vector<4x256xf32>
    %499 = arith.mulf %495, %498 : vector<4x256xf32>
    %c20_198 = arith.constant 20 : index
    %c0_199 = arith.constant 0 : index
    %c0_200 = arith.constant 0 : index
    %500 = vector.load %arg7[%c20_198, %c0_199, %c0_200] : memref<36x4x1xf32, #tpu.memory_space<vmem>>, vector<1x4x1xf32>
    %501 = vector.shape_cast %500 : vector<1x4x1xf32> to vector<4x1xf32>
    %502 = vector.extract_strided_slice %499 {offsets = [0, 0], sizes = [1, 256], strides = [1, 1]} : vector<4x256xf32> to vector<1x256xf32>
    %503 = vector.broadcast %501 : vector<4x1xf32> to vector<4x256xf32>
    %504 = vector.broadcast %502 : vector<1x256xf32> to vector<4x256xf32>
    %505 = arith.mulf %503, %504 : vector<4x256xf32>
    %506 = arith.addf %494, %505 : vector<4x256xf32>
    %c21_201 = arith.constant 21 : index
    %c0_202 = arith.constant 0 : index
    %c0_203 = arith.constant 0 : index
    %507 = vector.load %arg7[%c21_201, %c0_202, %c0_203] : memref<36x4x1xf32, #tpu.memory_space<vmem>>, vector<1x4x1xf32>
    %508 = vector.shape_cast %507 : vector<1x4x1xf32> to vector<4x1xf32>
    %509 = vector.extract_strided_slice %499 {offsets = [1, 0], sizes = [1, 256], strides = [1, 1]} : vector<4x256xf32> to vector<1x256xf32>
    %510 = vector.broadcast %508 : vector<4x1xf32> to vector<4x256xf32>
    %511 = vector.broadcast %509 : vector<1x256xf32> to vector<4x256xf32>
    %512 = arith.mulf %510, %511 : vector<4x256xf32>
    %513 = arith.addf %506, %512 : vector<4x256xf32>
    %c22_204 = arith.constant 22 : index
    %c0_205 = arith.constant 0 : index
    %c0_206 = arith.constant 0 : index
    %514 = vector.load %arg7[%c22_204, %c0_205, %c0_206] : memref<36x4x1xf32, #tpu.memory_space<vmem>>, vector<1x4x1xf32>
    %515 = vector.shape_cast %514 : vector<1x4x1xf32> to vector<4x1xf32>
    %516 = vector.extract_strided_slice %499 {offsets = [2, 0], sizes = [1, 256], strides = [1, 1]} : vector<4x256xf32> to vector<1x256xf32>
    %517 = vector.broadcast %515 : vector<4x1xf32> to vector<4x256xf32>
    %518 = vector.broadcast %516 : vector<1x256xf32> to vector<4x256xf32>
    %519 = arith.mulf %517, %518 : vector<4x256xf32>
    %520 = arith.addf %513, %519 : vector<4x256xf32>
    %c23_207 = arith.constant 23 : index
    %c0_208 = arith.constant 0 : index
    %c0_209 = arith.constant 0 : index
    %521 = vector.load %arg7[%c23_207, %c0_208, %c0_209] : memref<36x4x1xf32, #tpu.memory_space<vmem>>, vector<1x4x1xf32>
    %522 = vector.shape_cast %521 : vector<1x4x1xf32> to vector<4x1xf32>
    %523 = vector.extract_strided_slice %499 {offsets = [3, 0], sizes = [1, 256], strides = [1, 1]} : vector<4x256xf32> to vector<1x256xf32>
    %524 = vector.broadcast %522 : vector<4x1xf32> to vector<4x256xf32>
    %525 = vector.broadcast %523 : vector<1x256xf32> to vector<4x256xf32>
    %526 = arith.mulf %524, %525 : vector<4x256xf32>
    %527 = arith.addf %520, %526 : vector<4x256xf32>
    %c241_i32_210 = arith.constant 241 : i32
    %528 = tpu.dynamic_rotate %331 by %c241_i32_210 dim 1 : vector<4x256xf32>, i32 -> vector<4x256xf32>
    %c6_211 = arith.constant 6 : index
    %c0_212 = arith.constant 0 : index
    %c0_213 = arith.constant 0 : index
    %529 = vector.load %arg2[%c6_211, %c0_212, %c0_213] : memref<9x1x256xf32, #tpu.memory_space<vmem>>, vector<1x1x256xf32>
    %530 = vector.shape_cast %529 : vector<1x1x256xf32> to vector<1x256xf32>
    %531 = vector.broadcast %530 : vector<1x256xf32> to vector<4x256xf32>
    %532 = arith.mulf %528, %531 : vector<4x256xf32>
    %c24_214 = arith.constant 24 : index
    %c0_215 = arith.constant 0 : index
    %c0_216 = arith.constant 0 : index
    %533 = vector.load %arg7[%c24_214, %c0_215, %c0_216] : memref<36x4x1xf32, #tpu.memory_space<vmem>>, vector<1x4x1xf32>
    %534 = vector.shape_cast %533 : vector<1x4x1xf32> to vector<4x1xf32>
    %535 = vector.extract_strided_slice %532 {offsets = [0, 0], sizes = [1, 256], strides = [1, 1]} : vector<4x256xf32> to vector<1x256xf32>
    %536 = vector.broadcast %534 : vector<4x1xf32> to vector<4x256xf32>
    %537 = vector.broadcast %535 : vector<1x256xf32> to vector<4x256xf32>
    %538 = arith.mulf %536, %537 : vector<4x256xf32>
    %539 = arith.addf %527, %538 : vector<4x256xf32>
    %c25_217 = arith.constant 25 : index
    %c0_218 = arith.constant 0 : index
    %c0_219 = arith.constant 0 : index
    %540 = vector.load %arg7[%c25_217, %c0_218, %c0_219] : memref<36x4x1xf32, #tpu.memory_space<vmem>>, vector<1x4x1xf32>
    %541 = vector.shape_cast %540 : vector<1x4x1xf32> to vector<4x1xf32>
    %542 = vector.extract_strided_slice %532 {offsets = [1, 0], sizes = [1, 256], strides = [1, 1]} : vector<4x256xf32> to vector<1x256xf32>
    %543 = vector.broadcast %541 : vector<4x1xf32> to vector<4x256xf32>
    %544 = vector.broadcast %542 : vector<1x256xf32> to vector<4x256xf32>
    %545 = arith.mulf %543, %544 : vector<4x256xf32>
    %546 = arith.addf %539, %545 : vector<4x256xf32>
    %c26_220 = arith.constant 26 : index
    %c0_221 = arith.constant 0 : index
    %c0_222 = arith.constant 0 : index
    %547 = vector.load %arg7[%c26_220, %c0_221, %c0_222] : memref<36x4x1xf32, #tpu.memory_space<vmem>>, vector<1x4x1xf32>
    %548 = vector.shape_cast %547 : vector<1x4x1xf32> to vector<4x1xf32>
    %549 = vector.extract_strided_slice %532 {offsets = [2, 0], sizes = [1, 256], strides = [1, 1]} : vector<4x256xf32> to vector<1x256xf32>
    %550 = vector.broadcast %548 : vector<4x1xf32> to vector<4x256xf32>
    %551 = vector.broadcast %549 : vector<1x256xf32> to vector<4x256xf32>
    %552 = arith.mulf %550, %551 : vector<4x256xf32>
    %553 = arith.addf %546, %552 : vector<4x256xf32>
    %c27_223 = arith.constant 27 : index
    %c0_224 = arith.constant 0 : index
    %c0_225 = arith.constant 0 : index
    %554 = vector.load %arg7[%c27_223, %c0_224, %c0_225] : memref<36x4x1xf32, #tpu.memory_space<vmem>>, vector<1x4x1xf32>
    %555 = vector.shape_cast %554 : vector<1x4x1xf32> to vector<4x1xf32>
    %556 = vector.extract_strided_slice %532 {offsets = [3, 0], sizes = [1, 256], strides = [1, 1]} : vector<4x256xf32> to vector<1x256xf32>
    %557 = vector.broadcast %555 : vector<4x1xf32> to vector<4x256xf32>
    %558 = vector.broadcast %556 : vector<1x256xf32> to vector<4x256xf32>
    %559 = arith.mulf %557, %558 : vector<4x256xf32>
    %560 = arith.addf %553, %559 : vector<4x256xf32>
    %c240_i32_226 = arith.constant 240 : i32
    %561 = tpu.dynamic_rotate %331 by %c240_i32_226 dim 1 : vector<4x256xf32>, i32 -> vector<4x256xf32>
    %c7_227 = arith.constant 7 : index
    %c0_228 = arith.constant 0 : index
    %c0_229 = arith.constant 0 : index
    %562 = vector.load %arg2[%c7_227, %c0_228, %c0_229] : memref<9x1x256xf32, #tpu.memory_space<vmem>>, vector<1x1x256xf32>
    %563 = vector.shape_cast %562 : vector<1x1x256xf32> to vector<1x256xf32>
    %564 = vector.broadcast %563 : vector<1x256xf32> to vector<4x256xf32>
    %565 = arith.mulf %561, %564 : vector<4x256xf32>
    %c28_230 = arith.constant 28 : index
    %c0_231 = arith.constant 0 : index
    %c0_232 = arith.constant 0 : index
    %566 = vector.load %arg7[%c28_230, %c0_231, %c0_232] : memref<36x4x1xf32, #tpu.memory_space<vmem>>, vector<1x4x1xf32>
    %567 = vector.shape_cast %566 : vector<1x4x1xf32> to vector<4x1xf32>
    %568 = vector.extract_strided_slice %565 {offsets = [0, 0], sizes = [1, 256], strides = [1, 1]} : vector<4x256xf32> to vector<1x256xf32>
    %569 = vector.broadcast %567 : vector<4x1xf32> to vector<4x256xf32>
    %570 = vector.broadcast %568 : vector<1x256xf32> to vector<4x256xf32>
    %571 = arith.mulf %569, %570 : vector<4x256xf32>
    %572 = arith.addf %560, %571 : vector<4x256xf32>
    %c29_233 = arith.constant 29 : index
    %c0_234 = arith.constant 0 : index
    %c0_235 = arith.constant 0 : index
    %573 = vector.load %arg7[%c29_233, %c0_234, %c0_235] : memref<36x4x1xf32, #tpu.memory_space<vmem>>, vector<1x4x1xf32>
    %574 = vector.shape_cast %573 : vector<1x4x1xf32> to vector<4x1xf32>
    %575 = vector.extract_strided_slice %565 {offsets = [1, 0], sizes = [1, 256], strides = [1, 1]} : vector<4x256xf32> to vector<1x256xf32>
    %576 = vector.broadcast %574 : vector<4x1xf32> to vector<4x256xf32>
    %577 = vector.broadcast %575 : vector<1x256xf32> to vector<4x256xf32>
    %578 = arith.mulf %576, %577 : vector<4x256xf32>
    %579 = arith.addf %572, %578 : vector<4x256xf32>
    %c30_236 = arith.constant 30 : index
    %c0_237 = arith.constant 0 : index
    %c0_238 = arith.constant 0 : index
    %580 = vector.load %arg7[%c30_236, %c0_237, %c0_238] : memref<36x4x1xf32, #tpu.memory_space<vmem>>, vector<1x4x1xf32>
    %581 = vector.shape_cast %580 : vector<1x4x1xf32> to vector<4x1xf32>
    %582 = vector.extract_strided_slice %565 {offsets = [2, 0], sizes = [1, 256], strides = [1, 1]} : vector<4x256xf32> to vector<1x256xf32>
    %583 = vector.broadcast %581 : vector<4x1xf32> to vector<4x256xf32>
    %584 = vector.broadcast %582 : vector<1x256xf32> to vector<4x256xf32>
    %585 = arith.mulf %583, %584 : vector<4x256xf32>
    %586 = arith.addf %579, %585 : vector<4x256xf32>
    %c31_239 = arith.constant 31 : index
    %c0_240 = arith.constant 0 : index
    %c0_241 = arith.constant 0 : index
    %587 = vector.load %arg7[%c31_239, %c0_240, %c0_241] : memref<36x4x1xf32, #tpu.memory_space<vmem>>, vector<1x4x1xf32>
    %588 = vector.shape_cast %587 : vector<1x4x1xf32> to vector<4x1xf32>
    %589 = vector.extract_strided_slice %565 {offsets = [3, 0], sizes = [1, 256], strides = [1, 1]} : vector<4x256xf32> to vector<1x256xf32>
    %590 = vector.broadcast %588 : vector<4x1xf32> to vector<4x256xf32>
    %591 = vector.broadcast %589 : vector<1x256xf32> to vector<4x256xf32>
    %592 = arith.mulf %590, %591 : vector<4x256xf32>
    %593 = arith.addf %586, %592 : vector<4x256xf32>
    %c239_i32_242 = arith.constant 239 : i32
    %594 = tpu.dynamic_rotate %331 by %c239_i32_242 dim 1 : vector<4x256xf32>, i32 -> vector<4x256xf32>
    %c8_243 = arith.constant 8 : index
    %c0_244 = arith.constant 0 : index
    %c0_245 = arith.constant 0 : index
    %595 = vector.load %arg2[%c8_243, %c0_244, %c0_245] : memref<9x1x256xf32, #tpu.memory_space<vmem>>, vector<1x1x256xf32>
    %596 = vector.shape_cast %595 : vector<1x1x256xf32> to vector<1x256xf32>
    %597 = vector.broadcast %596 : vector<1x256xf32> to vector<4x256xf32>
    %598 = arith.mulf %594, %597 : vector<4x256xf32>
    %c32_246 = arith.constant 32 : index
    %c0_247 = arith.constant 0 : index
    %c0_248 = arith.constant 0 : index
    %599 = vector.load %arg7[%c32_246, %c0_247, %c0_248] : memref<36x4x1xf32, #tpu.memory_space<vmem>>, vector<1x4x1xf32>
    %600 = vector.shape_cast %599 : vector<1x4x1xf32> to vector<4x1xf32>
    %601 = vector.extract_strided_slice %598 {offsets = [0, 0], sizes = [1, 256], strides = [1, 1]} : vector<4x256xf32> to vector<1x256xf32>
    %602 = vector.broadcast %600 : vector<4x1xf32> to vector<4x256xf32>
    %603 = vector.broadcast %601 : vector<1x256xf32> to vector<4x256xf32>
    %604 = arith.mulf %602, %603 : vector<4x256xf32>
    %605 = arith.addf %593, %604 : vector<4x256xf32>
    %c33_249 = arith.constant 33 : index
    %c0_250 = arith.constant 0 : index
    %c0_251 = arith.constant 0 : index
    %606 = vector.load %arg7[%c33_249, %c0_250, %c0_251] : memref<36x4x1xf32, #tpu.memory_space<vmem>>, vector<1x4x1xf32>
    %607 = vector.shape_cast %606 : vector<1x4x1xf32> to vector<4x1xf32>
    %608 = vector.extract_strided_slice %598 {offsets = [1, 0], sizes = [1, 256], strides = [1, 1]} : vector<4x256xf32> to vector<1x256xf32>
    %609 = vector.broadcast %607 : vector<4x1xf32> to vector<4x256xf32>
    %610 = vector.broadcast %608 : vector<1x256xf32> to vector<4x256xf32>
    %611 = arith.mulf %609, %610 : vector<4x256xf32>
    %612 = arith.addf %605, %611 : vector<4x256xf32>
    %c34_252 = arith.constant 34 : index
    %c0_253 = arith.constant 0 : index
    %c0_254 = arith.constant 0 : index
    %613 = vector.load %arg7[%c34_252, %c0_253, %c0_254] : memref<36x4x1xf32, #tpu.memory_space<vmem>>, vector<1x4x1xf32>
    %614 = vector.shape_cast %613 : vector<1x4x1xf32> to vector<4x1xf32>
    %615 = vector.extract_strided_slice %598 {offsets = [2, 0], sizes = [1, 256], strides = [1, 1]} : vector<4x256xf32> to vector<1x256xf32>
    %616 = vector.broadcast %614 : vector<4x1xf32> to vector<4x256xf32>
    %617 = vector.broadcast %615 : vector<1x256xf32> to vector<4x256xf32>
    %618 = arith.mulf %616, %617 : vector<4x256xf32>
    %619 = arith.addf %612, %618 : vector<4x256xf32>
    %c35_255 = arith.constant 35 : index
    %c0_256 = arith.constant 0 : index
    %c0_257 = arith.constant 0 : index
    %620 = vector.load %arg7[%c35_255, %c0_256, %c0_257] : memref<36x4x1xf32, #tpu.memory_space<vmem>>, vector<1x4x1xf32>
    %621 = vector.shape_cast %620 : vector<1x4x1xf32> to vector<4x1xf32>
    %622 = vector.extract_strided_slice %598 {offsets = [3, 0], sizes = [1, 256], strides = [1, 1]} : vector<4x256xf32> to vector<1x256xf32>
    %623 = vector.broadcast %621 : vector<4x1xf32> to vector<4x256xf32>
    %624 = vector.broadcast %622 : vector<1x256xf32> to vector<4x256xf32>
    %625 = arith.mulf %623, %624 : vector<4x256xf32>
    %626 = arith.addf %619, %625 : vector<4x256xf32>
    %c0_258 = arith.constant 0 : index
    %c0_259 = arith.constant 0 : index
    %627 = vector.load %arg8[%c0_258, %c0_259] : memref<4x1xf32, #tpu.memory_space<vmem>>, vector<4x1xf32>
    %628 = vector.broadcast %627 : vector<4x1xf32> to vector<4x256xf32>
    %629 = arith.addf %626, %628 : vector<4x256xf32>
    %cst_260 = arith.constant 0.000000e+00 : f32
    %630 = vector.broadcast %cst_260 : f32 to vector<4x256xf32>
    %631 = arith.maximumf %629, %630 : vector<4x256xf32>
    %cst_261 = arith.constant dense<0.000000e+00> : vector<4xf32>
    %632 = vector.multi_reduction <add>, %631, %cst_261 [1] : vector<4x256xf32> to vector<4xf32>
    %633 = vector.shape_cast %632 : vector<4xf32> to vector<4x1xf32>
    %cst_262 = arith.constant 2.560000e+02 : f32
    %634 = vector.broadcast %cst_262 : f32 to vector<4x1xf32>
    %635 = arith.divf %633, %634 : vector<4x1xf32>
    %636 = vector.broadcast %635 : vector<4x1xf32> to vector<4x256xf32>
    %637 = arith.subf %631, %636 : vector<4x256xf32>
    %638 = arith.mulf %637, %637 : vector<4x256xf32>
    %cst_263 = arith.constant dense<0.000000e+00> : vector<4xf32>
    %639 = vector.multi_reduction <add>, %638, %cst_263 [1] : vector<4x256xf32> to vector<4xf32>
    %640 = vector.shape_cast %639 : vector<4xf32> to vector<4x1xf32>
    %cst_264 = arith.constant 2.560000e+02 : f32
    %641 = vector.broadcast %cst_264 : f32 to vector<4x1xf32>
    %642 = arith.divf %640, %641 : vector<4x1xf32>
    %643 = vector.broadcast %635 : vector<4x1xf32> to vector<4x256xf32>
    %644 = arith.subf %631, %643 : vector<4x256xf32>
    %cst_265 = arith.constant 9.99999997E-7 : f32
    %645 = vector.broadcast %cst_265 : f32 to vector<4x1xf32>
    %646 = arith.addf %642, %645 : vector<4x1xf32>
    %647 = math.rsqrt %646 : vector<4x1xf32>
    %648 = vector.broadcast %647 : vector<4x1xf32> to vector<4x256xf32>
    %649 = arith.mulf %644, %648 : vector<4x256xf32>
    %c0_266 = arith.constant 0 : index
    %c0_267 = arith.constant 0 : index
    %650 = vector.load %arg9[%c0_266, %c0_267] : memref<4x1xf32, #tpu.memory_space<vmem>>, vector<4x1xf32>
    %651 = vector.broadcast %650 : vector<4x1xf32> to vector<4x256xf32>
    %652 = arith.mulf %649, %651 : vector<4x256xf32>
    %c0_268 = arith.constant 0 : index
    %c0_269 = arith.constant 0 : index
    %653 = vector.load %arg10[%c0_268, %c0_269] : memref<4x1xf32, #tpu.memory_space<vmem>>, vector<4x1xf32>
    %654 = vector.broadcast %653 : vector<4x1xf32> to vector<4x256xf32>
    %655 = arith.addf %652, %654 : vector<4x256xf32>
    %656 = arith.addf %1, %655 : vector<4x256xf32>
    %cst_270 = arith.constant 0.000000e+00 : f32
    %657 = vector.broadcast %cst_270 : f32 to vector<4x256xf32>
    %658 = arith.cmpf ogt, %656, %657 : vector<4x256xf32>
    %659 = math.exp %656 : vector<4x256xf32>
    %cst_271 = arith.constant 1.000000e+00 : f32
    %660 = vector.broadcast %cst_271 : f32 to vector<4x256xf32>
    %661 = arith.subf %659, %660 : vector<4x256xf32>
    %662 = arith.select %658, %656, %661 : vector<4x256xi1>, vector<4x256xf32>
    %c0_272 = arith.constant 0 : index
    %c0_273 = arith.constant 0 : index
    %c0_274 = arith.constant 0 : index
    %663 = vector.load %arg11[%c0_272, %c0_273, %c0_274] : memref<1x4x256xf32, #tpu.memory_space<vmem>>, vector<1x4x256xf32>
    %664 = vector.shape_cast %663 : vector<1x4x256xf32> to vector<4x256xf32>
    %665 = vector.shape_cast %662 : vector<4x256xf32> to vector<1x4x256xf32>
    tpu.vector_store %arg11[%c0_272, %c0_273, %c0_274], %665 {strides = array<i32>} : memref<1x4x256xf32, #tpu.memory_space<vmem>>, vector<1x4x256xf32>,
    return
  }
  func.func @transform_0(%arg0: i32) -> (i32, i32, i32) {
    %c0_i32 = arith.constant 0 : i32
    %c0_i32_0 = arith.constant 0 : i32
    %c0_i32_1 = arith.constant 0 : i32
    return %arg0, %c0_i32, %c0_i32_0 : i32, i32, i32
  }
  func.func @transform_1(%arg0: i32) -> (i32, i32, i32) {
    %c0_i32 = arith.constant 0 : i32
    %c0_i32_0 = arith.constant 0 : i32
    %c0_i32_1 = arith.constant 0 : i32
    %c0_i32_2 = arith.constant 0 : i32
    return %c0_i32, %c0_i32_0, %c0_i32_1 : i32, i32, i32
  }
  func.func @transform_2(%arg0: i32) -> (i32, i32, i32) {
    %c0_i32 = arith.constant 0 : i32
    %c0_i32_0 = arith.constant 0 : i32
    %c0_i32_1 = arith.constant 0 : i32
    %c0_i32_2 = arith.constant 0 : i32
    return %c0_i32, %c0_i32_0, %c0_i32_1 : i32, i32, i32
  }
  func.func @transform_3(%arg0: i32) -> (i32, i32) {
    %c0_i32 = arith.constant 0 : i32
    %c0_i32_0 = arith.constant 0 : i32
    %c0_i32_1 = arith.constant 0 : i32
    return %c0_i32, %c0_i32_0 : i32, i32
  }
  func.func @transform_4(%arg0: i32) -> (i32, i32) {
    %c0_i32 = arith.constant 0 : i32
    %c0_i32_0 = arith.constant 0 : i32
    %c0_i32_1 = arith.constant 0 : i32
    return %c0_i32, %c0_i32_0 : i32, i32
  }
  func.func @transform_5(%arg0: i32) -> (i32, i32) {
    %c0_i32 = arith.constant 0 : i32
    %c0_i32_0 = arith.constant 0 : i32
    %c0_i32_1 = arith.constant 0 : i32
    return %c0_i32, %c0_i32_0 : i32, i32
  }
  func.func @transform_6(%arg0: i32) -> (i32, i32, i32) {
    %c0_i32 = arith.constant 0 : i32
    %c0_i32_0 = arith.constant 0 : i32
    %c0_i32_1 = arith.constant 0 : i32
    %c0_i32_2 = arith.constant 0 : i32
    return %c0_i32, %c0_i32_0, %c0_i32_1 : i32, i32, i32
  }
  func.func @transform_7(%arg0: i32) -> (i32, i32) {
    %c0_i32 = arith.constant 0 : i32
    %c0_i32_0 = arith.constant 0 : i32
    %c0_i32_1 = arith.constant 0 : i32
    return %c0_i32, %c0_i32_0 : i32, i32
  }
  func.func @transform_8(%arg0: i32) -> (i32, i32) {
    %c0_i32 = arith.constant 0 : i32
    %c0_i32_0 = arith.constant 0 : i32
    %c0_i32_1 = arith.constant 0 : i32
    return %c0_i32, %c0_i32_0 : i32, i32
  }
  func.func @transform_9(%arg0: i32) -> (i32, i32) {
    %c0_i32 = arith.constant 0 : i32
    %c0_i32_0 = arith.constant 0 : i32
    %c0_i32_1 = arith.constant 0 : i32
    return %c0_i32, %c0_i32_0 : i32, i32
  }
  func.func @transform_10(%arg0: i32) -> (i32, i32, i32) {
    %c0_i32 = arith.constant 0 : i32
    %c0_i32_0 = arith.constant 0 : i32
    %c0_i32_1 = arith.constant 0 : i32
    return %arg0, %c0_i32, %c0_i32_0 : i32, i32, i32
  }
}

</mosaic_0001>

<llo_original>
// kernel: sym_cnn2d_block_forward.1
$region0: #{sym_cnn2d_block_forward.1}
  #allocation0 [shape = 'u32[]', space=smem, size = 0x4, offset = 0x4, fixed_abs, tag = 'smem constant byte address 0x4 - core index']
  #allocation1 [shape = 'u32[144,128]{1,0:T(1,128)}', space=vmem, size = 0x12000, scoped, tag = 'internal scratch']
  %s0 = inlined_call_operand.vmem [shape: f32[2,4,256], index: 0, kind: input, shape index: {}]
  %s1 = inlined_call_operand.vmem [shape: f32[9,1,256], index: 1, kind: input, shape index: {}]
  %s2 = inlined_call_operand.vmem [shape: f32[36,4,1], index: 2, kind: input, shape index: {}]
  %s3 = inlined_call_operand.vmem [shape: f32[4,1], index: 3, kind: input, shape index: {}]
  %s4 = inlined_call_operand.vmem [shape: f32[4,1], index: 4, kind: input, shape index: {}]
  %s5 = inlined_call_operand.vmem [shape: f32[4,1], index: 5, kind: input, shape index: {}]
  %s6 = inlined_call_operand.vmem [shape: f32[36,4,1], index: 6, kind: input, shape index: {}]
  %s7 = inlined_call_operand.vmem [shape: f32[4,1], index: 7, kind: input, shape index: {}]
  %s8 = inlined_call_operand.vmem [shape: f32[4,1], index: 8, kind: input, shape index: {}]
  %s9 = inlined_call_operand.vmem [shape: f32[4,1], index: 9, kind: input, shape index: {}]
  %s10 = inlined_call_operand.vmem [shape: f32[2,4,256], index: 10, kind: output, shape index: {}]
  %s11 = sld [smem:[#allocation0]]
  $region73: #{sym_cnn2d_block_forward.1} parent=0
    _
  %s13 = ssub.s32 1, %s11
  %s14 = scalar_select 0, %s13, %s11
  loop: start=0, step=1, limit=4
  $region2: #{sym_cnn2d_block_forward.1} parent=0 // loop_pre_header
    _
  $region3: #{sym_cnn2d_block_forward.1} parent=0 // loop_header
    %s16 = sphi 0, %s20
    %p17 = scmp.ge.s32.totalorder %s16, 4
    %s26 = sphi 0, %s28
    %s29 = sphi 0, %s26
    %s30 = sphi 0, %s29
    %s46 = sphi 0, %s30
    %s50 = sphi 0, %s50
    %s52 = sphi 0, %s50
    %s53 = sphi 0, %s52
    %s67 = sphi 0, %s53
    %s71 = sphi 0, %s71
    %s73 = sphi 0, %s71
    %s74 = sphi 0, %s73
    %s88 = sphi 0, %s74
    %s92 = sphi 0, %s92
    %s94 = sphi 0, %s92
    %s95 = sphi 0, %s94
    %s109 = sphi 0, %s95
    %s113 = sphi 0, %s113
    %s115 = sphi 0, %s113
    %s116 = sphi 0, %s115
    %s130 = sphi 0, %s116
    %s134 = sphi 0, %s134
    %s136 = sphi 0, %s134
    %s137 = sphi 0, %s136
    %s151 = sphi 0, %s137
    %s155 = sphi 0, %s155
    %s157 = sphi 0, %s155
    %s158 = sphi 0, %s157
    %s172 = sphi 0, %s158
    %s176 = sphi 0, %s176
    %s178 = sphi 0, %s176
    %s179 = sphi 0, %s178
    %s193 = sphi 0, %s179
    %s197 = sphi 0, %s197
    %s199 = sphi 0, %s197
    %s200 = sphi 0, %s199
    %s214 = sphi 0, %s200
    %s218 = sphi 0, %s218
    %s220 = sphi 0, %s218
    %s221 = sphi 0, %s220
    %s235 = sphi 0, %s221
    %s241 = sphi 0, %s243
    %s244 = sphi 0, %s241
    %s245 = sphi 0, %s244
    %s261 = sphi 0, %s245
  $region4: #{sym_cnn2d_block_forward.1} parent=0 // loop_header_branch
    %19 = sbr.rel (%p17) target = $region8
  $region5: #{sym_cnn2d_block_forward.1} parent=0 // loop_body
    %s21 = ssub.s32 %s16, 1
    %s22 = ssub.s32 %s16, 2
    %s23 = sadd.s32 %s16, 1
    %s24 = ssub.s32 %s16, %s23
    %p25 = scmp.eq.s32.totalorder %s24, 0
    %s27 = sadd.s32 %s26, 1
    %s28 = scalar_select %p25, %s26, %s27
    %p31 = pneg %p25
    %p32 = scmp.eq.s32.totalorder %s16, 1
    %p33 = por %p31, %p32
    %p34 = scmp.ne.s32.totalorder %s26, %s29
    %p35 = scmp.eq.s32.totalorder %s16, 0
    %p36 = por %p34, %p35
    %p37 = scmp.ne.s32.totalorder %s26, %s29
    %p38 = scmp.eq.s32.totalorder %s21, 1
    %p39 = por %p37, %p38
    %p40 = scmp.ne.s32.totalorder %s29, %s30
    %p41 = scmp.eq.s32.totalorder %s21, 0
    %p42 = por %p40, %p41
    %p43 = scmp.ne.s32.totalorder %s29, %s30
    %p44 = scmp.eq.s32.totalorder %s22, 1
    %p45 = por %p43, %p44
    %p47 = scmp.ne.s32.totalorder %s30, %s46
    %p48 = scmp.eq.s32.totalorder %s22, 0
    %p49 = por %p47, %p48
    %s51 = sadd.s32 %s50, 1
    %p54 = scmp.eq.s32.totalorder %s16, 1
    %p55 = scmp.ne.s32.totalorder %s50, %s52
    %p56 = scmp.eq.s32.totalorder %s16, 0
    %p57 = por %p55, %p56
    %p58 = scmp.ne.s32.totalorder %s50, %s52
    %p59 = scmp.eq.s32.totalorder %s21, 1
    %p60 = por %p58, %p59
    %p61 = scmp.ne.s32.totalorder %s52, %s53
    %p62 = scmp.eq.s32.totalorder %s21, 0
    %p63 = por %p61, %p62
    %p64 = scmp.ne.s32.totalorder %s52, %s53
    %p65 = scmp.eq.s32.totalorder %s22, 1
    %p66 = por %p64, %p65
    %p68 = scmp.ne.s32.totalorder %s53, %s67
    %p69 = scmp.eq.s32.totalorder %s22, 0
    %p70 = por %p68, %p69
    %s72 = sadd.s32 %s71, 1
    %p75 = scmp.eq.s32.totalorder %s16, 1
    %p76 = scmp.ne.s32.totalorder %s71, %s73
    %p77 = scmp.eq.s32.totalorder %s16, 0
    %p78 = por %p76, %p77
    %p79 = scmp.ne.s32.totalorder %s71, %s73
    %p80 = scmp.eq.s32.totalorder %s21, 1
    %p81 = por %p79, %p80
    %p82 = scmp.ne.s32.totalorder %s73, %s74
    %p83 = scmp.eq.s32.totalorder %s21, 0
    %p84 = por %p82, %p83
    %p85 = scmp.ne.s32.totalorder %s73, %s74
    %p86 = scmp.eq.s32.totalorder %s22, 1
    %p87 = por %p85, %p86
    %p89 = scmp.ne.s32.totalorder %s74, %s88
    %p90 = scmp.eq.s32.totalorder %s22, 0
    %p91 = por %p89, %p90
    %s93 = sadd.s32 %s92, 1
    %p96 = scmp.eq.s32.totalorder %s16, 1
    %p97 = scmp.ne.s32.totalorder %s92, %s94
    %p98 = scmp.eq.s32.totalorder %s16, 0
    %p99 = por %p97, %p98
    %p100 = scmp.ne.s32.totalorder %s92, %s94
    %p101 = scmp.eq.s32.totalorder %s21, 1
    %p102 = por %p100, %p101
    %p103 = scmp.ne.s32.totalorder %s94, %s95
    %p104 = scmp.eq.s32.totalorder %s21, 0
    %p105 = por %p103, %p104
    %p106 = scmp.ne.s32.totalorder %s94, %s95
    %p107 = scmp.eq.s32.totalorder %s22, 1
    %p108 = por %p106, %p107
    %p110 = scmp.ne.s32.totalorder %s95, %s109
    %p111 = scmp.eq.s32.totalorder %s22, 0
    %p112 = por %p110, %p111
    %s114 = sadd.s32 %s113, 1
    %p117 = scmp.eq.s32.totalorder %s16, 1
    %p118 = scmp.ne.s32.totalorder %s113, %s115
    %p119 = scmp.eq.s32.totalorder %s16, 0
    %p120 = por %p118, %p119
    %p121 = scmp.ne.s32.totalorder %s113, %s115
    %p122 = scmp.eq.s32.totalorder %s21, 1
    %p123 = por %p121, %p122
    %p124 = scmp.ne.s32.totalorder %s115, %s116
    %p125 = scmp.eq.s32.totalorder %s21, 0
    %p126 = por %p124, %p125
    %p127 = scmp.ne.s32.totalorder %s115, %s116
    %p128 = scmp.eq.s32.totalorder %s22, 1
    %p129 = por %p127, %p128
    %p131 = scmp.ne.s32.totalorder %s116, %s130
    %p132 = scmp.eq.s32.totalorder %s22, 0
    %p133 = por %p131, %p132
    %s135 = sadd.s32 %s134, 1
    %p138 = scmp.eq.s32.totalorder %s16, 1
    %p139 = scmp.ne.s32.totalorder %s134, %s136
    %p140 = scmp.eq.s32.totalorder %s16, 0
    %p141 = por %p139, %p140
    %p142 = scmp.ne.s32.totalorder %s134, %s136
    %p143 = scmp.eq.s32.totalorder %s21, 1
    %p144 = por %p142, %p143
    %p145 = scmp.ne.s32.totalorder %s136, %s137
    %p146 = scmp.eq.s32.totalorder %s21, 0
    %p147 = por %p145, %p146
    %p148 = scmp.ne.s32.totalorder %s136, %s137
    %p149 = scmp.eq.s32.totalorder %s22, 1
    %p150 = por %p148, %p149
    %p152 = scmp.ne.s32.totalorder %s137, %s151
    %p153 = scmp.eq.s32.totalorder %s22, 0
    %p154 = por %p152, %p153
    %s156 = sadd.s32 %s155, 1
    %p159 = scmp.eq.s32.totalorder %s16, 1
    %p160 = scmp.ne.s32.totalorder %s155, %s157
    %p161 = scmp.eq.s32.totalorder %s16, 0
    %p162 = por %p160, %p161
    %p163 = scmp.ne.s32.totalorder %s155, %s157
    %p164 = scmp.eq.s32.totalorder %s21, 1
    %p165 = por %p163, %p164
    %p166 = scmp.ne.s32.totalorder %s157, %s158
    %p167 = scmp.eq.s32.totalorder %s21, 0
    %p168 = por %p166, %p167
    %p169 = scmp.ne.s32.totalorder %s157, %s158
    %p170 = scmp.eq.s32.totalorder %s22, 1
    %p171 = por %p169, %p170
    %p173 = scmp.ne.s32.totalorder %s158, %s172
    %p174 = scmp.eq.s32.totalorder %s22, 0
    %p175 = por %p173, %p174
    %s177 = sadd.s32 %s176, 1
    %p180 = scmp.eq.s32.totalorder %s16, 1
    %p181 = scmp.ne.s32.totalorder %s176, %s178
    %p182 = scmp.eq.s32.totalorder %s16, 0
    %p183 = por %p181, %p182
    %p184 = scmp.ne.s32.totalorder %s176, %s178
    %p185 = scmp.eq.s32.totalorder %s21, 1
    %p186 = por %p184, %p185
    %p187 = scmp.ne.s32.totalorder %s178, %s179
    %p188 = scmp.eq.s32.totalorder %s21, 0
    %p189 = por %p187, %p188
    %p190 = scmp.ne.s32.totalorder %s178, %s179
    %p191 = scmp.eq.s32.totalorder %s22, 1
    %p192 = por %p190, %p191
    %p194 = scmp.ne.s32.totalorder %s179, %s193
    %p195 = scmp.eq.s32.totalorder %s22, 0
    %p196 = por %p194, %p195
    %s198 = sadd.s32 %s197, 1
    %p201 = scmp.eq.s32.totalorder %s16, 1
    %p202 = scmp.ne.s32.totalorder %s197, %s199
    %p203 = scmp.eq.s32.totalorder %s16, 0
    %p204 = por %p202, %p203
    %p205 = scmp.ne.s32.totalorder %s197, %s199
    %p206 = scmp.eq.s32.totalorder %s21, 1
    %p207 = por %p205, %p206
    %p208 = scmp.ne.s32.totalorder %s199, %s200
    %p209 = scmp.eq.s32.totalorder %s21, 0
    %p210 = por %p208, %p209
    %p211 = scmp.ne.s32.totalorder %s199, %s200
    %p212 = scmp.eq.s32.totalorder %s22, 1
    %p213 = por %p211, %p212
    %p215 = scmp.ne.s32.totalorder %s200, %s214
    %p216 = scmp.eq.s32.totalorder %s22, 0
    %p217 = por %p215, %p216
    %s219 = sadd.s32 %s218, 1
    %p222 = scmp.eq.s32.totalorder %s16, 1
    %p223 = scmp.ne.s32.totalorder %s218, %s220
    %p224 = scmp.eq.s32.totalorder %s16, 0
    %p225 = por %p223, %p224
    %p226 = scmp.ne.s32.totalorder %s218, %s220
    %p227 = scmp.eq.s32.totalorder %s21, 1
    %p228 = por %p226, %p227
    %p229 = scmp.ne.s32.totalorder %s220, %s221
    %p230 = scmp.eq.s32.totalorder %s21, 0
    %p231 = por %p229, %p230
    %p232 = scmp.ne.s32.totalorder %s220, %s221
    %p233 = scmp.eq.s32.totalorder %s22, 1
    %p234 = por %p232, %p233
    %p236 = scmp.ne.s32.totalorder %s221, %s235
    %p237 = scmp.eq.s32.totalorder %s22, 0
    %p238 = por %p236, %p237
    %s239 = ssub.s32 %s16, %s23
    %p240 = scmp.eq.s32.totalorder %s239, 0
    %s242 = sadd.s32 %s241, 1
    %s243 = scalar_select %p240, %s241, %s242
    %p246 = pneg %p240
    %p247 = scmp.eq.s32.totalorder %s16, 1
    %p248 = por %p246, %p247
    %p249 = scmp.ne.s32.totalorder %s241, %s244
    %p250 = scmp.eq.s32.totalorder %s16, 0
    %p251 = por %p249, %p250
    %p252 = scmp.ne.s32.totalorder %s241, %s244
    %p253 = scmp.eq.s32.totalorder %s21, 1
    %p254 = por %p252, %p253
    %p255 = scmp.ne.s32.totalorder %s244, %s245
    %p256 = scmp.eq.s32.totalorder %s21, 0
    %p257 = por %p255, %p256
    %p258 = scmp.ne.s32.totalorder %s244, %s245
    %p259 = scmp.eq.s32.totalorder %s22, 1
    %p260 = por %p258, %p259
    %p262 = scmp.ne.s32.totalorder %s245, %s261
    %p263 = scmp.eq.s32.totalorder %s22, 0
    %p264 = por %p262, %p263
    %p265 = scmp.le.s32.totalorder 1, %s16
    %p266 = scmp.lt.s32.totalorder %s16, 3
    %p267 = pnand %p265, %p266
    %p268 = pneg %p267
    // Predicated region
    $region9: #{sym_cnn2d_block_forward.1} parent=5 // pred_check
      _
    $region10: #{sym_cnn2d_block_forward.1} parent=5 // pred_check_branch
      %270 = sbr.rel (%p267) target = $region12
    $region11: #{sym_cnn2d_block_forward.1} parent=5 // pred_region
      %s271 = ssub.s32 %s16, 1
      // Predicated region
      $region13: #{sym_cnn2d_block_forward.1} parent=11 // pred_check
        %p272 = pneg %p63
      $region14: #{sym_cnn2d_block_forward.1} parent=11 // pred_check_branch
        %274 = sbr.rel (%p272) target = $region16
      $region15: #{sym_cnn2d_block_forward.1} parent=11 // pred_region
        _
      $region16: #{sym_cnn2d_block_forward.1} parent=11 // pred_fallthru
        _
      // Predicated region
      $region17: #{sym_cnn2d_block_forward.1} parent=11 // pred_check
        %p275 = pneg %p84
      $region18: #{sym_cnn2d_block_forward.1} parent=11 // pred_check_branch
        %277 = sbr.rel (%p275) target = $region20
      $region19: #{sym_cnn2d_block_forward.1} parent=11 // pred_region
        _
      $region20: #{sym_cnn2d_block_forward.1} parent=11 // pred_fallthru
        _
      // Predicated region
      $region21: #{sym_cnn2d_block_forward.1} parent=11 // pred_check
        %p278 = pneg %p105
      $region22: #{sym_cnn2d_block_forward.1} parent=11 // pred_check_branch
        %280 = sbr.rel (%p278) target = $region24
      $region23: #{sym_cnn2d_block_forward.1} parent=11 // pred_region
        _
      $region24: #{sym_cnn2d_block_forward.1} parent=11 // pred_fallthru
        _
      // Predicated region
      $region25: #{sym_cnn2d_block_forward.1} parent=11 // pred_check
        %p281 = pneg %p126
      $region26: #{sym_cnn2d_block_forward.1} parent=11 // pred_check_branch
        %283 = sbr.rel (%p281) target = $region28
      $region27: #{sym_cnn2d_block_forward.1} parent=11 // pred_region
        _
      $region28: #{sym_cnn2d_block_forward.1} parent=11 // pred_fallthru
        _
      // Predicated region
      $region29: #{sym_cnn2d_block_forward.1} parent=11 // pred_check
        %p284 = pneg %p147
      $region30: #{sym_cnn2d_block_forward.1} parent=11 // pred_check_branch
        %286 = sbr.rel (%p284) target = $region32
      $region31: #{sym_cnn2d_block_forward.1} parent=11 // pred_region
        _
      $region32: #{sym_cnn2d_block_forward.1} parent=11 // pred_fallthru
        _
      // Predicated region
      $region33: #{sym_cnn2d_block_forward.1} parent=11 // pred_check
        %p287 = pneg %p168
      $region34: #{sym_cnn2d_block_forward.1} parent=11 // pred_check_branch
        %289 = sbr.rel (%p287) target = $region36
      $region35: #{sym_cnn2d_block_forward.1} parent=11 // pred_region
        _
      $region36: #{sym_cnn2d_block_forward.1} parent=11 // pred_fallthru
        _
      // Predicated region
      $region37: #{sym_cnn2d_block_forward.1} parent=11 // pred_check
        %p290 = pneg %p189
      $region38: #{sym_cnn2d_block_forward.1} parent=11 // pred_check_branch
        %292 = sbr.rel (%p290) target = $region40
      $region39: #{sym_cnn2d_block_forward.1} parent=11 // pred_region
        _
      $region40: #{sym_cnn2d_block_forward.1} parent=11 // pred_fallthru
        _
      // Predicated region
      $region41: #{sym_cnn2d_block_forward.1} parent=11 // pred_check
        %p293 = pneg %p210
      $region42: #{sym_cnn2d_block_forward.1} parent=11 // pred_check_branch
        %295 = sbr.rel (%p293) target = $region44
      $region43: #{sym_cnn2d_block_forward.1} parent=11 // pred_region
        _
      $region44: #{sym_cnn2d_block_forward.1} parent=11 // pred_fallthru
        _
      // Predicated region
      $region45: #{sym_cnn2d_block_forward.1} parent=11 // pred_check
        %p296 = pneg %p231
      $region46: #{sym_cnn2d_block_forward.1} parent=11 // pred_check_branch
        %298 = sbr.rel (%p296) target = $region48
      $region47: #{sym_cnn2d_block_forward.1} parent=11 // pred_region
        _
      $region48: #{sym_cnn2d_block_forward.1} parent=11 // pred_fallthru
        _
    $region12: #{sym_cnn2d_block_forward.1} parent=5 // pred_fallthru
      _
    %p299 = scmp.lt.s32.totalorder %s16, 2
    // Predicated region
    $region49: #{sym_cnn2d_block_forward.1} parent=5 // pred_check
      %p300 = pneg %p299
    $region50: #{sym_cnn2d_block_forward.1} parent=5 // pred_check_branch
      %302 = sbr.rel (%p300) target = $region52
    $region51: #{sym_cnn2d_block_forward.1} parent=5 // pred_region
      // Predicated region
      $region53: #{sym_cnn2d_block_forward.1} parent=51 // pred_check
        %p303 = pneg %p36
      $region54: #{sym_cnn2d_block_forward.1} parent=51 // pred_check_branch
        %305 = sbr.rel (%p303) target = $region56
      $region55: #{sym_cnn2d_block_forward.1} parent=51 // pred_region
        %p306 = scmp.lt.s32.totalorder %s16, 1
        %s307 = scalar_select %p306, %s16, 1
        %s308 = smul.addr %s307, 2
        %s309 = smul.addr %s308, 4
        %s310 = scalar_lea.vmem %s0, %s309
      $region56: #{sym_cnn2d_block_forward.1} parent=51 // pred_fallthru
        _
    $region52: #{sym_cnn2d_block_forward.1} parent=5 // pred_fallthru
      _
    %p311 = scmp.le.s32.totalorder 1, %s16
    %p312 = scmp.lt.s32.totalorder %s16, 3
    %p313 = pnand %p311, %p312
    %p314 = pneg %p313
    // Predicated region
    $region57: #{sym_cnn2d_block_forward.1} parent=5 // pred_check
      _
    $region58: #{sym_cnn2d_block_forward.1} parent=5 // pred_check_branch
      %316 = sbr.rel (%p313) target = $region60
    $region59: #{sym_cnn2d_block_forward.1} parent=5 // pred_region
      %s317 = ssub.s32 %s16, 1
      %p318 = scmp.lt.s32.totalorder %s21, 1
      %s319 = scalar_select %p318, %s21, 1
      %s320 = smul.addr %s319, 2
      %s321 = smul.addr %s320, 4
      %s322 = scalar_lea.vmem %s0, %s321
      %p323 = pneg %p42
      %p324 = pneg %p39
      %p325 = pneg %p63
      %p326 = pneg %p60
      %p327 = pneg %p84
      %p328 = pneg %p81
      %p329 = pneg %p105
      %p330 = pneg %p102
      %p331 = pneg %p126
      %p332 = pneg %p123
      %p333 = pneg %p147
      %p334 = pneg %p144
      %p335 = pneg %p168
      %p336 = pneg %p165
      %p337 = pneg %p189
      %p338 = pneg %p186
      %p339 = pneg %p210
      %p340 = pneg %p207
      %p341 = pneg %p231
      %p342 = pneg %p228
      %p343 = pneg %p257
      %p344 = pneg %p254
      %p345 = scmp.lt.s32.totalorder %s21, 1
      %s346 = scalar_select %p345, %s21, 1
      %s347 = smul.addr %s346, 2
      %s348 = smul.addr %s347, 4
      %s349 = scalar_lea.vmem %s10, %s348
      %p350 = scmp.lt.s32.totalorder %s21, 1
      %s351 = scalar_select %p350, %s21, 1
      %s352 = smul.addr %s351, 2
      %s353 = smul.addr %s352, 4
      %s354 = scalar_lea.vmem %s0, %s353
      %p355 = scmp.lt.s32.totalorder %s21, 1
      %s356 = scalar_select %p355, %s21, 1
      %s357 = smul.addr %s356, 2
      %s358 = smul.addr %s357, 4
      %s359 = scalar_lea.vmem %s10, %s358
      %v360 = vld [vmem:[%s354] sm:$0xff]
      %v362 = vcombine.high %v360, %v360
      %364 = vrot.lane.b32.xlu0 %v360, 17
      %v365 = vpop.permute.xlu0 %364
      %366 = vrot.lane.b32.xlu0 %v362, 17
      %v367 = vpop.permute.xlu0 %366
      %v368 = vlaneseq
      %v369 = vand.u32 %v368, 127
      %vm370 = vcmp.lt.s32.totalorder %v369, 17
      %v371 = vsel %vm370, %v365, %v367
      %v372 = vsel %vm370, %v367, %v365
      %v373 = vld [vmem:[%s1] sm:$0x3]
      %v375 = vlaneseq
      %v376 = vshrl.u32 %v375, 7
      %v377 = vsub.s32 0, %v376
      %v378 = vrot.slane %v373, %v377
      %v379 = vlaneseq
      %v380 = vshrl.u32 %v379, 7
      %v381 = vsub.s32 1, %v380
      %v382 = vrot.slane %v373, %v381
      %v385 = vmul.f32 %v372, %v378
      %v386 = vmul.f32 %v371, %v382
      %v387 = vld [vmem:[%s2] sm:$0xf]
      %389 = vset.pattern.permute.xlu0 0
      %390 = vperm.xlu0 %389, %v387
      %v391 = vpop.permute.xlu0 %390
      %v393 = vlaneseq
      %v394 = vshrl.u32 %v393, 7
      %v395 = vsub.s32 0, %v394
      %v396 = vrot.slane %v385, %v395
      %v397 = vlaneseq
      %v398 = vshrl.u32 %v397, 7
      %v399 = vsub.s32 0, %v398
      %v400 = vrot.slane %v386, %v399
      %v401 = vmul.f32 %v391, %v396
      %v402 = vmul.f32 %v391, %v400
      %s403 = scalar_lea.vmem %s2, 4
      %v404 = vld [vmem:[%s403] sm:$0xf]
      %406 = vset.pattern.permute.xlu0 0
      %407 = vperm.xlu0 %406, %v404
      %v408 = vpop.permute.xlu0 %407
      %v410 = vlaneseq
      %v411 = vshrl.u32 %v410, 7
      %v412 = vsub.s32 1, %v411
      %v413 = vrot.slane %v385, %v412
      %v414 = vlaneseq
      %v415 = vshrl.u32 %v414, 7
      %v416 = vsub.s32 1, %v415
      %v417 = vrot.slane %v386, %v416
      %v418 = vmul.f32 %v408, %v413
      %v419 = vmul.f32 %v408, %v417
      %v420 = vadd.f32 %v401, %v418
      %v421 = vadd.f32 %v402, %v419
      %s422 = scalar_lea.vmem %s2, 8
      %v423 = vld [vmem:[%s422] sm:$0xf]
      %425 = vset.pattern.permute.xlu0 0
      %426 = vperm.xlu0 %425, %v423
      %v427 = vpop.permute.xlu0 %426
      %v429 = vlaneseq
      %v430 = vshrl.u32 %v429, 7
      %v431 = vsub.s32 2, %v430
      %v432 = vrot.slane %v385, %v431
      %v433 = vlaneseq
      %v434 = vshrl.u32 %v433, 7
      %v435 = vsub.s32 2, %v434
      %v436 = vrot.slane %v386, %v435
      %v437 = vmul.f32 %v427, %v432
      %v438 = vmul.f32 %v427, %v436
      %v439 = vadd.f32 %v420, %v437
      %v440 = vadd.f32 %v421, %v438
      %s441 = scalar_lea.vmem %s2, 12
      %v442 = vld [vmem:[%s441] sm:$0xf]
      %444 = vset.pattern.permute.xlu0 0
      %445 = vperm.xlu0 %444, %v442
      %v446 = vpop.permute.xlu0 %445
      %v448 = vlaneseq
      %v449 = vshrl.u32 %v448, 7
      %v450 = vsub.s32 3, %v449
      %v451 = vrot.slane %v385, %v450
      %v452 = vlaneseq
      %v453 = vshrl.u32 %v452, 7
      %v454 = vsub.s32 3, %v453
      %v455 = vrot.slane %v386, %v454
      %v456 = vmul.f32 %v446, %v451
      %v457 = vmul.f32 %v446, %v455
      %v458 = vadd.f32 %v439, %v456
      %v459 = vadd.f32 %v440, %v457
      %460 = vrot.lane.b32.xlu0 %v360, 16
      %v461 = vpop.permute.xlu0 %460
      %462 = vrot.lane.b32.xlu0 %v362, 16
      %v463 = vpop.permute.xlu0 %462
      %vm464 = vcmp.lt.s32.totalorder %v369, 16
      %v465 = vsel %vm464, %v461, %v463
      %v466 = vsel %vm464, %v463, %v461
      %s467 = scalar_lea.vmem %s1, 2
      %v468 = vld [vmem:[%s467] sm:$0x3]
      %v470 = vlaneseq
      %v471 = vshrl.u32 %v470, 7
      %v472 = vsub.s32 0, %v471
      %v473 = vrot.slane %v468, %v472
      %v474 = vlaneseq
      %v475 = vshrl.u32 %v474, 7
      %v476 = vsub.s32 1, %v475
      %v477 = vrot.slane %v468, %v476
      %v480 = vmul.f32 %v466, %v473
      %v481 = vmul.f32 %v465, %v477
      %s482 = scalar_lea.vmem %s2, 16
      %v483 = vld [vmem:[%s482] sm:$0xf]
      %485 = vset.pattern.permute.xlu0 0
      %486 = vperm.xlu0 %485, %v483
      %v487 = vpop.permute.xlu0 %486
      %v489 = vlaneseq
      %v490 = vshrl.u32 %v489, 7
      %v491 = vsub.s32 0, %v490
      %v492 = vrot.slane %v480, %v491
      %v493 = vlaneseq
      %v494 = vshrl.u32 %v493, 7
      %v495 = vsub.s32 0, %v494
      %v496 = vrot.slane %v481, %v495
      %v497 = vmul.f32 %v487, %v492
      %v498 = vmul.f32 %v487, %v496
      %v499 = vadd.f32 %v458, %v497
      %v500 = vadd.f32 %v459, %v498
      %s501 = scalar_lea.vmem %s2, 20
      %v502 = vld [vmem:[%s501] sm:$0xf]
      %504 = vset.pattern.permute.xlu0 0
      %505 = vperm.xlu0 %504, %v502
      %v506 = vpop.permute.xlu0 %505
      %v508 = vlaneseq
      %v509 = vshrl.u32 %v508, 7
      %v510 = vsub.s32 1, %v509
      %v511 = vrot.slane %v480, %v510
      %v512 = vlaneseq
      %v513 = vshrl.u32 %v512, 7
      %v514 = vsub.s32 1, %v513
      %v515 = vrot.slane %v481, %v514
      %v516 = vmul.f32 %v506, %v511
      %v517 = vmul.f32 %v506, %v515
      %v518 = vadd.f32 %v499, %v516
      %v519 = vadd.f32 %v500, %v517
      %s520 = scalar_lea.vmem %s2, 24
      %v521 = vld [vmem:[%s520] sm:$0xf]
      %523 = vset.pattern.permute.xlu0 0
      %524 = vperm.xlu0 %523, %v521
      %v525 = vpop.permute.xlu0 %524
      %v527 = vlaneseq
      %v528 = vshrl.u32 %v527, 7
      %v529 = vsub.s32 2, %v528
      %v530 = vrot.slane %v480, %v529
      %v531 = vlaneseq
      %v532 = vshrl.u32 %v531, 7
      %v533 = vsub.s32 2, %v532
      %v534 = vrot.slane %v481, %v533
      %v535 = vmul.f32 %v525, %v530
      %v536 = vmul.f32 %v525, %v534
      %v537 = vadd.f32 %v518, %v535
      %v538 = vadd.f32 %v519, %v536
      %s539 = scalar_lea.vmem %s2, 28
      %v540 = vld [vmem:[%s539] sm:$0xf]
      %542 = vset.pattern.permute.xlu0 0
      %543 = vperm.xlu0 %542, %v540
      %v544 = vpop.permute.xlu0 %543
      %v546 = vlaneseq
      %v547 = vshrl.u32 %v546, 7
      %v548 = vsub.s32 3, %v547
      %v549 = vrot.slane %v480, %v548
      %v550 = vlaneseq
      %v551 = vshrl.u32 %v550, 7
      %v552 = vsub.s32 3, %v551
      %v553 = vrot.slane %v481, %v552
      %v554 = vmul.f32 %v544, %v549
      %v555 = vmul.f32 %v544, %v553
      %v556 = vadd.f32 %v537, %v554
      %v557 = vadd.f32 %v538, %v555
      %558 = vrot.lane.b32.xlu0 %v360, 15
      %v559 = vpop.permute.xlu0 %558
      %560 = vrot.lane.b32.xlu0 %v362, 15
      %v561 = vpop.permute.xlu0 %560
      %vm562 = vcmp.lt.s32.totalorder %v369, 15
      %v563 = vsel %vm562, %v559, %v561
      %v564 = vsel %vm562, %v561, %v559
      %s565 = scalar_lea.vmem %s1, 4
      %v566 = vld [vmem:[%s565] sm:$0x3]
      %v568 = vlaneseq
      %v569 = vshrl.u32 %v568, 7
      %v570 = vsub.s32 0, %v569
      %v571 = vrot.slane %v566, %v570
      %v572 = vlaneseq
      %v573 = vshrl.u32 %v572, 7
      %v574 = vsub.s32 1, %v573
      %v575 = vrot.slane %v566, %v574
      %v578 = vmul.f32 %v564, %v571
      %v579 = vmul.f32 %v563, %v575
      %s580 = scalar_lea.vmem %s2, 32
      %v581 = vld [vmem:[%s580] sm:$0xf]
      %583 = vset.pattern.permute.xlu0 0
      %584 = vperm.xlu0 %583, %v581
      %v585 = vpop.permute.xlu0 %584
      %v587 = vlaneseq
      %v588 = vshrl.u32 %v587, 7
      %v589 = vsub.s32 0, %v588
      %v590 = vrot.slane %v578, %v589
      %v591 = vlaneseq
      %v592 = vshrl.u32 %v591, 7
      %v593 = vsub.s32 0, %v592
      %v594 = vrot.slane %v579, %v593
      %v595 = vmul.f32 %v585, %v590
      %v596 = vmul.f32 %v585, %v594
      %v597 = vadd.f32 %v556, %v595
      %v598 = vadd.f32 %v557, %v596
      %s599 = scalar_lea.vmem %s2, 36
      %v600 = vld [vmem:[%s599] sm:$0xf]
      %602 = vset.pattern.permute.xlu0 0
      %603 = vperm.xlu0 %602, %v600
      %v604 = vpop.permute.xlu0 %603
      %v606 = vlaneseq
      %v607 = vshrl.u32 %v606, 7
      %v608 = vsub.s32 1, %v607
      %v609 = vrot.slane %v578, %v608
      %v610 = vlaneseq
      %v611 = vshrl.u32 %v610, 7
      %v612 = vsub.s32 1, %v611
      %v613 = vrot.slane %v579, %v612
      %v614 = vmul.f32 %v604, %v609
      %v615 = vmul.f32 %v604, %v613
      %v616 = vadd.f32 %v597, %v614
      %v617 = vadd.f32 %v598, %v615
      %s618 = scalar_lea.vmem %s2, 40
      %v619 = vld [vmem:[%s618] sm:$0xf]
      %621 = vset.pattern.permute.xlu0 0
      %622 = vperm.xlu0 %621, %v619
      %v623 = vpop.permute.xlu0 %622
      %v625 = vlaneseq
      %v626 = vshrl.u32 %v625, 7
      %v627 = vsub.s32 2, %v626
      %v628 = vrot.slane %v578, %v627
      %v629 = vlaneseq
      %v630 = vshrl.u32 %v629, 7
      %v631 = vsub.s32 2, %v630
      %v632 = vrot.slane %v579, %v631
      %v633 = vmul.f32 %v623, %v628
      %v634 = vmul.f32 %v623, %v632
      %v635 = vadd.f32 %v616, %v633
      %v636 = vadd.f32 %v617, %v634
      %s637 = scalar_lea.vmem %s2, 44
      %v638 = vld [vmem:[%s637] sm:$0xf]
      %640 = vset.pattern.permute.xlu0 0
      %641 = vperm.xlu0 %640, %v638
      %v642 = vpop.permute.xlu0 %641
      %v644 = vlaneseq
      %v645 = vshrl.u32 %v644, 7
      %v646 = vsub.s32 3, %v645
      %v647 = vrot.slane %v578, %v646
      %v648 = vlaneseq
      %v649 = vshrl.u32 %v648, 7
      %v650 = vsub.s32 3, %v649
      %v651 = vrot.slane %v579, %v650
      %v652 = vmul.f32 %v642, %v647
      %v653 = vmul.f32 %v642, %v651
      %v654 = vadd.f32 %v635, %v652
      %v655 = vadd.f32 %v636, %v653
      %656 = vrot.lane.b32.xlu0 %v360, 1
      %v657 = vpop.permute.xlu0 %656
      %658 = vrot.lane.b32.xlu0 %v362, 1
      %v659 = vpop.permute.xlu0 %658
      %vm660 = vcmp.lt.s32.totalorder %v369, 1
      %v661 = vsel %vm660, %v657, %v659
      %v662 = vsel %vm660, %v659, %v657
      %s663 = scalar_lea.vmem %s1, 6
      %v664 = vld [vmem:[%s663] sm:$0x3]
      %v666 = vlaneseq
      %v667 = vshrl.u32 %v666, 7
      %v668 = vsub.s32 0, %v667
      %v669 = vrot.slane %v664, %v668
      %v670 = vlaneseq
      %v671 = vshrl.u32 %v670, 7
      %v672 = vsub.s32 1, %v671
      %v673 = vrot.slane %v664, %v672
      %v676 = vmul.f32 %v662, %v669
      %v677 = vmul.f32 %v661, %v673
      %s678 = scalar_lea.vmem %s2, 48
      %v679 = vld [vmem:[%s678] sm:$0xf]
      %681 = vset.pattern.permute.xlu0 0
      %682 = vperm.xlu0 %681, %v679
      %v683 = vpop.permute.xlu0 %682
      %v685 = vlaneseq
      %v686 = vshrl.u32 %v685, 7
      %v687 = vsub.s32 0, %v686
      %v688 = vrot.slane %v676, %v687
      %v689 = vlaneseq
      %v690 = vshrl.u32 %v689, 7
      %v691 = vsub.s32 0, %v690
      %v692 = vrot.slane %v677, %v691
      %v693 = vmul.f32 %v683, %v688
      %v694 = vmul.f32 %v683, %v692
      %v695 = vadd.f32 %v654, %v693
      %v696 = vadd.f32 %v655, %v694
      %s697 = scalar_lea.vmem %s2, 52
      %v698 = vld [vmem:[%s697] sm:$0xf]
      %700 = vset.pattern.permute.xlu0 0
      %701 = vperm.xlu0 %700, %v698
      %v702 = vpop.permute.xlu0 %701
      %v704 = vlaneseq
      %v705 = vshrl.u32 %v704, 7
      %v706 = vsub.s32 1, %v705
      %v707 = vrot.slane %v676, %v706
      %v708 = vlaneseq
      %v709 = vshrl.u32 %v708, 7
      %v710 = vsub.s32 1, %v709
      %v711 = vrot.slane %v677, %v710
      %v712 = vmul.f32 %v702, %v707
      %v713 = vmul.f32 %v702, %v711
      %v714 = vadd.f32 %v695, %v712
      %v715 = vadd.f32 %v696, %v713
      %s716 = scalar_lea.vmem %s2, 56
      %v717 = vld [vmem:[%s716] sm:$0xf]
      %719 = vset.pattern.permute.xlu0 0
      %720 = vperm.xlu0 %719, %v717
      %v721 = vpop.permute.xlu0 %720
      %v723 = vlaneseq
      %v724 = vshrl.u32 %v723, 7
      %v725 = vsub.s32 2, %v724
      %v726 = vrot.slane %v676, %v725
      %v727 = vlaneseq
      %v728 = vshrl.u32 %v727, 7
      %v729 = vsub.s32 2, %v728
      %v730 = vrot.slane %v677, %v729
      %v731 = vmul.f32 %v721, %v726
      %v732 = vmul.f32 %v721, %v730
      %v733 = vadd.f32 %v714, %v731
      %v734 = vadd.f32 %v715, %v732
      %s735 = scalar_lea.vmem %s2, 60
      %v736 = vld [vmem:[%s735] sm:$0xf]
      %738 = vset.pattern.permute.xlu0 0
      %739 = vperm.xlu0 %738, %v736
      %v740 = vpop.permute.xlu0 %739
      %v742 = vlaneseq
      %v743 = vshrl.u32 %v742, 7
      %v744 = vsub.s32 3, %v743
      %v745 = vrot.slane %v676, %v744
      %v746 = vlaneseq
      %v747 = vshrl.u32 %v746, 7
      %v748 = vsub.s32 3, %v747
      %v749 = vrot.slane %v677, %v748
      %v750 = vmul.f32 %v740, %v745
      %v751 = vmul.f32 %v740, %v749
      %v752 = vadd.f32 %v733, %v750
      %v753 = vadd.f32 %v734, %v751
      %s754 = scalar_lea.vmem %s1, 8
      %v755 = vld [vmem:[%s754] sm:$0x3]
      %v757 = vlaneseq
      %v758 = vshrl.u32 %v757, 7
      %v759 = vsub.s32 0, %v758
      %v760 = vrot.slane %v755, %v759
      %v761 = vlaneseq
      %v762 = vshrl.u32 %v761, 7
      %v763 = vsub.s32 1, %v762
      %v764 = vrot.slane %v755, %v763
      %v767 = vcombine.low %v760, %v764
      %v769 = vmul.f32 %v360, %v767
      %s770 = scalar_lea.vmem %s2, 64
      %v771 = vld [vmem:[%s770] sm:$0xf]
      %773 = vset.pattern.permute.xlu0 0
      %774 = vperm.xlu0 %773, %v771
      %v775 = vpop.permute.xlu0 %774
      %v778 = vlaneseq
      %v779 = vshrl.u32 %v778, 7
      %v780 = vsub.s32 0, %v779
      %v781 = vrot.slane %v769, %v780
      %v782 = vlaneseq
      %v783 = vshrl.u32 %v782, 7
      %v784 = vsub.s32 4, %v783
      %v785 = vrot.slane %v769, %v784
      %v788 = vlaneseq
      %v789 = vshrl.u32 %v788, 7
      %v790 = vsub.s32 0, %v789
      %v791 = vrot.slane %v781, %v790
      %v792 = vlaneseq
      %v793 = vshrl.u32 %v792, 7
      %v794 = vsub.s32 0, %v793
      %v795 = vrot.slane %v785, %v794
      %v796 = vmul.f32 %v775, %v791
      %v797 = vmul.f32 %v775, %v795
      %v798 = vadd.f32 %v752, %v796
      %v799 = vadd.f32 %v753, %v797
      %s800 = scalar_lea.vmem %s2, 68
      %v801 = vld [vmem:[%s800] sm:$0xf]
      %803 = vset.pattern.permute.xlu0 0
      %804 = vperm.xlu0 %803, %v801
      %v805 = vpop.permute.xlu0 %804
      %v807 = vlaneseq
      %v808 = vshrl.u32 %v807, 7
      %v809 = vsub.s32 1, %v808
      %v810 = vrot.slane %v769, %v809
      %v811 = vlaneseq
      %v812 = vshrl.u32 %v811, 7
      %v813 = vsub.s32 5, %v812
      %v814 = vrot.slane %v769, %v813
      %v817 = vlaneseq
      %v818 = vshrl.u32 %v817, 7
      %v819 = vsub.s32 1, %v818
      %v820 = vrot.slane %v810, %v819
      %v821 = vlaneseq
      %v822 = vshrl.u32 %v821, 7
      %v823 = vsub.s32 1, %v822
      %v824 = vrot.slane %v814, %v823
      %v825 = vmul.f32 %v805, %v820
      %v826 = vmul.f32 %v805, %v824
      %v827 = vadd.f32 %v798, %v825
      %v828 = vadd.f32 %v799, %v826
      %s829 = scalar_lea.vmem %s2, 72
      %v830 = vld [vmem:[%s829] sm:$0xf]
      %832 = vset.pattern.permute.xlu0 0
      %833 = vperm.xlu0 %832, %v830
      %v834 = vpop.permute.xlu0 %833
      %v836 = vlaneseq
      %v837 = vshrl.u32 %v836, 7
      %v838 = vsub.s32 2, %v837
      %v839 = vrot.slane %v769, %v838
      %v840 = vlaneseq
      %v841 = vshrl.u32 %v840, 7
      %v842 = vsub.s32 6, %v841
      %v843 = vrot.slane %v769, %v842
      %v846 = vlaneseq
      %v847 = vshrl.u32 %v846, 7
      %v848 = vsub.s32 2, %v847
      %v849 = vrot.slane %v839, %v848
      %v850 = vlaneseq
      %v851 = vshrl.u32 %v850, 7
      %v852 = vsub.s32 2, %v851
      %v853 = vrot.slane %v843, %v852
      %v854 = vmul.f32 %v834, %v849
      %v855 = vmul.f32 %v834, %v853
      %v856 = vadd.f32 %v827, %v854
      %v857 = vadd.f32 %v828, %v855
      %s858 = scalar_lea.vmem %s2, 76
      %v859 = vld [vmem:[%s858] sm:$0xf]
      %861 = vset.pattern.permute.xlu0 0
      %862 = vperm.xlu0 %861, %v859
      %v863 = vpop.permute.xlu0 %862
      %v865 = vlaneseq
      %v866 = vshrl.u32 %v865, 7
      %v867 = vsub.s32 3, %v866
      %v868 = vrot.slane %v769, %v867
      %v869 = vlaneseq
      %v870 = vshrl.u32 %v869, 7
      %v871 = vsub.s32 7, %v870
      %v872 = vrot.slane %v769, %v871
      %v875 = vlaneseq
      %v876 = vshrl.u32 %v875, 7
      %v877 = vsub.s32 3, %v876
      %v878 = vrot.slane %v868, %v877
      %v879 = vlaneseq
      %v880 = vshrl.u32 %v879, 7
      %v881 = vsub.s32 3, %v880
      %v882 = vrot.slane %v872, %v881
      %v883 = vmul.f32 %v863, %v878
      %v884 = vmul.f32 %v863, %v882
      %v885 = vadd.f32 %v856, %v883
      %v886 = vadd.f32 %v857, %v884
      %887 = vrot.lane.b32.xlu0 %v360, 127
      %v888 = vpop.permute.xlu0 %887
      %889 = vrot.lane.b32.xlu0 %v362, 127
      %v890 = vpop.permute.xlu0 %889
      %vm891 = vcmp.lt.s32.totalorder %v369, 127
      %v892 = vsel %vm891, %v888, %v890
      %v893 = vsel %vm891, %v890, %v888
      %s894 = scalar_lea.vmem %s1, 10
      %v895 = vld [vmem:[%s894] sm:$0x3]
      %v897 = vlaneseq
      %v898 = vshrl.u32 %v897, 7
      %v899 = vsub.s32 0, %v898
      %v900 = vrot.slane %v895, %v899
      %v901 = vlaneseq
      %v902 = vshrl.u32 %v901, 7
      %v903 = vsub.s32 1, %v902
      %v904 = vrot.slane %v895, %v903
      %v907 = vmul.f32 %v892, %v900
      %v908 = vmul.f32 %v893, %v904
      %s909 = scalar_lea.vmem %s2, 80
      %v910 = vld [vmem:[%s909] sm:$0xf]
      %912 = vset.pattern.permute.xlu0 0
      %913 = vperm.xlu0 %912, %v910
      %v914 = vpop.permute.xlu0 %913
      %v916 = vlaneseq
      %v917 = vshrl.u32 %v916, 7
      %v918 = vsub.s32 0, %v917
      %v919 = vrot.slane %v907, %v918
      %v920 = vlaneseq
      %v921 = vshrl.u32 %v920, 7
      %v922 = vsub.s32 0, %v921
      %v923 = vrot.slane %v908, %v922
      %v924 = vmul.f32 %v914, %v919
      %v925 = vmul.f32 %v914, %v923
      %v926 = vadd.f32 %v885, %v924
      %v927 = vadd.f32 %v886, %v925
      %s928 = scalar_lea.vmem %s2, 84
      %v929 = vld [vmem:[%s928] sm:$0xf]
      %931 = vset.pattern.permute.xlu0 0
      %932 = vperm.xlu0 %931, %v929
      %v933 = vpop.permute.xlu0 %932
      %v935 = vlaneseq
      %v936 = vshrl.u32 %v935, 7
      %v937 = vsub.s32 1, %v936
      %v938 = vrot.slane %v907, %v937
      %v939 = vlaneseq
      %v940 = vshrl.u32 %v939, 7
      %v941 = vsub.s32 1, %v940
      %v942 = vrot.slane %v908, %v941
      %v943 = vmul.f32 %v933, %v938
      %v944 = vmul.f32 %v933, %v942
      %v945 = vadd.f32 %v926, %v943
      %v946 = vadd.f32 %v927, %v944
      %s947 = scalar_lea.vmem %s2, 88
      %v948 = vld [vmem:[%s947] sm:$0xf]
      %950 = vset.pattern.permute.xlu0 0
      %951 = vperm.xlu0 %950, %v948
      %v952 = vpop.permute.xlu0 %951
      %v954 = vlaneseq
      %v955 = vshrl.u32 %v954, 7
      %v956 = vsub.s32 2, %v955
      %v957 = vrot.slane %v907, %v956
      %v958 = vlaneseq
      %v959 = vshrl.u32 %v958, 7
      %v960 = vsub.s32 2, %v959
      %v961 = vrot.slane %v908, %v960
      %v962 = vmul.f32 %v952, %v957
      %v963 = vmul.f32 %v952, %v961
      %v964 = vadd.f32 %v945, %v962
      %v965 = vadd.f32 %v946, %v963
      %s966 = scalar_lea.vmem %s2, 92
      %v967 = vld [vmem:[%s966] sm:$0xf]
      %969 = vset.pattern.permute.xlu0 0
      %970 = vperm.xlu0 %969, %v967
      %v971 = vpop.permute.xlu0 %970
      %v973 = vlaneseq
      %v974 = vshrl.u32 %v973, 7
      %v975 = vsub.s32 3, %v974
      %v976 = vrot.slane %v907, %v975
      %v977 = vlaneseq
      %v978 = vshrl.u32 %v977, 7
      %v979 = vsub.s32 3, %v978
      %v980 = vrot.slane %v908, %v979
      %v981 = vmul.f32 %v971, %v976
      %v982 = vmul.f32 %v971, %v980
      %v983 = vadd.f32 %v964, %v981
      %v984 = vadd.f32 %v965, %v982
      %985 = vrot.lane.b32.xlu0 %v360, 113
      %v986 = vpop.permute.xlu0 %985
      %987 = vrot.lane.b32.xlu0 %v362, 113
      %v988 = vpop.permute.xlu0 %987
      %vm989 = vcmp.lt.s32.totalorder %v369, 113
      %v990 = vsel %vm989, %v986, %v988
      %v991 = vsel %vm989, %v988, %v986
      %s992 = scalar_lea.vmem %s1, 12
      %v993 = vld [vmem:[%s992] sm:$0x3]
      %v995 = vlaneseq
      %v996 = vshrl.u32 %v995, 7
      %v997 = vsub.s32 0, %v996
      %v998 = vrot.slane %v993, %v997
      %v999 = vlaneseq
      %v1000 = vshrl.u32 %v999, 7
      %v1001 = vsub.s32 1, %v1000
      %v1002 = vrot.slane %v993, %v1001
      %v1005 = vmul.f32 %v990, %v998
      %v1006 = vmul.f32 %v991, %v1002
      %s1007 = scalar_lea.vmem %s2, 96
      %v1008 = vld [vmem:[%s1007] sm:$0xf]
      %1010 = vset.pattern.permute.xlu0 0
      %1011 = vperm.xlu0 %1010, %v1008
      %v1012 = vpop.permute.xlu0 %1011
      %v1014 = vlaneseq
      %v1015 = vshrl.u32 %v1014, 7
      %v1016 = vsub.s32 0, %v1015
      %v1017 = vrot.slane %v1005, %v1016
      %v1018 = vlaneseq
      %v1019 = vshrl.u32 %v1018, 7
      %v1020 = vsub.s32 0, %v1019
      %v1021 = vrot.slane %v1006, %v1020
      %v1022 = vmul.f32 %v1012, %v1017
      %v1023 = vmul.f32 %v1012, %v1021
      %v1024 = vadd.f32 %v983, %v1022
      %v1025 = vadd.f32 %v984, %v1023
      %s1026 = scalar_lea.vmem %s2, 100
      %v1027 = vld [vmem:[%s1026] sm:$0xf]
      %1029 = vset.pattern.permute.xlu0 0
      %1030 = vperm.xlu0 %1029, %v1027
      %v1031 = vpop.permute.xlu0 %1030
      %v1033 = vlaneseq
      %v1034 = vshrl.u32 %v1033, 7
      %v1035 = vsub.s32 1, %v1034
      %v1036 = vrot.slane %v1005, %v1035
      %v1037 = vlaneseq
      %v1038 = vshrl.u32 %v1037, 7
      %v1039 = vsub.s32 1, %v1038
      %v1040 = vrot.slane %v1006, %v1039
      %v1041 = vmul.f32 %v1031, %v1036
      %v1042 = vmul.f32 %v1031, %v1040
      %v1043 = vadd.f32 %v1024, %v1041
      %v1044 = vadd.f32 %v1025, %v1042
      %s1045 = scalar_lea.vmem %s2, 104
      %v1046 = vld [vmem:[%s1045] sm:$0xf]
      %1048 = vset.pattern.permute.xlu0 0
      %1049 = vperm.xlu0 %1048, %v1046
      %v1050 = vpop.permute.xlu0 %1049
      %v1052 = vlaneseq
      %v1053 = vshrl.u32 %v1052, 7
      %v1054 = vsub.s32 2, %v1053
      %v1055 = vrot.slane %v1005, %v1054
      %v1056 = vlaneseq
      %v1057 = vshrl.u32 %v1056, 7
      %v1058 = vsub.s32 2, %v1057
      %v1059 = vrot.slane %v1006, %v1058
      %v1060 = vmul.f32 %v1050, %v1055
      %v1061 = vmul.f32 %v1050, %v1059
      %v1062 = vadd.f32 %v1043, %v1060
      %v1063 = vadd.f32 %v1044, %v1061
      %s1064 = scalar_lea.vmem %s2, 108
      %v1065 = vld [vmem:[%s1064] sm:$0xf]
      %1067 = vset.pattern.permute.xlu0 0
      %1068 = vperm.xlu0 %1067, %v1065
      %v1069 = vpop.permute.xlu0 %1068
      %v1071 = vlaneseq
      %v1072 = vshrl.u32 %v1071, 7
      %v1073 = vsub.s32 3, %v1072
      %v1074 = vrot.slane %v1005, %v1073
      %v1075 = vlaneseq
      %v1076 = vshrl.u32 %v1075, 7
      %v1077 = vsub.s32 3, %v1076
      %v1078 = vrot.slane %v1006, %v1077
      %v1079 = vmul.f32 %v1069, %v1074
      %v1080 = vmul.f32 %v1069, %v1078
      %v1081 = vadd.f32 %v1062, %v1079
      %v1082 = vadd.f32 %v1063, %v1080
      %1083 = vrot.lane.b32.xlu0 %v360, 112
      %v1084 = vpop.permute.xlu0 %1083
      %1085 = vrot.lane.b32.xlu0 %v362, 112
      %v1086 = vpop.permute.xlu0 %1085
      %vm1087 = vcmp.lt.s32.totalorder %v369, 112
      %v1088 = vsel %vm1087, %v1084, %v1086
      %v1089 = vsel %vm1087, %v1086, %v1084
      %s1090 = scalar_lea.vmem %s1, 14
      %v1091 = vld [vmem:[%s1090] sm:$0x3]
      %v1093 = vlaneseq
      %v1094 = vshrl.u32 %v1093, 7
      %v1095 = vsub.s32 0, %v1094
      %v1096 = vrot.slane %v1091, %v1095
      %v1097 = vlaneseq
      %v1098 = vshrl.u32 %v1097, 7
      %v1099 = vsub.s32 1, %v1098
      %v1100 = vrot.slane %v1091, %v1099
      %v1103 = vmul.f32 %v1088, %v1096
      %v1104 = vmul.f32 %v1089, %v1100
      %s1105 = scalar_lea.vmem %s2, 112
      %v1106 = vld [vmem:[%s1105] sm:$0xf]
      %1108 = vset.pattern.permute.xlu0 0
      %1109 = vperm.xlu0 %1108, %v1106
      %v1110 = vpop.permute.xlu0 %1109
      %v1112 = vlaneseq
      %v1113 = vshrl.u32 %v1112, 7
      %v1114 = vsub.s32 0, %v1113
      %v1115 = vrot.slane %v1103, %v1114
      %v1116 = vlaneseq
      %v1117 = vshrl.u32 %v1116, 7
      %v1118 = vsub.s32 0, %v1117
      %v1119 = vrot.slane %v1104, %v1118
      %v1120 = vmul.f32 %v1110, %v1115
      %v1121 = vmul.f32 %v1110, %v1119
      %v1122 = vadd.f32 %v1081, %v1120
      %v1123 = vadd.f32 %v1082, %v1121
      %s1124 = scalar_lea.vmem %s2, 116
      %v1125 = vld [vmem:[%s1124] sm:$0xf]
      %1127 = vset.pattern.permute.xlu0 0
      %1128 = vperm.xlu0 %1127, %v1125
      %v1129 = vpop.permute.xlu0 %1128
      %v1131 = vlaneseq
      %v1132 = vshrl.u32 %v1131, 7
      %v1133 = vsub.s32 1, %v1132
      %v1134 = vrot.slane %v1103, %v1133
      %v1135 = vlaneseq
      %v1136 = vshrl.u32 %v1135, 7
      %v1137 = vsub.s32 1, %v1136
      %v1138 = vrot.slane %v1104, %v1137
      %v1139 = vmul.f32 %v1129, %v1134
      %v1140 = vmul.f32 %v1129, %v1138
      %v1141 = vadd.f32 %v1122, %v1139
      %v1142 = vadd.f32 %v1123, %v1140
      %s1143 = scalar_lea.vmem %s2, 120
      %v1144 = vld [vmem:[%s1143] sm:$0xf]
      %1146 = vset.pattern.permute.xlu0 0
      %1147 = vperm.xlu0 %1146, %v1144
      %v1148 = vpop.permute.xlu0 %1147
      %v1150 = vlaneseq
      %v1151 = vshrl.u32 %v1150, 7
      %v1152 = vsub.s32 2, %v1151
      %v1153 = vrot.slane %v1103, %v1152
      %v1154 = vlaneseq
      %v1155 = vshrl.u32 %v1154, 7
      %v1156 = vsub.s32 2, %v1155
      %v1157 = vrot.slane %v1104, %v1156
      %v1158 = vmul.f32 %v1148, %v1153
      %v1159 = vmul.f32 %v1148, %v1157
      %v1160 = vadd.f32 %v1141, %v1158
      %v1161 = vadd.f32 %v1142, %v1159
      %s1162 = scalar_lea.vmem %s2, 124
      %v1163 = vld [vmem:[%s1162] sm:$0xf]
      %1165 = vset.pattern.permute.xlu0 0
      %1166 = vperm.xlu0 %1165, %v1163
      %v1167 = vpop.permute.xlu0 %1166
      %v1169 = vlaneseq
      %v1170 = vshrl.u32 %v1169, 7
      %v1171 = vsub.s32 3, %v1170
      %v1172 = vrot.slane %v1103, %v1171
      %v1173 = vlaneseq
      %v1174 = vshrl.u32 %v1173, 7
      %v1175 = vsub.s32 3, %v1174
      %v1176 = vrot.slane %v1104, %v1175
      %v1177 = vmul.f32 %v1167, %v1172
      %v1178 = vmul.f32 %v1167, %v1176
      %v1179 = vadd.f32 %v1160, %v1177
      %v1180 = vadd.f32 %v1161, %v1178
      %1181 = vrot.lane.b32.xlu0 %v360, 111
      %v1182 = vpop.permute.xlu0 %1181
      %1183 = vrot.lane.b32.xlu0 %v362, 111
      %v1184 = vpop.permute.xlu0 %1183
      %vm1185 = vcmp.lt.s32.totalorder %v369, 111
      %v1186 = vsel %vm1185, %v1182, %v1184
      %v1187 = vsel %vm1185, %v1184, %v1182
      %s1188 = scalar_lea.vmem %s1, 16
      %v1189 = vld [vmem:[%s1188] sm:$0x3]
      %v1191 = vlaneseq
      %v1192 = vshrl.u32 %v1191, 7
      %v1193 = vsub.s32 0, %v1192
      %v1194 = vrot.slane %v1189, %v1193
      %v1195 = vlaneseq
      %v1196 = vshrl.u32 %v1195, 7
      %v1197 = vsub.s32 1, %v1196
      %v1198 = vrot.slane %v1189, %v1197
      %v1201 = vmul.f32 %v1186, %v1194
      %v1202 = vmul.f32 %v1187, %v1198
      %s1203 = scalar_lea.vmem %s2, 128
      %v1204 = vld [vmem:[%s1203] sm:$0xf]
      %1206 = vset.pattern.permute.xlu0 0
      %1207 = vperm.xlu0 %1206, %v1204
      %v1208 = vpop.permute.xlu0 %1207
      %v1210 = vlaneseq
      %v1211 = vshrl.u32 %v1210, 7
      %v1212 = vsub.s32 0, %v1211
      %v1213 = vrot.slane %v1201, %v1212
      %v1214 = vlaneseq
      %v1215 = vshrl.u32 %v1214, 7
      %v1216 = vsub.s32 0, %v1215
      %v1217 = vrot.slane %v1202, %v1216
      %v1218 = vmul.f32 %v1208, %v1213
      %v1219 = vmul.f32 %v1208, %v1217
      %v1220 = vadd.f32 %v1179, %v1218
      %v1221 = vadd.f32 %v1180, %v1219
      %s1222 = scalar_lea.vmem %s2, 132
      %v1223 = vld [vmem:[%s1222] sm:$0xf]
      %1225 = vset.pattern.permute.xlu0 0
      %1226 = vperm.xlu0 %1225, %v1223
      %v1227 = vpop.permute.xlu0 %1226
      %v1229 = vlaneseq
      %v1230 = vshrl.u32 %v1229, 7
      %v1231 = vsub.s32 1, %v1230
      %v1232 = vrot.slane %v1201, %v1231
      %v1233 = vlaneseq
      %v1234 = vshrl.u32 %v1233, 7
      %v1235 = vsub.s32 1, %v1234
      %v1236 = vrot.slane %v1202, %v1235
      %v1237 = vmul.f32 %v1227, %v1232
      %v1238 = vmul.f32 %v1227, %v1236
      %v1239 = vadd.f32 %v1220, %v1237
      %v1240 = vadd.f32 %v1221, %v1238
      %s1241 = scalar_lea.vmem %s2, 136
      %v1242 = vld [vmem:[%s1241] sm:$0xf]
      %1244 = vset.pattern.permute.xlu0 0
      %1245 = vperm.xlu0 %1244, %v1242
      %v1246 = vpop.permute.xlu0 %1245
      %v1248 = vlaneseq
      %v1249 = vshrl.u32 %v1248, 7
      %v1250 = vsub.s32 2, %v1249
      %v1251 = vrot.slane %v1201, %v1250
      %v1252 = vlaneseq
      %v1253 = vshrl.u32 %v1252, 7
      %v1254 = vsub.s32 2, %v1253
      %v1255 = vrot.slane %v1202, %v1254
      %v1256 = vmul.f32 %v1246, %v1251
      %v1257 = vmul.f32 %v1246, %v1255
      %v1258 = vadd.f32 %v1239, %v1256
      %v1259 = vadd.f32 %v1240, %v1257
      %s1260 = scalar_lea.vmem %s2, 140
      %v1261 = vld [vmem:[%s1260] sm:$0xf]
      %1263 = vset.pattern.permute.xlu0 0
      %1264 = vperm.xlu0 %1263, %v1261
      %v1265 = vpop.permute.xlu0 %1264
      %v1267 = vlaneseq
      %v1268 = vshrl.u32 %v1267, 7
      %v1269 = vsub.s32 3, %v1268
      %v1270 = vrot.slane %v1201, %v1269
      %v1271 = vlaneseq
      %v1272 = vshrl.u32 %v1271, 7
      %v1273 = vsub.s32 3, %v1272
      %v1274 = vrot.slane %v1202, %v1273
      %v1275 = vmul.f32 %v1265, %v1270
      %v1276 = vmul.f32 %v1265, %v1274
      %v1277 = vadd.f32 %v1258, %v1275
      %v1278 = vadd.f32 %v1259, %v1276
      %v1279 = vld [vmem:[%s3] sm:$0xf]
      %1281 = vset.pattern.permute.xlu0 0
      %1282 = vperm.xlu0 %1281, %v1279
      %v1283 = vpop.permute.xlu0 %1282
      %v1285 = vadd.f32 %v1277, %v1283
      %v1286 = vadd.f32 %v1278, %v1283
      %v1287 = vmax.f32 %v1285, 0.0
      %v1288 = vmax.f32 %v1286, 0.0
      %vm1289 = vcmask 1043456
      %v1290 = vsel %vm1289, %v1287, 0.0
      %v1291 = vsel %vm1289, %v1288, 0.0
      %v1292 = vadd.f32 %v1290, %v1291
      %1293 = vadd.xlane.f32.xlu0 %v1292
      %v1294 = vpop.xlane.xlu0 %1293
      %v1295 = vrcp.pop 256.0
      %v1296 = vmul.f32 %v1294, %v1295
      %v1297 = vsub.f32 %v1287, %v1296
      %v1298 = vsub.f32 %v1288, %v1296
      %v1299 = vmul.f32 %v1297, %v1297
      %v1300 = vmul.f32 %v1298, %v1298
      %v1301 = vsel %vm1289, %v1299, 0.0
      %v1302 = vsel %vm1289, %v1300, 0.0
      %v1303 = vadd.f32 %v1301, %v1302
      %1304 = vadd.xlane.f32.xlu0 %v1303
      %v1305 = vpop.xlane.xlu0 %1304
      %v1306 = vmul.f32 %v1305, %v1295
      %v1307 = vadd.f32 %v1306, 1e-06
      %v1308 = vrsqrt.pop %v1307
      %v1309 = vmul.f32 %v1297, %v1308
      %v1310 = vmul.f32 %v1298, %v1308
      %v1311 = vld [vmem:[%s4] sm:$0xf]
      %1313 = vset.pattern.permute.xlu0 0
      %1314 = vperm.xlu0 %1313, %v1311
      %v1315 = vpop.permute.xlu0 %1314
      %v1317 = vmul.f32 %v1309, %v1315
      %v1318 = vmul.f32 %v1310, %v1315
      %v1319 = vld [vmem:[%s5] sm:$0xf]
      %1321 = vset.pattern.permute.xlu0 0
      %1322 = vperm.xlu0 %1321, %v1319
      %v1323 = vpop.permute.xlu0 %1322
      %v1325 = vadd.f32 %v1317, %v1323
      %v1326 = vadd.f32 %v1318, %v1323
      %vm1327 = vcmp.gt.f32.partialorder %v1325, 0.0
      %vm1328 = vcmp.gt.f32.partialorder %v1326, 0.0
      %v1329 = vmul.f32 %v1325, 1.442695
      %v1330 = vpow.pop %v1329
      %v1331 = vmul.f32 %v1326, 1.442695
      %v1332 = vpow.pop %v1331
      %v1333 = vsub.f32 %v1330, 1.0
      %v1334 = vsub.f32 %v1332, 1.0
      %v1335 = vsel %vm1327, %v1325, %v1333
      %v1336 = vsel %vm1328, %v1326, %v1334
      %1337 = vrot.lane.b32.xlu0 %v1335, 17
      %v1338 = vpop.permute.xlu0 %1337
      %1339 = vrot.lane.b32.xlu0 %v1336, 17
      %v1340 = vpop.permute.xlu0 %1339
      %v1341 = vsel %vm370, %v1338, %v1340
      %v1342 = vsel %vm370, %v1340, %v1338
      %v1343 = vmul.f32 %v1342, %v378
      %v1344 = vmul.f32 %v1341, %v382
      %v1345 = vld [vmem:[%s6] sm:$0xf]
      %1347 = vset.pattern.permute.xlu0 0
      %1348 = vperm.xlu0 %1347, %v1345
      %v1349 = vpop.permute.xlu0 %1348
      %v1351 = vlaneseq
      %v1352 = vshrl.u32 %v1351, 7
      %v1353 = vsub.s32 0, %v1352
      %v1354 = vrot.slane %v1343, %v1353
      %v1355 = vlaneseq
      %v1356 = vshrl.u32 %v1355, 7
      %v1357 = vsub.s32 0, %v1356
      %v1358 = vrot.slane %v1344, %v1357
      %v1359 = vmul.f32 %v1349, %v1354
      %v1360 = vmul.f32 %v1349, %v1358
      %s1361 = scalar_lea.vmem %s6, 4
      %v1362 = vld [vmem:[%s1361] sm:$0xf]
      %1364 = vset.pattern.permute.xlu0 0
      %1365 = vperm.xlu0 %1364, %v1362
      %v1366 = vpop.permute.xlu0 %1365
      %v1368 = vlaneseq
      %v1369 = vshrl.u32 %v1368, 7
      %v1370 = vsub.s32 1, %v1369
      %v1371 = vrot.slane %v1343, %v1370
      %v1372 = vlaneseq
      %v1373 = vshrl.u32 %v1372, 7
      %v1374 = vsub.s32 1, %v1373
      %v1375 = vrot.slane %v1344, %v1374
      %v1376 = vmul.f32 %v1366, %v1371
      %v1377 = vmul.f32 %v1366, %v1375
      %v1378 = vadd.f32 %v1359, %v1376
      %v1379 = vadd.f32 %v1360, %v1377
      %s1380 = scalar_lea.vmem %s6, 8
      %v1381 = vld [vmem:[%s1380] sm:$0xf]
      %1383 = vset.pattern.permute.xlu0 0
      %1384 = vperm.xlu0 %1383, %v1381
      %v1385 = vpop.permute.xlu0 %1384
      %v1387 = vlaneseq
      %v1388 = vshrl.u32 %v1387, 7
      %v1389 = vsub.s32 2, %v1388
      %v1390 = vrot.slane %v1343, %v1389
      %v1391 = vlaneseq
      %v1392 = vshrl.u32 %v1391, 7
      %v1393 = vsub.s32 2, %v1392
      %v1394 = vrot.slane %v1344, %v1393
      %v1395 = vmul.f32 %v1385, %v1390
      %v1396 = vmul.f32 %v1385, %v1394
      %v1397 = vadd.f32 %v1378, %v1395
      %v1398 = vadd.f32 %v1379, %v1396
      %s1399 = scalar_lea.vmem %s6, 12
      %v1400 = vld [vmem:[%s1399] sm:$0xf]
      %1402 = vset.pattern.permute.xlu0 0
      %1403 = vperm.xlu0 %1402, %v1400
      %v1404 = vpop.permute.xlu0 %1403
      %v1406 = vlaneseq
      %v1407 = vshrl.u32 %v1406, 7
      %v1408 = vsub.s32 3, %v1407
      %v1409 = vrot.slane %v1343, %v1408
      %v1410 = vlaneseq
      %v1411 = vshrl.u32 %v1410, 7
      %v1412 = vsub.s32 3, %v1411
      %v1413 = vrot.slane %v1344, %v1412
      %v1414 = vmul.f32 %v1404, %v1409
      %v1415 = vmul.f32 %v1404, %v1413
      %v1416 = vadd.f32 %v1397, %v1414
      %v1417 = vadd.f32 %v1398, %v1415
      %1418 = vrot.lane.b32.xlu0 %v1335, 16
      %v1419 = vpop.permute.xlu0 %1418
      %1420 = vrot.lane.b32.xlu0 %v1336, 16
      %v1421 = vpop.permute.xlu0 %1420
      %v1422 = vsel %vm464, %v1419, %v1421
      %v1423 = vsel %vm464, %v1421, %v1419
      %v1424 = vmul.f32 %v1423, %v473
      %v1425 = vmul.f32 %v1422, %v477
      %s1426 = scalar_lea.vmem %s6, 16
      %v1427 = vld [vmem:[%s1426] sm:$0xf]
      %1429 = vset.pattern.permute.xlu0 0
      %1430 = vperm.xlu0 %1429, %v1427
      %v1431 = vpop.permute.xlu0 %1430
      %v1433 = vlaneseq
      %v1434 = vshrl.u32 %v1433, 7
      %v1435 = vsub.s32 0, %v1434
      %v1436 = vrot.slane %v1424, %v1435
      %v1437 = vlaneseq
      %v1438 = vshrl.u32 %v1437, 7
      %v1439 = vsub.s32 0, %v1438
      %v1440 = vrot.slane %v1425, %v1439
      %v1441 = vmul.f32 %v1431, %v1436
      %v1442 = vmul.f32 %v1431, %v1440
      %v1443 = vadd.f32 %v1416, %v1441
      %v1444 = vadd.f32 %v1417, %v1442
      %s1445 = scalar_lea.vmem %s6, 20
      %v1446 = vld [vmem:[%s1445] sm:$0xf]
      %1448 = vset.pattern.permute.xlu0 0
      %1449 = vperm.xlu0 %1448, %v1446
      %v1450 = vpop.permute.xlu0 %1449
      %v1452 = vlaneseq
      %v1453 = vshrl.u32 %v1452, 7
      %v1454 = vsub.s32 1, %v1453
      %v1455 = vrot.slane %v1424, %v1454
      %v1456 = vlaneseq
      %v1457 = vshrl.u32 %v1456, 7
      %v1458 = vsub.s32 1, %v1457
      %v1459 = vrot.slane %v1425, %v1458
      %v1460 = vmul.f32 %v1450, %v1455
      %v1461 = vmul.f32 %v1450, %v1459
      %v1462 = vadd.f32 %v1443, %v1460
      %v1463 = vadd.f32 %v1444, %v1461
      %s1464 = scalar_lea.vmem %s6, 24
      %v1465 = vld [vmem:[%s1464] sm:$0xf]
      %1467 = vset.pattern.permute.xlu0 0
      %1468 = vperm.xlu0 %1467, %v1465
      %v1469 = vpop.permute.xlu0 %1468
      %v1471 = vlaneseq
      %v1472 = vshrl.u32 %v1471, 7
      %v1473 = vsub.s32 2, %v1472
      %v1474 = vrot.slane %v1424, %v1473
      %v1475 = vlaneseq
      %v1476 = vshrl.u32 %v1475, 7
      %v1477 = vsub.s32 2, %v1476
      %v1478 = vrot.slane %v1425, %v1477
      %v1479 = vmul.f32 %v1469, %v1474
      %v1480 = vmul.f32 %v1469, %v1478
      %v1481 = vadd.f32 %v1462, %v1479
      %v1482 = vadd.f32 %v1463, %v1480
      %s1483 = scalar_lea.vmem %s6, 28
      %v1484 = vld [vmem:[%s1483] sm:$0xf]
      %1486 = vset.pattern.permute.xlu0 0
      %1487 = vperm.xlu0 %1486, %v1484
      %v1488 = vpop.permute.xlu0 %1487
      %v1490 = vlaneseq
      %v1491 = vshrl.u32 %v1490, 7
      %v1492 = vsub.s32 3, %v1491
      %v1493 = vrot.slane %v1424, %v1492
      %v1494 = vlaneseq
      %v1495 = vshrl.u32 %v1494, 7
      %v1496 = vsub.s32 3, %v1495
      %v1497 = vrot.slane %v1425, %v1496
      %v1498 = vmul.f32 %v1488, %v1493
      %v1499 = vmul.f32 %v1488, %v1497
      %v1500 = vadd.f32 %v1481, %v1498
      %v1501 = vadd.f32 %v1482, %v1499
      %1502 = vrot.lane.b32.xlu0 %v1335, 15
      %v1503 = vpop.permute.xlu0 %1502
      %1504 = vrot.lane.b32.xlu0 %v1336, 15
      %v1505 = vpop.permute.xlu0 %1504
      %v1506 = vsel %vm562, %v1503, %v1505
      %v1507 = vsel %vm562, %v1505, %v1503
      %v1508 = vmul.f32 %v1507, %v571
      %v1509 = vmul.f32 %v1506, %v575
      %s1510 = scalar_lea.vmem %s6, 32
      %v1511 = vld [vmem:[%s1510] sm:$0xf]
      %1513 = vset.pattern.permute.xlu0 0
      %1514 = vperm.xlu0 %1513, %v1511
      %v1515 = vpop.permute.xlu0 %1514
      %v1517 = vlaneseq
      %v1518 = vshrl.u32 %v1517, 7
      %v1519 = vsub.s32 0, %v1518
      %v1520 = vrot.slane %v1508, %v1519
      %v1521 = vlaneseq
      %v1522 = vshrl.u32 %v1521, 7
      %v1523 = vsub.s32 0, %v1522
      %v1524 = vrot.slane %v1509, %v1523
      %v1525 = vmul.f32 %v1515, %v1520
      %v1526 = vmul.f32 %v1515, %v1524
      %v1527 = vadd.f32 %v1500, %v1525
      %v1528 = vadd.f32 %v1501, %v1526
      %s1529 = scalar_lea.vmem %s6, 36
      %v1530 = vld [vmem:[%s1529] sm:$0xf]
      %1532 = vset.pattern.permute.xlu0 0
      %1533 = vperm.xlu0 %1532, %v1530
      %v1534 = vpop.permute.xlu0 %1533
      %v1536 = vlaneseq
      %v1537 = vshrl.u32 %v1536, 7
      %v1538 = vsub.s32 1, %v1537
      %v1539 = vrot.slane %v1508, %v1538
      %v1540 = vlaneseq
      %v1541 = vshrl.u32 %v1540, 7
      %v1542 = vsub.s32 1, %v1541
      %v1543 = vrot.slane %v1509, %v1542
      %v1544 = vmul.f32 %v1534, %v1539
      %v1545 = vmul.f32 %v1534, %v1543
      %v1546 = vadd.f32 %v1527, %v1544
      %v1547 = vadd.f32 %v1528, %v1545
      %s1548 = scalar_lea.vmem %s6, 40
      %v1549 = vld [vmem:[%s1548] sm:$0xf]
      %1551 = vset.pattern.permute.xlu0 0
      %1552 = vperm.xlu0 %1551, %v1549
      %v1553 = vpop.permute.xlu0 %1552
      %v1555 = vlaneseq
      %v1556 = vshrl.u32 %v1555, 7
      %v1557 = vsub.s32 2, %v1556
      %v1558 = vrot.slane %v1508, %v1557
      %v1559 = vlaneseq
      %v1560 = vshrl.u32 %v1559, 7
      %v1561 = vsub.s32 2, %v1560
      %v1562 = vrot.slane %v1509, %v1561
      %v1563 = vmul.f32 %v1553, %v1558
      %v1564 = vmul.f32 %v1553, %v1562
      %v1565 = vadd.f32 %v1546, %v1563
      %v1566 = vadd.f32 %v1547, %v1564
      %s1567 = scalar_lea.vmem %s6, 44
      %v1568 = vld [vmem:[%s1567] sm:$0xf]
      %1570 = vset.pattern.permute.xlu0 0
      %1571 = vperm.xlu0 %1570, %v1568
      %v1572 = vpop.permute.xlu0 %1571
      %v1574 = vlaneseq
      %v1575 = vshrl.u32 %v1574, 7
      %v1576 = vsub.s32 3, %v1575
      %v1577 = vrot.slane %v1508, %v1576
      %v1578 = vlaneseq
      %v1579 = vshrl.u32 %v1578, 7
      %v1580 = vsub.s32 3, %v1579
      %v1581 = vrot.slane %v1509, %v1580
      %v1582 = vmul.f32 %v1572, %v1577
      %v1583 = vmul.f32 %v1572, %v1581
      %v1584 = vadd.f32 %v1565, %v1582
      %v1585 = vadd.f32 %v1566, %v1583
      %1586 = vrot.lane.b32.xlu0 %v1335, 1
      %v1587 = vpop.permute.xlu0 %1586
      %1588 = vrot.lane.b32.xlu0 %v1336, 1
      %v1589 = vpop.permute.xlu0 %1588
      %v1590 = vsel %vm660, %v1587, %v1589
      %v1591 = vsel %vm660, %v1589, %v1587
      %v1592 = vmul.f32 %v1591, %v669
      %v1593 = vmul.f32 %v1590, %v673
      %s1594 = scalar_lea.vmem %s6, 48
      %v1595 = vld [vmem:[%s1594] sm:$0xf]
      %1597 = vset.pattern.permute.xlu0 0
      %1598 = vperm.xlu0 %1597, %v1595
      %v1599 = vpop.permute.xlu0 %1598
      %v1601 = vlaneseq
      %v1602 = vshrl.u32 %v1601, 7
      %v1603 = vsub.s32 0, %v1602
      %v1604 = vrot.slane %v1592, %v1603
      %v1605 = vlaneseq
      %v1606 = vshrl.u32 %v1605, 7
      %v1607 = vsub.s32 0, %v1606
      %v1608 = vrot.slane %v1593, %v1607
      %v1609 = vmul.f32 %v1599, %v1604
      %v1610 = vmul.f32 %v1599, %v1608
      %v1611 = vadd.f32 %v1584, %v1609
      %v1612 = vadd.f32 %v1585, %v1610
      %s1613 = scalar_lea.vmem %s6, 52
      %v1614 = vld [vmem:[%s1613] sm:$0xf]
      %1616 = vset.pattern.permute.xlu0 0
      %1617 = vperm.xlu0 %1616, %v1614
      %v1618 = vpop.permute.xlu0 %1617
      %v1620 = vlaneseq
      %v1621 = vshrl.u32 %v1620, 7
      %v1622 = vsub.s32 1, %v1621
      %v1623 = vrot.slane %v1592, %v1622
      %v1624 = vlaneseq
      %v1625 = vshrl.u32 %v1624, 7
      %v1626 = vsub.s32 1, %v1625
      %v1627 = vrot.slane %v1593, %v1626
      %v1628 = vmul.f32 %v1618, %v1623
      %v1629 = vmul.f32 %v1618, %v1627
      %v1630 = vadd.f32 %v1611, %v1628
      %v1631 = vadd.f32 %v1612, %v1629
      %s1632 = scalar_lea.vmem %s6, 56
      %v1633 = vld [vmem:[%s1632] sm:$0xf]
      %1635 = vset.pattern.permute.xlu0 0
      %1636 = vperm.xlu0 %1635, %v1633
      %v1637 = vpop.permute.xlu0 %1636
      %v1639 = vlaneseq
      %v1640 = vshrl.u32 %v1639, 7
      %v1641 = vsub.s32 2, %v1640
      %v1642 = vrot.slane %v1592, %v1641
      %v1643 = vlaneseq
      %v1644 = vshrl.u32 %v1643, 7
      %v1645 = vsub.s32 2, %v1644
      %v1646 = vrot.slane %v1593, %v1645
      %v1647 = vmul.f32 %v1637, %v1642
      %v1648 = vmul.f32 %v1637, %v1646
      %v1649 = vadd.f32 %v1630, %v1647
      %v1650 = vadd.f32 %v1631, %v1648
      %s1651 = scalar_lea.vmem %s6, 60
      %v1652 = vld [vmem:[%s1651] sm:$0xf]
      %1654 = vset.pattern.permute.xlu0 0
      %1655 = vperm.xlu0 %1654, %v1652
      %v1656 = vpop.permute.xlu0 %1655
      %v1658 = vlaneseq
      %v1659 = vshrl.u32 %v1658, 7
      %v1660 = vsub.s32 3, %v1659
      %v1661 = vrot.slane %v1592, %v1660
      %v1662 = vlaneseq
      %v1663 = vshrl.u32 %v1662, 7
      %v1664 = vsub.s32 3, %v1663
      %v1665 = vrot.slane %v1593, %v1664
      %v1666 = vmul.f32 %v1656, %v1661
      %v1667 = vmul.f32 %v1656, %v1665
      %v1668 = vadd.f32 %v1649, %v1666
      %v1669 = vadd.f32 %v1650, %v1667
      %v1670 = vmul.f32 %v1335, %v760
      %v1671 = vmul.f32 %v1336, %v764
      %s1672 = scalar_lea.vmem %s6, 64
      %v1673 = vld [vmem:[%s1672] sm:$0xf]
      %1675 = vset.pattern.permute.xlu0 0
      %1676 = vperm.xlu0 %1675, %v1673
      %v1677 = vpop.permute.xlu0 %1676
      %v1679 = vlaneseq
      %v1680 = vshrl.u32 %v1679, 7
      %v1681 = vsub.s32 0, %v1680
      %v1682 = vrot.slane %v1670, %v1681
      %v1683 = vlaneseq
      %v1684 = vshrl.u32 %v1683, 7
      %v1685 = vsub.s32 0, %v1684
      %v1686 = vrot.slane %v1671, %v1685
      %v1687 = vmul.f32 %v1677, %v1682
      %v1688 = vmul.f32 %v1677, %v1686
      %v1689 = vadd.f32 %v1668, %v1687
      %v1690 = vadd.f32 %v1669, %v1688
      %s1691 = scalar_lea.vmem %s6, 68
      %v1692 = vld [vmem:[%s1691] sm:$0xf]
      %1694 = vset.pattern.permute.xlu0 0
      %1695 = vperm.xlu0 %1694, %v1692
      %v1696 = vpop.permute.xlu0 %1695
      %v1698 = vlaneseq
      %v1699 = vshrl.u32 %v1698, 7
      %v1700 = vsub.s32 1, %v1699
      %v1701 = vrot.slane %v1670, %v1700
      %v1702 = vlaneseq
      %v1703 = vshrl.u32 %v1702, 7
      %v1704 = vsub.s32 1, %v1703
      %v1705 = vrot.slane %v1671, %v1704
      %v1706 = vmul.f32 %v1696, %v1701
      %v1707 = vmul.f32 %v1696, %v1705
      %v1708 = vadd.f32 %v1689, %v1706
      %v1709 = vadd.f32 %v1690, %v1707
      %s1710 = scalar_lea.vmem %s6, 72
      %v1711 = vld [vmem:[%s1710] sm:$0xf]
      %1713 = vset.pattern.permute.xlu0 0
      %1714 = vperm.xlu0 %1713, %v1711
      %v1715 = vpop.permute.xlu0 %1714
      %v1717 = vlaneseq
      %v1718 = vshrl.u32 %v1717, 7
      %v1719 = vsub.s32 2, %v1718
      %v1720 = vrot.slane %v1670, %v1719
      %v1721 = vlaneseq
      %v1722 = vshrl.u32 %v1721, 7
      %v1723 = vsub.s32 2, %v1722
      %v1724 = vrot.slane %v1671, %v1723
      %v1725 = vmul.f32 %v1715, %v1720
      %v1726 = vmul.f32 %v1715, %v1724
      %v1727 = vadd.f32 %v1708, %v1725
      %v1728 = vadd.f32 %v1709, %v1726
      %s1729 = scalar_lea.vmem %s6, 76
      %v1730 = vld [vmem:[%s1729] sm:$0xf]
      %1732 = vset.pattern.permute.xlu0 0
      %1733 = vperm.xlu0 %1732, %v1730
      %v1734 = vpop.permute.xlu0 %1733
      %v1736 = vlaneseq
      %v1737 = vshrl.u32 %v1736, 7
      %v1738 = vsub.s32 3, %v1737
      %v1739 = vrot.slane %v1670, %v1738
      %v1740 = vlaneseq
      %v1741 = vshrl.u32 %v1740, 7
      %v1742 = vsub.s32 3, %v1741
      %v1743 = vrot.slane %v1671, %v1742
      %v1744 = vmul.f32 %v1734, %v1739
      %v1745 = vmul.f32 %v1734, %v1743
      %v1746 = vadd.f32 %v1727, %v1744
      %v1747 = vadd.f32 %v1728, %v1745
      %1748 = vrot.lane.b32.xlu0 %v1335, 127
      %v1749 = vpop.permute.xlu0 %1748
      %1750 = vrot.lane.b32.xlu0 %v1336, 127
      %v1751 = vpop.permute.xlu0 %1750
      %v1752 = vsel %vm891, %v1749, %v1751
      %v1753 = vsel %vm891, %v1751, %v1749
      %v1754 = vmul.f32 %v1752, %v900
      %v1755 = vmul.f32 %v1753, %v904
      %s1756 = scalar_lea.vmem %s6, 80
      %v1757 = vld [vmem:[%s1756] sm:$0xf]
      %1759 = vset.pattern.permute.xlu0 0
      %1760 = vperm.xlu0 %1759, %v1757
      %v1761 = vpop.permute.xlu0 %1760
      %v1763 = vlaneseq
      %v1764 = vshrl.u32 %v1763, 7
      %v1765 = vsub.s32 0, %v1764
      %v1766 = vrot.slane %v1754, %v1765
      %v1767 = vlaneseq
      %v1768 = vshrl.u32 %v1767, 7
      %v1769 = vsub.s32 0, %v1768
      %v1770 = vrot.slane %v1755, %v1769
      %v1771 = vmul.f32 %v1761, %v1766
      %v1772 = vmul.f32 %v1761, %v1770
      %v1773 = vadd.f32 %v1746, %v1771
      %v1774 = vadd.f32 %v1747, %v1772
      %s1775 = scalar_lea.vmem %s6, 84
      %v1776 = vld [vmem:[%s1775] sm:$0xf]
      %1778 = vset.pattern.permute.xlu0 0
      %1779 = vperm.xlu0 %1778, %v1776
      %v1780 = vpop.permute.xlu0 %1779
      %v1782 = vlaneseq
      %v1783 = vshrl.u32 %v1782, 7
      %v1784 = vsub.s32 1, %v1783
      %v1785 = vrot.slane %v1754, %v1784
      %v1786 = vlaneseq
      %v1787 = vshrl.u32 %v1786, 7
      %v1788 = vsub.s32 1, %v1787
      %v1789 = vrot.slane %v1755, %v1788
      %v1790 = vmul.f32 %v1780, %v1785
      %v1791 = vmul.f32 %v1780, %v1789
      %v1792 = vadd.f32 %v1773, %v1790
      %v1793 = vadd.f32 %v1774, %v1791
      %s1794 = scalar_lea.vmem %s6, 88
      %v1795 = vld [vmem:[%s1794] sm:$0xf]
      %1797 = vset.pattern.permute.xlu0 0
      %1798 = vperm.xlu0 %1797, %v1795
      %v1799 = vpop.permute.xlu0 %1798
      %v1801 = vlaneseq
      %v1802 = vshrl.u32 %v1801, 7
      %v1803 = vsub.s32 2, %v1802
      %v1804 = vrot.slane %v1754, %v1803
      %v1805 = vlaneseq
      %v1806 = vshrl.u32 %v1805, 7
      %v1807 = vsub.s32 2, %v1806
      %v1808 = vrot.slane %v1755, %v1807
      %v1809 = vmul.f32 %v1799, %v1804
      %v1810 = vmul.f32 %v1799, %v1808
      %v1811 = vadd.f32 %v1792, %v1809
      %v1812 = vadd.f32 %v1793, %v1810
      %s1813 = scalar_lea.vmem %s6, 92
      %v1814 = vld [vmem:[%s1813] sm:$0xf]
      %1816 = vset.pattern.permute.xlu0 0
      %1817 = vperm.xlu0 %1816, %v1814
      %v1818 = vpop.permute.xlu0 %1817
      %v1820 = vlaneseq
      %v1821 = vshrl.u32 %v1820, 7
      %v1822 = vsub.s32 3, %v1821
      %v1823 = vrot.slane %v1754, %v1822
      %v1824 = vlaneseq
      %v1825 = vshrl.u32 %v1824, 7
      %v1826 = vsub.s32 3, %v1825
      %v1827 = vrot.slane %v1755, %v1826
      %v1828 = vmul.f32 %v1818, %v1823
      %v1829 = vmul.f32 %v1818, %v1827
      %v1830 = vadd.f32 %v1811, %v1828
      %v1831 = vadd.f32 %v1812, %v1829
      %1832 = vrot.lane.b32.xlu0 %v1335, 113
      %v1833 = vpop.permute.xlu0 %1832
      %1834 = vrot.lane.b32.xlu0 %v1336, 113
      %v1835 = vpop.permute.xlu0 %1834
      %v1836 = vsel %vm989, %v1833, %v1835
      %v1837 = vsel %vm989, %v1835, %v1833
      %v1838 = vmul.f32 %v1836, %v998
      %v1839 = vmul.f32 %v1837, %v1002
      %s1840 = scalar_lea.vmem %s6, 96
      %v1841 = vld [vmem:[%s1840] sm:$0xf]
      %1843 = vset.pattern.permute.xlu0 0
      %1844 = vperm.xlu0 %1843, %v1841
      %v1845 = vpop.permute.xlu0 %1844
      %v1847 = vlaneseq
      %v1848 = vshrl.u32 %v1847, 7
      %v1849 = vsub.s32 0, %v1848
      %v1850 = vrot.slane %v1838, %v1849
      %v1851 = vlaneseq
      %v1852 = vshrl.u32 %v1851, 7
      %v1853 = vsub.s32 0, %v1852
      %v1854 = vrot.slane %v1839, %v1853
      %v1855 = vmul.f32 %v1845, %v1850
      %v1856 = vmul.f32 %v1845, %v1854
      %v1857 = vadd.f32 %v1830, %v1855
      %v1858 = vadd.f32 %v1831, %v1856
      %s1859 = scalar_lea.vmem %s6, 100
      %v1860 = vld [vmem:[%s1859] sm:$0xf]
      %1862 = vset.pattern.permute.xlu0 0
      %1863 = vperm.xlu0 %1862, %v1860
      %v1864 = vpop.permute.xlu0 %1863
      %v1866 = vlaneseq
      %v1867 = vshrl.u32 %v1866, 7
      %v1868 = vsub.s32 1, %v1867
      %v1869 = vrot.slane %v1838, %v1868
      %v1870 = vlaneseq
      %v1871 = vshrl.u32 %v1870, 7
      %v1872 = vsub.s32 1, %v1871
      %v1873 = vrot.slane %v1839, %v1872
      %v1874 = vmul.f32 %v1864, %v1869
      %v1875 = vmul.f32 %v1864, %v1873
      %v1876 = vadd.f32 %v1857, %v1874
      %v1877 = vadd.f32 %v1858, %v1875
      %s1878 = scalar_lea.vmem %s6, 104
      %v1879 = vld [vmem:[%s1878] sm:$0xf]
      %1881 = vset.pattern.permute.xlu0 0
      %1882 = vperm.xlu0 %1881, %v1879
      %v1883 = vpop.permute.xlu0 %1882
      %v1885 = vlaneseq
      %v1886 = vshrl.u32 %v1885, 7
      %v1887 = vsub.s32 2, %v1886
      %v1888 = vrot.slane %v1838, %v1887
      %v1889 = vlaneseq
      %v1890 = vshrl.u32 %v1889, 7
      %v1891 = vsub.s32 2, %v1890
      %v1892 = vrot.slane %v1839, %v1891
      %v1893 = vmul.f32 %v1883, %v1888
      %v1894 = vmul.f32 %v1883, %v1892
      %v1895 = vadd.f32 %v1876, %v1893
      %v1896 = vadd.f32 %v1877, %v1894
      %s1897 = scalar_lea.vmem %s6, 108
      %v1898 = vld [vmem:[%s1897] sm:$0xf]
      %1900 = vset.pattern.permute.xlu0 0
      %1901 = vperm.xlu0 %1900, %v1898
      %v1902 = vpop.permute.xlu0 %1901
      %v1904 = vlaneseq
      %v1905 = vshrl.u32 %v1904, 7
      %v1906 = vsub.s32 3, %v1905
      %v1907 = vrot.slane %v1838, %v1906
      %v1908 = vlaneseq
      %v1909 = vshrl.u32 %v1908, 7
      %v1910 = vsub.s32 3, %v1909
      %v1911 = vrot.slane %v1839, %v1910
      %v1912 = vmul.f32 %v1902, %v1907
      %v1913 = vmul.f32 %v1902, %v1911
      %v1914 = vadd.f32 %v1895, %v1912
      %v1915 = vadd.f32 %v1896, %v1913
      %1916 = vrot.lane.b32.xlu0 %v1335, 112
      %v1917 = vpop.permute.xlu0 %1916
      %1918 = vrot.lane.b32.xlu0 %v1336, 112
      %v1919 = vpop.permute.xlu0 %1918
      %v1920 = vsel %vm1087, %v1917, %v1919
      %v1921 = vsel %vm1087, %v1919, %v1917
      %v1922 = vmul.f32 %v1920, %v1096
      %v1923 = vmul.f32 %v1921, %v1100
      %s1924 = scalar_lea.vmem %s6, 112
      %v1925 = vld [vmem:[%s1924] sm:$0xf]
      %1927 = vset.pattern.permute.xlu0 0
      %1928 = vperm.xlu0 %1927, %v1925
      %v1929 = vpop.permute.xlu0 %1928
      %v1931 = vlaneseq
      %v1932 = vshrl.u32 %v1931, 7
      %v1933 = vsub.s32 0, %v1932
      %v1934 = vrot.slane %v1922, %v1933
      %v1935 = vlaneseq
      %v1936 = vshrl.u32 %v1935, 7
      %v1937 = vsub.s32 0, %v1936
      %v1938 = vrot.slane %v1923, %v1937
      %v1939 = vmul.f32 %v1929, %v1934
      %v1940 = vmul.f32 %v1929, %v1938
      %v1941 = vadd.f32 %v1914, %v1939
      %v1942 = vadd.f32 %v1915, %v1940
      %s1943 = scalar_lea.vmem %s6, 116
      %v1944 = vld [vmem:[%s1943] sm:$0xf]
      %1946 = vset.pattern.permute.xlu0 0
      %1947 = vperm.xlu0 %1946, %v1944
      %v1948 = vpop.permute.xlu0 %1947
      %v1950 = vlaneseq
      %v1951 = vshrl.u32 %v1950, 7
      %v1952 = vsub.s32 1, %v1951
      %v1953 = vrot.slane %v1922, %v1952
      %v1954 = vlaneseq
      %v1955 = vshrl.u32 %v1954, 7
      %v1956 = vsub.s32 1, %v1955
      %v1957 = vrot.slane %v1923, %v1956
      %v1958 = vmul.f32 %v1948, %v1953
      %v1959 = vmul.f32 %v1948, %v1957
      %v1960 = vadd.f32 %v1941, %v1958
      %v1961 = vadd.f32 %v1942, %v1959
      %s1962 = scalar_lea.vmem %s6, 120
      %v1963 = vld [vmem:[%s1962] sm:$0xf]
      %1965 = vset.pattern.permute.xlu0 0
      %1966 = vperm.xlu0 %1965, %v1963
      %v1967 = vpop.permute.xlu0 %1966
      %v1969 = vlaneseq
      %v1970 = vshrl.u32 %v1969, 7
      %v1971 = vsub.s32 2, %v1970
      %v1972 = vrot.slane %v1922, %v1971
      %v1973 = vlaneseq
      %v1974 = vshrl.u32 %v1973, 7
      %v1975 = vsub.s32 2, %v1974
      %v1976 = vrot.slane %v1923, %v1975
      %v1977 = vmul.f32 %v1967, %v1972
      %v1978 = vmul.f32 %v1967, %v1976
      %v1979 = vadd.f32 %v1960, %v1977
      %v1980 = vadd.f32 %v1961, %v1978
      %s1981 = scalar_lea.vmem %s6, 124
      %v1982 = vld [vmem:[%s1981] sm:$0xf]
      %1984 = vset.pattern.permute.xlu0 0
      %1985 = vperm.xlu0 %1984, %v1982
      %v1986 = vpop.permute.xlu0 %1985
      %v1988 = vlaneseq
      %v1989 = vshrl.u32 %v1988, 7
      %v1990 = vsub.s32 3, %v1989
      %v1991 = vrot.slane %v1922, %v1990
      %v1992 = vlaneseq
      %v1993 = vshrl.u32 %v1992, 7
      %v1994 = vsub.s32 3, %v1993
      %v1995 = vrot.slane %v1923, %v1994
      %v1996 = vmul.f32 %v1986, %v1991
      %v1997 = vmul.f32 %v1986, %v1995
      %v1998 = vadd.f32 %v1979, %v1996
      %v1999 = vadd.f32 %v1980, %v1997
      %2000 = vrot.lane.b32.xlu0 %v1335, 111
      %v2001 = vpop.permute.xlu0 %2000
      %2002 = vrot.lane.b32.xlu0 %v1336, 111
      %v2003 = vpop.permute.xlu0 %2002
      %v2004 = vsel %vm1185, %v2001, %v2003
      %v2005 = vsel %vm1185, %v2003, %v2001
      %v2006 = vmul.f32 %v2004, %v1194
      %v2007 = vmul.f32 %v2005, %v1198
      %s2008 = scalar_lea.vmem %s6, 128
      %v2009 = vld [vmem:[%s2008] sm:$0xf]
      %2011 = vset.pattern.permute.xlu0 0
      %2012 = vperm.xlu0 %2011, %v2009
      %v2013 = vpop.permute.xlu0 %2012
      %v2015 = vlaneseq
      %v2016 = vshrl.u32 %v2015, 7
      %v2017 = vsub.s32 0, %v2016
      %v2018 = vrot.slane %v2006, %v2017
      %v2019 = vlaneseq
      %v2020 = vshrl.u32 %v2019, 7
      %v2021 = vsub.s32 0, %v2020
      %v2022 = vrot.slane %v2007, %v2021
      %v2023 = vmul.f32 %v2013, %v2018
      %v2024 = vmul.f32 %v2013, %v2022
      %v2025 = vadd.f32 %v1998, %v2023
      %v2026 = vadd.f32 %v1999, %v2024
      %s2027 = scalar_lea.vmem %s6, 132
      %v2028 = vld [vmem:[%s2027] sm:$0xf]
      %2030 = vset.pattern.permute.xlu0 0
      %2031 = vperm.xlu0 %2030, %v2028
      %v2032 = vpop.permute.xlu0 %2031
      %v2034 = vlaneseq
      %v2035 = vshrl.u32 %v2034, 7
      %v2036 = vsub.s32 1, %v2035
      %v2037 = vrot.slane %v2006, %v2036
      %v2038 = vlaneseq
      %v2039 = vshrl.u32 %v2038, 7
      %v2040 = vsub.s32 1, %v2039
      %v2041 = vrot.slane %v2007, %v2040
      %v2042 = vmul.f32 %v2032, %v2037
      %v2043 = vmul.f32 %v2032, %v2041
      %v2044 = vadd.f32 %v2025, %v2042
      %v2045 = vadd.f32 %v2026, %v2043
      %s2046 = scalar_lea.vmem %s6, 136
      %v2047 = vld [vmem:[%s2046] sm:$0xf]
      %2049 = vset.pattern.permute.xlu0 0
      %2050 = vperm.xlu0 %2049, %v2047
      %v2051 = vpop.permute.xlu0 %2050
      %v2053 = vlaneseq
      %v2054 = vshrl.u32 %v2053, 7
      %v2055 = vsub.s32 2, %v2054
      %v2056 = vrot.slane %v2006, %v2055
      %v2057 = vlaneseq
      %v2058 = vshrl.u32 %v2057, 7
      %v2059 = vsub.s32 2, %v2058
      %v2060 = vrot.slane %v2007, %v2059
      %v2061 = vmul.f32 %v2051, %v2056
      %v2062 = vmul.f32 %v2051, %v2060
      %v2063 = vadd.f32 %v2044, %v2061
      %v2064 = vadd.f32 %v2045, %v2062
      %s2065 = scalar_lea.vmem %s6, 140
      %v2066 = vld [vmem:[%s2065] sm:$0xf]
      %2068 = vset.pattern.permute.xlu0 0
      %2069 = vperm.xlu0 %2068, %v2066
      %v2070 = vpop.permute.xlu0 %2069
      %v2072 = vlaneseq
      %v2073 = vshrl.u32 %v2072, 7
      %v2074 = vsub.s32 3, %v2073
      %v2075 = vrot.slane %v2006, %v2074
      %v2076 = vlaneseq
      %v2077 = vshrl.u32 %v2076, 7
      %v2078 = vsub.s32 3, %v2077
      %v2079 = vrot.slane %v2007, %v2078
      %v2080 = vmul.f32 %v2070, %v2075
      %v2081 = vmul.f32 %v2070, %v2079
      %v2082 = vadd.f32 %v2063, %v2080
      %v2083 = vadd.f32 %v2064, %v2081
      %v2084 = vld [vmem:[%s7] sm:$0xf]
      %2086 = vset.pattern.permute.xlu0 0
      %2087 = vperm.xlu0 %2086, %v2084
      %v2088 = vpop.permute.xlu0 %2087
      %v2090 = vadd.f32 %v2082, %v2088
      %v2091 = vadd.f32 %v2083, %v2088
      %v2092 = vmax.f32 %v2090, 0.0
      %v2093 = vmax.f32 %v2091, 0.0
      %v2094 = vsel %vm1289, %v2092, 0.0
      %v2095 = vsel %vm1289, %v2093, 0.0
      %v2096 = vadd.f32 %v2094, %v2095
      %2097 = vadd.xlane.f32.xlu0 %v2096
      %v2098 = vpop.xlane.xlu0 %2097
      %v2099 = vmul.f32 %v2098, %v1295
      %v2100 = vsub.f32 %v2092, %v2099
      %v2101 = vsub.f32 %v2093, %v2099
      %v2102 = vmul.f32 %v2100, %v2100
      %v2103 = vmul.f32 %v2101, %v2101
      %v2104 = vsel %vm1289, %v2102, 0.0
      %v2105 = vsel %vm1289, %v2103, 0.0
      %v2106 = vadd.f32 %v2104, %v2105
      %2107 = vadd.xlane.f32.xlu0 %v2106
      %v2108 = vpop.xlane.xlu0 %2107
      %v2109 = vmul.f32 %v2108, %v1295
      %v2110 = vadd.f32 %v2109, 1e-06
      %v2111 = vrsqrt.pop %v2110
      %v2112 = vmul.f32 %v2100, %v2111
      %v2113 = vmul.f32 %v2101, %v2111
      %v2114 = vld [vmem:[%s8] sm:$0xf]
      %2116 = vset.pattern.permute.xlu0 0
      %2117 = vperm.xlu0 %2116, %v2114
      %v2118 = vpop.permute.xlu0 %2117
      %v2120 = vmul.f32 %v2112, %v2118
      %v2121 = vmul.f32 %v2113, %v2118
      %v2122 = vld [vmem:[%s9] sm:$0xf]
      %2124 = vset.pattern.permute.xlu0 0
      %2125 = vperm.xlu0 %2124, %v2122
      %v2126 = vpop.permute.xlu0 %2125
      %v2128 = vadd.f32 %v2120, %v2126
      %v2129 = vadd.f32 %v2121, %v2126
      %v2132 = vcombine.low %v2128, %v2129
      %v2134 = vadd.f32 %v360, %v2132
      %vm2135 = vcmp.gt.f32.partialorder %v2134, 0.0
      %v2136 = vmul.f32 %v2134, 1.442695
      %v2137 = vpow.pop %v2136
      %v2138 = vsub.f32 %v2137, 1.0
      %v2139 = vsel %vm2135, %v2134, %v2138
      %2140 = vst [vmem:[%s359] sm:$0xff] %v2139
      %p2141 = scmp.lt.s32.totalorder %s21, 1
      %s2142 = scalar_select %p2141, %s21, 1
      %s2143 = smul.addr %s2142, 2
      %s2144 = smul.addr %s2143, 4
      %s2145 = scalar_lea.vmem %s10, %s2144
      // Predicated region
      $region61: #{sym_cnn2d_block_forward.1} parent=59 // pred_check
        %p2146 = pneg %p254
      $region62: #{sym_cnn2d_block_forward.1} parent=59 // pred_check_branch
        %2148 = sbr.rel (%p2146) target = $region64
      $region63: #{sym_cnn2d_block_forward.1} parent=59 // pred_region
        _
      $region64: #{sym_cnn2d_block_forward.1} parent=59 // pred_fallthru
        _
    $region60: #{sym_cnn2d_block_forward.1} parent=5 // pred_fallthru
      _
    %p2149 = scmp.le.s32.totalorder 2, %s16
    // Predicated region
    $region65: #{sym_cnn2d_block_forward.1} parent=5 // pred_check
      %p2150 = pneg %p2149
    $region66: #{sym_cnn2d_block_forward.1} parent=5 // pred_check_branch
      %2152 = sbr.rel (%p2150) target = $region68
    $region67: #{sym_cnn2d_block_forward.1} parent=5 // pred_region
      %s2153 = ssub.s32 %s16, 2
      // Predicated region
      $region69: #{sym_cnn2d_block_forward.1} parent=67 // pred_check
        %p2154 = pneg %p260
      $region70: #{sym_cnn2d_block_forward.1} parent=67 // pred_check_branch
        %2156 = sbr.rel (%p2154) target = $region72
      $region71: #{sym_cnn2d_block_forward.1} parent=67 // pred_region
        %p2157 = scmp.lt.s32.totalorder %s22, 1
        %s2158 = scalar_select %p2157, %s22, 1
        %s2159 = smul.addr %s2158, 2
        %s2160 = smul.addr %s2159, 4
        %s2161 = scalar_lea.vmem %s10, %s2160
      $region72: #{sym_cnn2d_block_forward.1} parent=67 // pred_fallthru
        _
    $region68: #{sym_cnn2d_block_forward.1} parent=5 // pred_fallthru
      _
  $region6: #{sym_cnn2d_block_forward.1} parent=0 // loop_footer
    %s20 = sadd.s32 1, %s16
  $region7: #{sym_cnn2d_block_forward.1} parent=0 // loop_footer_branch
    %15 = sbr.rel target = $region3
  $region8: #{sym_cnn2d_block_forward.1} parent=0 // loop_exit
    _

</llo_original>
